<compile_context>
chip_gen: v7x
topology: tpu7x:2x2x1
jax: 0.10.0
libtpu: 0.0.40
codegen_flags: <defaults>
</compile_context>

<pallas_src>
import jax
import jax.numpy as jnp
from jax.experimental import pallas as pl
from jax.experimental.pallas import tpu as pltpu

LN_EPS = 1e-5


def _erf(z):
    # Abramowitz & Stegun 7.1.26 rational approximation (|err| < 1.5e-7),
    # built only from ops guaranteed to lower in Mosaic (exp, mul/add, select).
    a1, a2, a3, a4, a5 = 0.254829592, -0.284496736, 1.421413741, -1.453152027, 1.061405429
    p = 0.3275911
    sgn = jnp.where(z >= 0.0, 1.0, -1.0)
    az = jnp.abs(z)
    # EUP approx reciprocal instead of a VALU divide (error << test tolerance).
    t = pl.reciprocal(1.0 + p * az, approx=True)
    poly = ((((a5 * t + a4) * t + a3) * t + a2) * t + a1) * t
    return sgn * (1.0 - poly * jnp.exp(-az * az))


def _gelu_exact(v):
    # Matches PyTorch F.gelu default (exact, erf-based).
    return 0.5 * v * (1.0 + _erf(v * 0.7071067811865476))


def adapter_kernel(x_ref, w1a_ref, w1b_ref, b1_ref, wc_ref, bc_ref,
                   w2_ref, b2_ref, o_ref):
    x = x_ref[...]                                   # (B, H, W, C) f32 input
    B, H, W, C = x.shape
    E = w1a_ref.shape[1]
    M = B * H * W

    # ---- LayerNorm statistics (affine + gamma/belta folded into w1a/w1b) ----
    mean = jnp.mean(x, axis=-1, keepdims=True)
    cent = x - mean
    var = jnp.mean(cent * cent, axis=-1, keepdims=True)
    xnorm = cent * jax.lax.rsqrt(var + LN_EPS)

    # ---- project1 (Linear C -> E) with folded LN-affine / residual mix ------
    # bf16 operands feed the MXU, f32 accumulation.
    h1 = (jnp.dot(xnorm.reshape(M, C).astype(jnp.bfloat16), w1a_ref[...],
                  preferred_element_type=jnp.float32)
          + jnp.dot(x.reshape(M, C).astype(jnp.bfloat16), w1b_ref[...],
                    preferred_element_type=jnp.float32)
          + b1_ref[0])
    t = h1.reshape(B, H, W, E)                       # identity2 (channel-last)

    # ---- single folded depthwise 3x3 conv == (conv1 + conv2 + conv3) / 3 ----
    # W-dim shifts (sublane axis): XLU roll + one boundary select each.
    trows = h1.reshape(B * H, W, E)
    col = jax.lax.broadcasted_iota(jnp.int32, (B * H, W, E), 1)
    sx_p1 = jnp.where(col < W - 1, pltpu.roll(trows, W - 1, axis=1), 0.0)  # t[.., x+1, :]
    sx_m1 = jnp.where(col > 0, pltpu.roll(trows, 1, axis=1), 0.0)          # t[.., x-1, :]
    shifted_x = (sx_m1.reshape(B, H, W, E), t, sx_p1.reshape(B, H, W, E))

    # H-dim shifts: zero-pad one row top/bottom on the (cheap) leading H axis.
    zrow = jnp.zeros((B, 1, W, E), jnp.float32)
    padded = [jnp.concatenate([zrow, s, zrow], axis=1) for s in shifted_x]

    w9 = wc_ref[...]                                 # (9, E) folded taps, read once
    acc = t + bc_ref[0]                              # identity2 + folded conv bias
    for ky in range(3):
        for kx in range(3):
            acc = acc + padded[kx][:, ky:ky + H] * w9[ky * 3 + kx]

    # ---- GELU (exact erf form, matching F.gelu default) ----
    g = _gelu_exact(acc)
    # TODO(synk): nn.Dropout(p=0.1) is identity here (eval-mode forward).

    # ---- project2 (Linear E -> C), residual with the original input ----
    y = jnp.dot(g.reshape(M, E).astype(jnp.bfloat16), w2_ref[...],
                preferred_element_type=jnp.float32) + b2_ref[0]
    o_ref[...] = x + y.reshape(B, H, W, C)


def adapter_forward(x, p):
    B, H, W, C = x.shape
    E = p["w1"].shape[1]

    # ---- free wrapper-side algebraic folding ----
    ln_w, ln_b = p["ln_w"][0], p["ln_b"][0]
    gamma, belta = p["gamma"][0], p["belta"][0]
    w1a = ((ln_w * gamma)[:, None] * p["w1"]).astype(jnp.bfloat16)     # (C, E)
    w1b = (belta[:, None] * p["w1"]).astype(jnp.bfloat16)              # (C, E)
    b1f = p["b1"] + (ln_b * gamma)[None, :] @ p["w1"]                  # (1, E) f32
    wc_sum = jnp.sum(p["wc"], axis=0) / 3.0                            # (9, E)
    bc_sum = jnp.sum(p["bc"], axis=0, keepdims=True) / 3.0             # (1, E)
    w2b = p["w2"].astype(jnp.bfloat16)                                 # (E, C)

    def rep(shape):
        nd = len(shape)
        return pl.BlockSpec(shape, lambda b, _nd=nd: (0,) * _nd)

    return pl.pallas_call(
        adapter_kernel,
        out_shape=jax.ShapeDtypeStruct((B, H, W, C), jnp.float32),
        grid=(1,),                                   # whole batch in one step
        in_specs=[
            pl.BlockSpec((B, H, W, C), lambda b: (b, 0, 0, 0)),  # x
            rep((C, E)), rep((C, E)), rep((1, E)),   # folded project1 Wa/Wb/b
            rep((9, E)), rep((1, E)),                # folded conv taps / bias
            rep((E, C)), rep((1, C)),                # project2 W / b
        ],
        out_specs=pl.BlockSpec((B, H, W, C), lambda b: (b, 0, 0, 0)),
        compiler_params=pltpu.CompilerParams(
            dimension_semantics=("parallel",),
            vmem_limit_bytes=32 * 1024 * 1024),
    )(x, w1a, w1b, b1f, wc_sum, bc_sum, w2b, p["b2"])


def adapter_reference(x, p):
    """Pure-JAX reference (same math as the PyTorch module, f32, unfolded)."""
    B, H, W, C = x.shape
    mean = x.mean(-1, keepdims=True)
    var = ((x - mean) ** 2).mean(-1, keepdims=True)
    xn = (x - mean) / jnp.sqrt(var + LN_EPS) * p["ln_w"][0] + p["ln_b"][0]
    xm = xn * p["gamma"][0] + x * p["belta"][0]
    h1 = jnp.einsum("bhwc,ce->bhwe", xm, p["w1"]) + p["b1"][0]
    tp = jnp.pad(h1, ((0, 0), (1, 1), (1, 1), (0, 0)))
    conv_sum = jnp.zeros_like(h1)
    for k in range(3):
        acc = jnp.zeros_like(h1) + p["bc"][k]
        for dy in range(3):
            for dx in range(3):
                acc = acc + tp[:, dy:dy + H, dx:dx + W, :] * p["wc"][k, dy * 3 + dx]
        conv_sum = conv_sum + acc
    t = conv_sum / 3.0 + h1
    g = 0.5 * t * (1.0 + jax.scipy.special.erf(t / jnp.sqrt(2.0)))
    y = jnp.einsum("bhwe,ec->bhwc", g, p["w2"]) + p["b2"][0]
    return x + y


def make_params(key, in_dim, embed):
    ks = jax.random.split(key, 6)
    return {
        # LayerNorm (PyTorch default init: weight=1, bias=0)
        "ln_w": jnp.ones((1, in_dim), jnp.float32),
        "ln_b": jnp.zeros((1, in_dim), jnp.float32),
        # learnable residual-mix params
        "gamma": jnp.full((1, in_dim), 1e-6, jnp.float32),
        "belta": jnp.ones((1, in_dim), jnp.float32),
        # project1: Linear(in_dim -> embed), stored as (in_dim, embed) for x @ W
        "w1": 0.1 * jax.random.normal(ks[0], (in_dim, embed), jnp.float32),
        "b1": 0.1 * jax.random.normal(ks[1], (1, embed), jnp.float32),
        # conv1/2/3: depthwise 3x3, torch weight (E,1,3,3) -> taps laid out (3, 9, E)
        "wc": 0.1 * jax.random.normal(ks[2], (3, 9, embed), jnp.float32),
        "bc": 0.1 * jax.random.normal(ks[3], (3, embed), jnp.float32),
        # project2: Linear(embed -> in_dim)
        "w2": 0.1 * jax.random.normal(ks[4], (embed, in_dim), jnp.float32),
        "b2": 0.1 * jax.random.normal(ks[5], (1, in_dim), jnp.float32),
    }


if __name__ == "__main__":
    B, H, W = 2, 16, 16
    IN_DIM, EMBED = 32, 64

    key = jax.random.PRNGKey(0)
    kp, kx = jax.random.split(key)
    params = make_params(kp, IN_DIM, EMBED)
    x = jax.random.normal(kx, (B, H, W, IN_DIM), jnp.float32)

    out = adapter_forward(x, params)
    out = jax.block_until_ready(out)

    ref = jax.block_until_ready(adapter_reference(x, params))
    assert out.shape == (B, H, W, IN_DIM)
    assert bool(jnp.allclose(out, ref, atol=2e-2, rtol=2e-2)), "kernel/reference mismatch"

    print("KERNEL_OK")
</pallas_src>

<mosaic_0001>
module attributes {stable_mosaic.version = 11 : i64} {
  func.func @adapter_kernel(%arg0: i32, %arg1: memref<2x16x16x32xf32, #tpu.memory_space<vmem>>, %arg2: memref<32x64xbf16, #tpu.memory_space<vmem>>, %arg3: memref<32x64xbf16, #tpu.memory_space<vmem>>, %arg4: memref<1x64xf32, #tpu.memory_space<vmem>>, %arg5: memref<9x64xf32, #tpu.memory_space<vmem>>, %arg6: memref<1x64xf32, #tpu.memory_space<vmem>>, %arg7: memref<64x32xbf16, #tpu.memory_space<vmem>>, %arg8: memref<1x32xf32, #tpu.memory_space<vmem>>, %arg9: memref<2x16x16x32xf32, #tpu.memory_space<vmem>>) attributes {dimension_semantics = [#tpu.dimension_semantics<parallel>], iteration_bounds = array<i64: 1>, scalar_prefetch = 0 : i64, scratch_operands = 0 : i64, tpu.core_type = #tpu.core_type<tc>, window_params = [{transform_indices = @transform_0, window_bounds = array<i64: 2, 16, 16, 32>}, {pipeline_mode = #tpu.pipeline_mode<synchronous>, transform_indices = @transform_1, window_bounds = array<i64: 32, 64>}, {pipeline_mode = #tpu.pipeline_mode<synchronous>, transform_indices = @transform_2, window_bounds = array<i64: 32, 64>}, {pipeline_mode = #tpu.pipeline_mode<synchronous>, transform_indices = @transform_3, window_bounds = array<i64: 1, 64>}, {pipeline_mode = #tpu.pipeline_mode<synchronous>, transform_indices = @transform_4, window_bounds = array<i64: 9, 64>}, {pipeline_mode = #tpu.pipeline_mode<synchronous>, transform_indices = @transform_5, window_bounds = array<i64: 1, 64>}, {pipeline_mode = #tpu.pipeline_mode<synchronous>, transform_indices = @transform_6, window_bounds = array<i64: 64, 32>}, {pipeline_mode = #tpu.pipeline_mode<synchronous>, transform_indices = @transform_7, window_bounds = array<i64: 1, 32>}, {transform_indices = @transform_8, window_bounds = array<i64: 2, 16, 16, 32>}]} {
    %c0 = arith.constant 0 : index
    %c0_0 = arith.constant 0 : index
    %c0_1 = arith.constant 0 : index
    %c0_2 = arith.constant 0 : index
    %0 = vector.load %arg1[%c0, %c0_0, %c0_1, %c0_2] : memref<2x16x16x32xf32, #tpu.memory_space<vmem>>, vector<2x16x16x32xf32>
    %cst = arith.constant dense<0.000000e+00> : vector<2x16x16xf32>
    %1 = vector.multi_reduction <add>, %0, %cst [3] : vector<2x16x16x32xf32> to vector<2x16x16xf32>
    %2 = vector.shape_cast %1 : vector<2x16x16xf32> to vector<2x16x16x1xf32>
    %cst_3 = arith.constant 3.200000e+01 : f32
    %3 = vector.broadcast %cst_3 : f32 to vector<2x16x16x1xf32>
    %4 = arith.divf %2, %3 : vector<2x16x16x1xf32>
    %5 = vector.broadcast %4 : vector<2x16x16x1xf32> to vector<2x16x16x32xf32>
    %6 = arith.subf %0, %5 : vector<2x16x16x32xf32>
    %7 = arith.mulf %6, %6 : vector<2x16x16x32xf32>
    %cst_4 = arith.constant dense<0.000000e+00> : vector<2x16x16xf32>
    %8 = vector.multi_reduction <add>, %7, %cst_4 [3] : vector<2x16x16x32xf32> to vector<2x16x16xf32>
    %9 = vector.shape_cast %8 : vector<2x16x16xf32> to vector<2x16x16x1xf32>
    %cst_5 = arith.constant 3.200000e+01 : f32
    %10 = vector.broadcast %cst_5 : f32 to vector<2x16x16x1xf32>
    %11 = arith.divf %9, %10 : vector<2x16x16x1xf32>
    %cst_6 = arith.constant 9.99999974E-6 : f32
    %12 = vector.broadcast %cst_6 : f32 to vector<2x16x16x1xf32>
    %13 = arith.addf %11, %12 : vector<2x16x16x1xf32>
    %14 = math.rsqrt %13 : vector<2x16x16x1xf32>
    %15 = vector.broadcast %14 : vector<2x16x16x1xf32> to vector<2x16x16x32xf32>
    %16 = arith.mulf %6, %15 : vector<2x16x16x32xf32>
    %17 = vector.shape_cast %16 : vector<2x16x16x32xf32> to vector<512x32xf32>
    %18 = arith.truncf %17 : vector<512x32xf32> to vector<512x32xbf16>
    %c0_7 = arith.constant 0 : index
    %c0_8 = arith.constant 0 : index
    %19 = vector.load %arg2[%c0_7, %c0_8] : memref<32x64xbf16, #tpu.memory_space<vmem>>, vector<32x64xbf16>
    %cst_9 = arith.constant dense<0.000000e+00> : vector<512x64xf32>
    %20 = tpu.matmul %18, %19, %cst_9 {dimension_numbers = #tpu.dot_dimension_numbers<[1], [0], [0], [1], [0, 0, 1, 1], [], []>} : vector<512x32xbf16>, vector<32x64xbf16>, vector<512x64xf32> -> vector<512x64xf32>
    %21 = vector.shape_cast %0 : vector<2x16x16x32xf32> to vector<512x32xf32>
    %22 = arith.truncf %21 : vector<512x32xf32> to vector<512x32xbf16>
    %c0_10 = arith.constant 0 : index
    %c0_11 = arith.constant 0 : index
    %23 = vector.load %arg3[%c0_10, %c0_11] : memref<32x64xbf16, #tpu.memory_space<vmem>>, vector<32x64xbf16>
    %cst_12 = arith.constant dense<0.000000e+00> : vector<512x64xf32>
    %24 = tpu.matmul %22, %23, %cst_12 {dimension_numbers = #tpu.dot_dimension_numbers<[1], [0], [0], [1], [0, 0, 1, 1], [], []>} : vector<512x32xbf16>, vector<32x64xbf16>, vector<512x64xf32> -> vector<512x64xf32>
    %25 = arith.addf %20, %24 : vector<512x64xf32>
    %c0_13 = arith.constant 0 : index
    %c0_14 = arith.constant 0 : index
    %26 = vector.load %arg4[%c0_13, %c0_14] : memref<1x64xf32, #tpu.memory_space<vmem>>, vector<1x64xf32>
    %27 = vector.shape_cast %26 : vector<1x64xf32> to vector<64xf32>
    %28 = vector.shape_cast %27 : vector<64xf32> to vector<1x64xf32>
    %29 = vector.broadcast %28 : vector<1x64xf32> to vector<512x64xf32>
    %30 = arith.addf %25, %29 : vector<512x64xf32>
    %31 = vector.shape_cast %30 : vector<512x64xf32> to vector<2x16x16x64xf32>
    %32 = vector.shape_cast %30 : vector<512x64xf32> to vector<32x16x64xf32>
    %33 = tpu.iota {dimensions = array<i32: 1>} : vector<32x16x64xi32>
    %c15_i32 = arith.constant 15 : i32
    %34 = vector.broadcast %c15_i32 : i32 to vector<32x16x64xi32>
    %35 = arith.cmpi slt, %33, %34 : vector<32x16x64xi32>
    %c15_i32_15 = arith.constant 15 : i32
    %36 = tpu.dynamic_rotate %32 by %c15_i32_15 dim 1 : vector<32x16x64xf32>, i32 -> vector<32x16x64xf32>
    %cst_16 = arith.constant 0.000000e+00 : f32
    %37 = vector.broadcast %cst_16 : f32 to vector<32x16x64xf32>
    %38 = arith.select %35, %36, %37 : vector<32x16x64xi1>, vector<32x16x64xf32>
    %c0_i32 = arith.constant 0 : i32
    %39 = vector.broadcast %c0_i32 : i32 to vector<32x16x64xi32>
    %40 = arith.cmpi sgt, %33, %39 : vector<32x16x64xi32>
    %c1_i32 = arith.constant 1 : i32
    %41 = tpu.dynamic_rotate %32 by %c1_i32 dim 1 : vector<32x16x64xf32>, i32 -> vector<32x16x64xf32>
    %cst_17 = arith.constant 0.000000e+00 : f32
    %42 = vector.broadcast %cst_17 : f32 to vector<32x16x64xf32>
    %43 = arith.select %40, %41, %42 : vector<32x16x64xi1>, vector<32x16x64xf32>
    %44 = vector.shape_cast %43 : vector<32x16x64xf32> to vector<2x16x16x64xf32>
    %45 = vector.shape_cast %38 : vector<32x16x64xf32> to vector<2x16x16x64xf32>
    %cst_18 = arith.constant 0.000000e+00 : f32
    %46 = vector.broadcast %cst_18 : f32 to vector<2x1x16x64xf32>
    %47 = tpu.concatenate %46, %44, %46 in 1 : vector<2x1x16x64xf32>, vector<2x16x16x64xf32>, vector<2x1x16x64xf32> -> vector<2x18x16x64xf32>
    %48 = tpu.concatenate %46, %31, %46 in 1 : vector<2x1x16x64xf32>, vector<2x16x16x64xf32>, vector<2x1x16x64xf32> -> vector<2x18x16x64xf32>
    %49 = tpu.concatenate %46, %45, %46 in 1 : vector<2x1x16x64xf32>, vector<2x16x16x64xf32>, vector<2x1x16x64xf32> -> vector<2x18x16x64xf32>
    %c0_19 = arith.constant 0 : index
    %c0_20 = arith.constant 0 : index
    %50 = vector.load %arg5[%c0_19, %c0_20] : memref<9x64xf32, #tpu.memory_space<vmem>>, vector<9x64xf32>
    %c0_21 = arith.constant 0 : index
    %c0_22 = arith.constant 0 : index
    %51 = vector.load %arg6[%c0_21, %c0_22] : memref<1x64xf32, #tpu.memory_space<vmem>>, vector<1x64xf32>
    %52 = vector.shape_cast %51 : vector<1x64xf32> to vector<64xf32>
    %53 = vector.shape_cast %52 : vector<64xf32> to vector<1x1x1x64xf32>
    %54 = vector.broadcast %53 : vector<1x1x1x64xf32> to vector<2x16x16x64xf32>
    %55 = arith.addf %31, %54 : vector<2x16x16x64xf32>
    %56 = vector.extract_strided_slice %47 {offsets = [0, 0, 0, 0], sizes = [2, 16, 16, 64], strides = [1, 1, 1, 1]} : vector<2x18x16x64xf32> to vector<2x16x16x64xf32>
    %57 = vector.extract_strided_slice %50 {offsets = [0, 0], sizes = [1, 64], strides = [1, 1]} : vector<9x64xf32> to vector<1x64xf32>
    %58 = vector.shape_cast %57 : vector<1x64xf32> to vector<64xf32>
    %59 = vector.shape_cast %58 : vector<64xf32> to vector<1x1x1x64xf32>
    %60 = vector.broadcast %59 : vector<1x1x1x64xf32> to vector<2x16x16x64xf32>
    %61 = arith.mulf %56, %60 : vector<2x16x16x64xf32>
    %62 = arith.addf %55, %61 : vector<2x16x16x64xf32>
    %63 = vector.extract_strided_slice %48 {offsets = [0, 0, 0, 0], sizes = [2, 16, 16, 64], strides = [1, 1, 1, 1]} : vector<2x18x16x64xf32> to vector<2x16x16x64xf32>
    %64 = vector.extract_strided_slice %50 {offsets = [1, 0], sizes = [1, 64], strides = [1, 1]} : vector<9x64xf32> to vector<1x64xf32>
    %65 = vector.shape_cast %64 : vector<1x64xf32> to vector<64xf32>
    %66 = vector.shape_cast %65 : vector<64xf32> to vector<1x1x1x64xf32>
    %67 = vector.broadcast %66 : vector<1x1x1x64xf32> to vector<2x16x16x64xf32>
    %68 = arith.mulf %63, %67 : vector<2x16x16x64xf32>
    %69 = arith.addf %62, %68 : vector<2x16x16x64xf32>
    %70 = vector.extract_strided_slice %49 {offsets = [0, 0, 0, 0], sizes = [2, 16, 16, 64], strides = [1, 1, 1, 1]} : vector<2x18x16x64xf32> to vector<2x16x16x64xf32>
    %71 = vector.extract_strided_slice %50 {offsets = [2, 0], sizes = [1, 64], strides = [1, 1]} : vector<9x64xf32> to vector<1x64xf32>
    %72 = vector.shape_cast %71 : vector<1x64xf32> to vector<64xf32>
    %73 = vector.shape_cast %72 : vector<64xf32> to vector<1x1x1x64xf32>
    %74 = vector.broadcast %73 : vector<1x1x1x64xf32> to vector<2x16x16x64xf32>
    %75 = arith.mulf %70, %74 : vector<2x16x16x64xf32>
    %76 = arith.addf %69, %75 : vector<2x16x16x64xf32>
    %77 = vector.extract_strided_slice %47 {offsets = [0, 1, 0, 0], sizes = [2, 16, 16, 64], strides = [1, 1, 1, 1]} : vector<2x18x16x64xf32> to vector<2x16x16x64xf32>
    %78 = vector.extract_strided_slice %50 {offsets = [3, 0], sizes = [1, 64], strides = [1, 1]} : vector<9x64xf32> to vector<1x64xf32>
    %79 = vector.shape_cast %78 : vector<1x64xf32> to vector<64xf32>
    %80 = vector.shape_cast %79 : vector<64xf32> to vector<1x1x1x64xf32>
    %81 = vector.broadcast %80 : vector<1x1x1x64xf32> to vector<2x16x16x64xf32>
    %82 = arith.mulf %77, %81 : vector<2x16x16x64xf32>
    %83 = arith.addf %76, %82 : vector<2x16x16x64xf32>
    %84 = vector.extract_strided_slice %48 {offsets = [0, 1, 0, 0], sizes = [2, 16, 16, 64], strides = [1, 1, 1, 1]} : vector<2x18x16x64xf32> to vector<2x16x16x64xf32>
    %85 = vector.extract_strided_slice %50 {offsets = [4, 0], sizes = [1, 64], strides = [1, 1]} : vector<9x64xf32> to vector<1x64xf32>
    %86 = vector.shape_cast %85 : vector<1x64xf32> to vector<64xf32>
    %87 = vector.shape_cast %86 : vector<64xf32> to vector<1x1x1x64xf32>
    %88 = vector.broadcast %87 : vector<1x1x1x64xf32> to vector<2x16x16x64xf32>
    %89 = arith.mulf %84, %88 : vector<2x16x16x64xf32>
    %90 = arith.addf %83, %89 : vector<2x16x16x64xf32>
    %91 = vector.extract_strided_slice %49 {offsets = [0, 1, 0, 0], sizes = [2, 16, 16, 64], strides = [1, 1, 1, 1]} : vector<2x18x16x64xf32> to vector<2x16x16x64xf32>
    %92 = vector.extract_strided_slice %50 {offsets = [5, 0], sizes = [1, 64], strides = [1, 1]} : vector<9x64xf32> to vector<1x64xf32>
    %93 = vector.shape_cast %92 : vector<1x64xf32> to vector<64xf32>
    %94 = vector.shape_cast %93 : vector<64xf32> to vector<1x1x1x64xf32>
    %95 = vector.broadcast %94 : vector<1x1x1x64xf32> to vector<2x16x16x64xf32>
    %96 = arith.mulf %91, %95 : vector<2x16x16x64xf32>
    %97 = arith.addf %90, %96 : vector<2x16x16x64xf32>
    %98 = vector.extract_strided_slice %47 {offsets = [0, 2, 0, 0], sizes = [2, 16, 16, 64], strides = [1, 1, 1, 1]} : vector<2x18x16x64xf32> to vector<2x16x16x64xf32>
    %99 = vector.extract_strided_slice %50 {offsets = [6, 0], sizes = [1, 64], strides = [1, 1]} : vector<9x64xf32> to vector<1x64xf32>
    %100 = vector.shape_cast %99 : vector<1x64xf32> to vector<64xf32>
    %101 = vector.shape_cast %100 : vector<64xf32> to vector<1x1x1x64xf32>
    %102 = vector.broadcast %101 : vector<1x1x1x64xf32> to vector<2x16x16x64xf32>
    %103 = arith.mulf %98, %102 : vector<2x16x16x64xf32>
    %104 = arith.addf %97, %103 : vector<2x16x16x64xf32>
    %105 = vector.extract_strided_slice %48 {offsets = [0, 2, 0, 0], sizes = [2, 16, 16, 64], strides = [1, 1, 1, 1]} : vector<2x18x16x64xf32> to vector<2x16x16x64xf32>
    %106 = vector.extract_strided_slice %50 {offsets = [7, 0], sizes = [1, 64], strides = [1, 1]} : vector<9x64xf32> to vector<1x64xf32>
    %107 = vector.shape_cast %106 : vector<1x64xf32> to vector<64xf32>
    %108 = vector.shape_cast %107 : vector<64xf32> to vector<1x1x1x64xf32>
    %109 = vector.broadcast %108 : vector<1x1x1x64xf32> to vector<2x16x16x64xf32>
    %110 = arith.mulf %105, %109 : vector<2x16x16x64xf32>
    %111 = arith.addf %104, %110 : vector<2x16x16x64xf32>
    %112 = vector.extract_strided_slice %49 {offsets = [0, 2, 0, 0], sizes = [2, 16, 16, 64], strides = [1, 1, 1, 1]} : vector<2x18x16x64xf32> to vector<2x16x16x64xf32>
    %113 = vector.extract_strided_slice %50 {offsets = [8, 0], sizes = [1, 64], strides = [1, 1]} : vector<9x64xf32> to vector<1x64xf32>
    %114 = vector.shape_cast %113 : vector<1x64xf32> to vector<64xf32>
    %115 = vector.shape_cast %114 : vector<64xf32> to vector<1x1x1x64xf32>
    %116 = vector.broadcast %115 : vector<1x1x1x64xf32> to vector<2x16x16x64xf32>
    %117 = arith.mulf %112, %116 : vector<2x16x16x64xf32>
    %118 = arith.addf %111, %117 : vector<2x16x16x64xf32>
    %cst_23 = arith.constant 5.000000e-01 : f32
    %119 = vector.broadcast %cst_23 : f32 to vector<2x16x16x64xf32>
    %120 = arith.mulf %119, %118 : vector<2x16x16x64xf32>
    %cst_24 = arith.constant 0.707106769 : f32
    %121 = vector.broadcast %cst_24 : f32 to vector<2x16x16x64xf32>
    %122 = arith.mulf %118, %121 : vector<2x16x16x64xf32>
    %cst_25 = arith.constant 0.000000e+00 : f32
    %123 = vector.broadcast %cst_25 : f32 to vector<2x16x16x64xf32>
    %124 = arith.cmpf oge, %122, %123 : vector<2x16x16x64xf32>
    %cst_26 = arith.constant 1.000000e+00 : f32
    %cst_27 = arith.constant -1.000000e+00 : f32
    %125 = vector.broadcast %cst_26 : f32 to vector<2x16x16x64xf32>
    %126 = vector.broadcast %cst_27 : f32 to vector<2x16x16x64xf32>
    %127 = arith.select %124, %125, %126 : vector<2x16x16x64xi1>, vector<2x16x16x64xf32>
    %128 = math.absf %122 : vector<2x16x16x64xf32>
    %cst_28 = arith.constant 0.327591091 : f32
    %129 = vector.broadcast %cst_28 : f32 to vector<2x16x16x64xf32>
    %130 = arith.mulf %129, %128 : vector<2x16x16x64xf32>
    %cst_29 = arith.constant 1.000000e+00 : f32
    %131 = vector.broadcast %cst_29 : f32 to vector<2x16x16x64xf32>
    %132 = arith.addf %131, %130 : vector<2x16x16x64xf32>
    %133 = tpu.reciprocal %132 {approx = true} : vector<2x16x16x64xf32> -> vector<2x16x16x64xf32>
    %cst_30 = arith.constant 1.06140542 : f32
    %134 = vector.broadcast %cst_30 : f32 to vector<2x16x16x64xf32>
    %135 = arith.mulf %134, %133 : vector<2x16x16x64xf32>
    %cst_31 = arith.constant -1.45315206 : f32
    %136 = vector.broadcast %cst_31 : f32 to vector<2x16x16x64xf32>
    %137 = arith.addf %135, %136 : vector<2x16x16x64xf32>
    %138 = arith.mulf %137, %133 : vector<2x16x16x64xf32>
    %cst_32 = arith.constant 1.42141378 : f32
    %139 = vector.broadcast %cst_32 : f32 to vector<2x16x16x64xf32>
    %140 = arith.addf %138, %139 : vector<2x16x16x64xf32>
    %141 = arith.mulf %140, %133 : vector<2x16x16x64xf32>
    %cst_33 = arith.constant -0.284496725 : f32
    %142 = vector.broadcast %cst_33 : f32 to vector<2x16x16x64xf32>
    %143 = arith.addf %141, %142 : vector<2x16x16x64xf32>
    %144 = arith.mulf %143, %133 : vector<2x16x16x64xf32>
    %cst_34 = arith.constant 0.254829586 : f32
    %145 = vector.broadcast %cst_34 : f32 to vector<2x16x16x64xf32>
    %146 = arith.addf %144, %145 : vector<2x16x16x64xf32>
    %147 = arith.mulf %146, %133 : vector<2x16x16x64xf32>
    %cst_35 = arith.constant 0.000000e+00 : f32
    %148 = vector.broadcast %cst_35 : f32 to vector<2x16x16x64xf32>
    %149 = arith.subf %148, %128 : vector<2x16x16x64xf32>
    %150 = arith.mulf %149, %128 : vector<2x16x16x64xf32>
    %151 = math.exp %150 : vector<2x16x16x64xf32>
    %152 = arith.mulf %147, %151 : vector<2x16x16x64xf32>
    %cst_36 = arith.constant 1.000000e+00 : f32
    %153 = vector.broadcast %cst_36 : f32 to vector<2x16x16x64xf32>
    %154 = arith.subf %153, %152 : vector<2x16x16x64xf32>
    %155 = arith.mulf %127, %154 : vector<2x16x16x64xf32>
    %cst_37 = arith.constant 1.000000e+00 : f32
    %156 = vector.broadcast %cst_37 : f32 to vector<2x16x16x64xf32>
    %157 = arith.addf %156, %155 : vector<2x16x16x64xf32>
    %158 = arith.mulf %120, %157 : vector<2x16x16x64xf32>
    %159 = vector.shape_cast %158 : vector<2x16x16x64xf32> to vector<512x64xf32>
    %160 = arith.truncf %159 : vector<512x64xf32> to vector<512x64xbf16>
    %c0_38 = arith.constant 0 : index
    %c0_39 = arith.constant 0 : index
    %161 = vector.load %arg7[%c0_38, %c0_39] : memref<64x32xbf16, #tpu.memory_space<vmem>>, vector<64x32xbf16>
    %cst_40 = arith.constant dense<0.000000e+00> : vector<512x32xf32>
    %162 = tpu.matmul %160, %161, %cst_40 {dimension_numbers = #tpu.dot_dimension_numbers<[1], [0], [0], [1], [0, 0, 1, 1], [], []>} : vector<512x64xbf16>, vector<64x32xbf16>, vector<512x32xf32> -> vector<512x32xf32>
    %c0_41 = arith.constant 0 : index
    %c0_42 = arith.constant 0 : index
    %163 = vector.load %arg8[%c0_41, %c0_42] : memref<1x32xf32, #tpu.memory_space<vmem>>, vector<1x32xf32>
    %164 = vector.shape_cast %163 : vector<1x32xf32> to vector<32xf32>
    %165 = vector.shape_cast %164 : vector<32xf32> to vector<1x32xf32>
    %166 = vector.broadcast %165 : vector<1x32xf32> to vector<512x32xf32>
    %167 = arith.addf %162, %166 : vector<512x32xf32>
    %168 = vector.shape_cast %167 : vector<512x32xf32> to vector<2x16x16x32xf32>
    %169 = arith.addf %0, %168 : vector<2x16x16x32xf32>
    %c0_43 = arith.constant 0 : index
    %c0_44 = arith.constant 0 : index
    %c0_45 = arith.constant 0 : index
    %c0_46 = arith.constant 0 : index
    %170 = vector.load %arg9[%c0_43, %c0_44, %c0_45, %c0_46] : memref<2x16x16x32xf32, #tpu.memory_space<vmem>>, vector<2x16x16x32xf32>
    tpu.vector_store %arg9[%c0_43, %c0_44, %c0_45, %c0_46], %169 {strides = array<i32>} : memref<2x16x16x32xf32, #tpu.memory_space<vmem>>, vector<2x16x16x32xf32>,
    return
  }
  func.func @transform_0(%arg0: i32) -> (i32, i32, i32, i32) {
    %c0_i32 = arith.constant 0 : i32
    %c0_i32_0 = arith.constant 0 : i32
    %c0_i32_1 = arith.constant 0 : i32
    %c0_i32_2 = arith.constant 0 : i32
    return %arg0, %c0_i32, %c0_i32_0, %c0_i32_1 : i32, i32, i32, i32
  }
  func.func @transform_1(%arg0: i32) -> (i32, i32) {
    %c0_i32 = arith.constant 0 : i32
    %c0_i32_0 = arith.constant 0 : i32
    %c0_i32_1 = arith.constant 0 : i32
    return %c0_i32, %c0_i32_0 : i32, i32
  }
  func.func @transform_2(%arg0: i32) -> (i32, i32) {
    %c0_i32 = arith.constant 0 : i32
    %c0_i32_0 = arith.constant 0 : i32
    %c0_i32_1 = arith.constant 0 : i32
    return %c0_i32, %c0_i32_0 : i32, i32
  }
  func.func @transform_3(%arg0: i32) -> (i32, i32) {
    %c0_i32 = arith.constant 0 : i32
    %c0_i32_0 = arith.constant 0 : i32
    %c0_i32_1 = arith.constant 0 : i32
    return %c0_i32, %c0_i32_0 : i32, i32
  }
  func.func @transform_4(%arg0: i32) -> (i32, i32) {
    %c0_i32 = arith.constant 0 : i32
    %c0_i32_0 = arith.constant 0 : i32
    %c0_i32_1 = arith.constant 0 : i32
    return %c0_i32, %c0_i32_0 : i32, i32
  }
  func.func @transform_5(%arg0: i32) -> (i32, i32) {
    %c0_i32 = arith.constant 0 : i32
    %c0_i32_0 = arith.constant 0 : i32
    %c0_i32_1 = arith.constant 0 : i32
    return %c0_i32, %c0_i32_0 : i32, i32
  }
  func.func @transform_6(%arg0: i32) -> (i32, i32) {
    %c0_i32 = arith.constant 0 : i32
    %c0_i32_0 = arith.constant 0 : i32
    %c0_i32_1 = arith.constant 0 : i32
    return %c0_i32, %c0_i32_0 : i32, i32
  }
  func.func @transform_7(%arg0: i32) -> (i32, i32) {
    %c0_i32 = arith.constant 0 : i32
    %c0_i32_0 = arith.constant 0 : i32
    %c0_i32_1 = arith.constant 0 : i32
    return %c0_i32, %c0_i32_0 : i32, i32
  }
  func.func @transform_8(%arg0: i32) -> (i32, i32, i32, i32) {
    %c0_i32 = arith.constant 0 : i32
    %c0_i32_0 = arith.constant 0 : i32
    %c0_i32_1 = arith.constant 0 : i32
    %c0_i32_2 = arith.constant 0 : i32
    return %arg0, %c0_i32, %c0_i32_0, %c0_i32_1 : i32, i32, i32, i32
  }
}

</mosaic_0001>

<llo_original>
// kernel: tpu_custom_call.1
$region0: #{tpu_custom_call.1}
  #allocation0 [shape = 'u32[]', space=smem, size = 0x4, offset = 0x4, fixed_abs, tag = 'smem constant byte address 0x4 - core index']
  #allocation1 [shape = 'u32[144,128]{1,0:T(1,128)}', space=vmem, size = 0x12000, scoped, tag = 'internal scratch']
  %s0 = inlined_call_operand.hbm [shape: f32[2,16,16,32], index: 0, kind: input, shape index: {}]
  %s1 = inlined_call_operand.vmem [shape: bf16[32,64], index: 1, kind: input, shape index: {}]
  %s2 = inlined_call_operand.vmem [shape: bf16[32,64], index: 2, kind: input, shape index: {}]
  %s3 = inlined_call_operand.vmem [shape: f32[1,64], index: 3, kind: input, shape index: {}]
  %s4 = inlined_call_operand.vmem [shape: f32[9,64], index: 4, kind: input, shape index: {}]
  %s5 = inlined_call_operand.vmem [shape: f32[1,64], index: 5, kind: input, shape index: {}]
  %s6 = inlined_call_operand.vmem [shape: bf16[64,32], index: 6, kind: input, shape index: {}]
  %s7 = inlined_call_operand.vmem [shape: f32[1,32], index: 7, kind: input, shape index: {}]
  %s8 = inlined_call_operand.hbm [shape: f32[2,16,16,32], index: 8, kind: output, shape index: {}]
  %s9 = sld [smem:[#allocation0]]
  $region46: #{tpu_custom_call.1} parent=0
    _
  %s11 = ssub.s32 1, %s9
  %s12 = scalar_select 0, %s11, %s9
  $region1: #{tpu_custom_call.1} parent=0
    #allocation2 [shape = 'u8[262144]{0}', space=vmem, size = 0x40000, scoped, tag = 'input window, operand 0, single buffered']
    #allocation3 [shape = 's32[1]{0}', space=sflag, size = 0x4, scoped, tag = 'scoped memory for tpu_custom_call.1']
    #allocation4 [shape = 's32[1]{0}', space=sflag, size = 0x4, scoped, tag = 'scoped memory for tpu_custom_call.1']
    #allocation5 [shape = 'u8[262144]{0}', space=vmem, size = 0x40000, scoped, tag = 'output window, operand 0, single buffered']
    %13 = vsyncpa [#allocation3], 0
    %14 = vsyncpa [#allocation4], 0
    // Predicated region
    $region2: #{tpu_custom_call.1} parent=1 // pred_check
      _
    $region3: #{tpu_custom_call.1} parent=1 // pred_check_branch
      %16 = sbr.rel (0) target = $region5
    $region4: #{tpu_custom_call.1} parent=1 // pred_region
      %s18 = ssub.s32 8192, 8192
      %19 = vsyncadd [#allocation3], %s18
      %s20 = sshll.u32 [#allocation2], 4
      %s21 = int_to_ptr.vmem [resolvable:$true] %s20
      %26 = dma.hbm_to_vmem [thread:$0]  %s0, 8192, %s21, [#allocation3], 128, 128, 8
    $region5: #{tpu_custom_call.1} parent=1 // pred_fallthru
      _
    // Predicated region
    $region6: #{tpu_custom_call.1} parent=1 // pred_check
      _
    $region7: #{tpu_custom_call.1} parent=1 // pred_check_branch
      %28 = sbr.rel (0) target = $region9
    $region8: #{tpu_custom_call.1} parent=1 // pred_region
      _
    $region9: #{tpu_custom_call.1} parent=1 // pred_fallthru
      _
    // Predicated region
    $region10: #{tpu_custom_call.1} parent=1 // pred_check
      _
    $region11: #{tpu_custom_call.1} parent=1 // pred_check_branch
      %30 = sbr.rel (0) target = $region13
    $region12: #{tpu_custom_call.1} parent=1 // pred_region
      _
    $region13: #{tpu_custom_call.1} parent=1 // pred_fallthru
      _
    // Predicated region
    $region14: #{tpu_custom_call.1} parent=1 // pred_check
      _
    $region15: #{tpu_custom_call.1} parent=1 // pred_check_branch
      %32 = sbr.rel (0) target = $region17
    $region16: #{tpu_custom_call.1} parent=1 // pred_region
      _
    $region17: #{tpu_custom_call.1} parent=1 // pred_fallthru
      _
    // Predicated region
    $region18: #{tpu_custom_call.1} parent=1 // pred_check
      _
    $region19: #{tpu_custom_call.1} parent=1 // pred_check_branch
      %34 = sbr.rel (0) target = $region21
    $region20: #{tpu_custom_call.1} parent=1 // pred_region
      _
    $region21: #{tpu_custom_call.1} parent=1 // pred_fallthru
      _
    // Predicated region
    $region22: #{tpu_custom_call.1} parent=1 // pred_check
      _
    $region23: #{tpu_custom_call.1} parent=1 // pred_check_branch
      %36 = sbr.rel (0) target = $region25
    $region24: #{tpu_custom_call.1} parent=1 // pred_region
      _
    $region25: #{tpu_custom_call.1} parent=1 // pred_fallthru
      _
    // Predicated region
    $region26: #{tpu_custom_call.1} parent=1 // pred_check
      _
    $region27: #{tpu_custom_call.1} parent=1 // pred_check_branch
      %38 = sbr.rel (0) target = $region29
    $region28: #{tpu_custom_call.1} parent=1 // pred_region
      _
    $region29: #{tpu_custom_call.1} parent=1 // pred_fallthru
      _
    // Predicated region
    $region30: #{tpu_custom_call.1} parent=1 // pred_check
      _
    $region31: #{tpu_custom_call.1} parent=1 // pred_check_branch
      %40 = sbr.rel (0) target = $region33
    $region32: #{tpu_custom_call.1} parent=1 // pred_region
      _
    $region33: #{tpu_custom_call.1} parent=1 // pred_fallthru
      _
    // Predicated region
    $region34: #{tpu_custom_call.1} parent=1 // pred_check
      _
    $region35: #{tpu_custom_call.1} parent=1 // pred_check_branch
      %42 = sbr.rel (0) target = $region37
    $region36: #{tpu_custom_call.1} parent=1 // pred_region
      %43 = dma.done [#allocation3], 8192
    $region37: #{tpu_custom_call.1} parent=1 // pred_fallthru
      _
    %v45 = vld [vmem:[#allocation2] sm:$0xff]
    %v46 = vld [vmem:[#allocation2 + $0x8] sm:$0xff]
    %v47 = vld [vmem:[#allocation2 + $0x10] sm:$0xff]
    %v48 = vld [vmem:[#allocation2 + $0x18] sm:$0xff]
    %v49 = vld [vmem:[#allocation2 + $0x20] sm:$0xff]
    %v50 = vld [vmem:[#allocation2 + $0x28] sm:$0xff]
    %v51 = vld [vmem:[#allocation2 + $0x30] sm:$0xff]
    %v52 = vld [vmem:[#allocation2 + $0x38] sm:$0xff]
    %v53 = vld [vmem:[#allocation2 + $0x40] sm:$0xff]
    %v54 = vld [vmem:[#allocation2 + $0x48] sm:$0xff]
    %v55 = vld [vmem:[#allocation2 + $0x50] sm:$0xff]
    %v56 = vld [vmem:[#allocation2 + $0x58] sm:$0xff]
    %v57 = vld [vmem:[#allocation2 + $0x60] sm:$0xff]
    %v58 = vld [vmem:[#allocation2 + $0x68] sm:$0xff]
    %v59 = vld [vmem:[#allocation2 + $0x70] sm:$0xff]
    %v60 = vld [vmem:[#allocation2 + $0x78] sm:$0xff]
    %v61 = vld [vmem:[#allocation2 + $0x80] sm:$0xff]
    %v62 = vld [vmem:[#allocation2 + $0x88] sm:$0xff]
    %v63 = vld [vmem:[#allocation2 + $0x90] sm:$0xff]
    %v64 = vld [vmem:[#allocation2 + $0x98] sm:$0xff]
    %v65 = vld [vmem:[#allocation2 + $0xa0] sm:$0xff]
    %v66 = vld [vmem:[#allocation2 + $0xa8] sm:$0xff]
    %v67 = vld [vmem:[#allocation2 + $0xb0] sm:$0xff]
    %v68 = vld [vmem:[#allocation2 + $0xb8] sm:$0xff]
    %v69 = vld [vmem:[#allocation2 + $0xc0] sm:$0xff]
    %v70 = vld [vmem:[#allocation2 + $0xc8] sm:$0xff]
    %v71 = vld [vmem:[#allocation2 + $0xd0] sm:$0xff]
    %v72 = vld [vmem:[#allocation2 + $0xd8] sm:$0xff]
    %v73 = vld [vmem:[#allocation2 + $0xe0] sm:$0xff]
    %v74 = vld [vmem:[#allocation2 + $0xe8] sm:$0xff]
    %v75 = vld [vmem:[#allocation2 + $0xf0] sm:$0xff]
    %v76 = vld [vmem:[#allocation2 + $0xf8] sm:$0xff]
    %v77 = vld [vmem:[#allocation2 + $0x100] sm:$0xff]
    %v78 = vld [vmem:[#allocation2 + $0x108] sm:$0xff]
    %v79 = vld [vmem:[#allocation2 + $0x110] sm:$0xff]
    %v80 = vld [vmem:[#allocation2 + $0x118] sm:$0xff]
    %v81 = vld [vmem:[#allocation2 + $0x120] sm:$0xff]
    %v82 = vld [vmem:[#allocation2 + $0x128] sm:$0xff]
    %v83 = vld [vmem:[#allocation2 + $0x130] sm:$0xff]
    %v84 = vld [vmem:[#allocation2 + $0x138] sm:$0xff]
    %v85 = vld [vmem:[#allocation2 + $0x140] sm:$0xff]
    %v86 = vld [vmem:[#allocation2 + $0x148] sm:$0xff]
    %v87 = vld [vmem:[#allocation2 + $0x150] sm:$0xff]
    %v88 = vld [vmem:[#allocation2 + $0x158] sm:$0xff]
    %v89 = vld [vmem:[#allocation2 + $0x160] sm:$0xff]
    %v90 = vld [vmem:[#allocation2 + $0x168] sm:$0xff]
    %v91 = vld [vmem:[#allocation2 + $0x170] sm:$0xff]
    %v92 = vld [vmem:[#allocation2 + $0x178] sm:$0xff]
    %v93 = vld [vmem:[#allocation2 + $0x180] sm:$0xff]
    %v94 = vld [vmem:[#allocation2 + $0x188] sm:$0xff]
    %v95 = vld [vmem:[#allocation2 + $0x190] sm:$0xff]
    %v96 = vld [vmem:[#allocation2 + $0x198] sm:$0xff]
    %v97 = vld [vmem:[#allocation2 + $0x1a0] sm:$0xff]
    %v98 = vld [vmem:[#allocation2 + $0x1a8] sm:$0xff]
    %v99 = vld [vmem:[#allocation2 + $0x1b0] sm:$0xff]
    %v100 = vld [vmem:[#allocation2 + $0x1b8] sm:$0xff]
    %v101 = vld [vmem:[#allocation2 + $0x1c0] sm:$0xff]
    %v102 = vld [vmem:[#allocation2 + $0x1c8] sm:$0xff]
    %v103 = vld [vmem:[#allocation2 + $0x1d0] sm:$0xff]
    %v104 = vld [vmem:[#allocation2 + $0x1d8] sm:$0xff]
    %v105 = vld [vmem:[#allocation2 + $0x1e0] sm:$0xff]
    %v106 = vld [vmem:[#allocation2 + $0x1e8] sm:$0xff]
    %v107 = vld [vmem:[#allocation2 + $0x1f0] sm:$0xff]
    %v108 = vld [vmem:[#allocation2 + $0x1f8] sm:$0xff]
    %vm109 = vcmask 261120
    %v110 = vsel %vm109, %v45, 0.0
    %111 = vadd.xlane.f32.xlu0 %v110
    %v112 = vpop.xlane.xlu0 %111
    %v113 = vsel %vm109, %v46, 0.0
    %114 = vadd.xlane.f32.xlu0 %v113
    %v115 = vpop.xlane.xlu0 %114
    %v116 = vsel %vm109, %v47, 0.0
    %117 = vadd.xlane.f32.xlu0 %v116
    %v118 = vpop.xlane.xlu0 %117
    %v119 = vsel %vm109, %v48, 0.0
    %120 = vadd.xlane.f32.xlu0 %v119
    %v121 = vpop.xlane.xlu0 %120
    %v122 = vsel %vm109, %v49, 0.0
    %123 = vadd.xlane.f32.xlu0 %v122
    %v124 = vpop.xlane.xlu0 %123
    %v125 = vsel %vm109, %v50, 0.0
    %126 = vadd.xlane.f32.xlu0 %v125
    %v127 = vpop.xlane.xlu0 %126
    %v128 = vsel %vm109, %v51, 0.0
    %129 = vadd.xlane.f32.xlu0 %v128
    %v130 = vpop.xlane.xlu0 %129
    %v131 = vsel %vm109, %v52, 0.0
    %132 = vadd.xlane.f32.xlu0 %v131
    %v133 = vpop.xlane.xlu0 %132
    %v134 = vsel %vm109, %v53, 0.0
    %135 = vadd.xlane.f32.xlu0 %v134
    %v136 = vpop.xlane.xlu0 %135
    %v137 = vsel %vm109, %v54, 0.0
    %138 = vadd.xlane.f32.xlu0 %v137
    %v139 = vpop.xlane.xlu0 %138
    %v140 = vsel %vm109, %v55, 0.0
    %141 = vadd.xlane.f32.xlu0 %v140
    %v142 = vpop.xlane.xlu0 %141
    %v143 = vsel %vm109, %v56, 0.0
    %144 = vadd.xlane.f32.xlu0 %v143
    %v145 = vpop.xlane.xlu0 %144
    %v146 = vsel %vm109, %v57, 0.0
    %147 = vadd.xlane.f32.xlu0 %v146
    %v148 = vpop.xlane.xlu0 %147
    %v149 = vsel %vm109, %v58, 0.0
    %150 = vadd.xlane.f32.xlu0 %v149
    %v151 = vpop.xlane.xlu0 %150
    %v152 = vsel %vm109, %v59, 0.0
    %153 = vadd.xlane.f32.xlu0 %v152
    %v154 = vpop.xlane.xlu0 %153
    %v155 = vsel %vm109, %v60, 0.0
    %156 = vadd.xlane.f32.xlu0 %v155
    %v157 = vpop.xlane.xlu0 %156
    %v158 = vsel %vm109, %v61, 0.0
    %159 = vadd.xlane.f32.xlu0 %v158
    %v160 = vpop.xlane.xlu0 %159
    %v161 = vsel %vm109, %v62, 0.0
    %162 = vadd.xlane.f32.xlu0 %v161
    %v163 = vpop.xlane.xlu0 %162
    %v164 = vsel %vm109, %v63, 0.0
    %165 = vadd.xlane.f32.xlu0 %v164
    %v166 = vpop.xlane.xlu0 %165
    %v167 = vsel %vm109, %v64, 0.0
    %168 = vadd.xlane.f32.xlu0 %v167
    %v169 = vpop.xlane.xlu0 %168
    %v170 = vsel %vm109, %v65, 0.0
    %171 = vadd.xlane.f32.xlu0 %v170
    %v172 = vpop.xlane.xlu0 %171
    %v173 = vsel %vm109, %v66, 0.0
    %174 = vadd.xlane.f32.xlu0 %v173
    %v175 = vpop.xlane.xlu0 %174
    %v176 = vsel %vm109, %v67, 0.0
    %177 = vadd.xlane.f32.xlu0 %v176
    %v178 = vpop.xlane.xlu0 %177
    %v179 = vsel %vm109, %v68, 0.0
    %180 = vadd.xlane.f32.xlu0 %v179
    %v181 = vpop.xlane.xlu0 %180
    %v182 = vsel %vm109, %v69, 0.0
    %183 = vadd.xlane.f32.xlu0 %v182
    %v184 = vpop.xlane.xlu0 %183
    %v185 = vsel %vm109, %v70, 0.0
    %186 = vadd.xlane.f32.xlu0 %v185
    %v187 = vpop.xlane.xlu0 %186
    %v188 = vsel %vm109, %v71, 0.0
    %189 = vadd.xlane.f32.xlu0 %v188
    %v190 = vpop.xlane.xlu0 %189
    %v191 = vsel %vm109, %v72, 0.0
    %192 = vadd.xlane.f32.xlu0 %v191
    %v193 = vpop.xlane.xlu0 %192
    %v194 = vsel %vm109, %v73, 0.0
    %195 = vadd.xlane.f32.xlu0 %v194
    %v196 = vpop.xlane.xlu0 %195
    %v197 = vsel %vm109, %v74, 0.0
    %198 = vadd.xlane.f32.xlu0 %v197
    %v199 = vpop.xlane.xlu0 %198
    %v200 = vsel %vm109, %v75, 0.0
    %201 = vadd.xlane.f32.xlu0 %v200
    %v202 = vpop.xlane.xlu0 %201
    %v203 = vsel %vm109, %v76, 0.0
    %204 = vadd.xlane.f32.xlu0 %v203
    %v205 = vpop.xlane.xlu0 %204
    %v206 = vsel %vm109, %v77, 0.0
    %207 = vadd.xlane.f32.xlu0 %v206
    %v208 = vpop.xlane.xlu0 %207
    %v209 = vsel %vm109, %v78, 0.0
    %210 = vadd.xlane.f32.xlu0 %v209
    %v211 = vpop.xlane.xlu0 %210
    %v212 = vsel %vm109, %v79, 0.0
    %213 = vadd.xlane.f32.xlu0 %v212
    %v214 = vpop.xlane.xlu0 %213
    %v215 = vsel %vm109, %v80, 0.0
    %216 = vadd.xlane.f32.xlu0 %v215
    %v217 = vpop.xlane.xlu0 %216
    %v218 = vsel %vm109, %v81, 0.0
    %219 = vadd.xlane.f32.xlu0 %v218
    %v220 = vpop.xlane.xlu0 %219
    %v221 = vsel %vm109, %v82, 0.0
    %222 = vadd.xlane.f32.xlu0 %v221
    %v223 = vpop.xlane.xlu0 %222
    %v224 = vsel %vm109, %v83, 0.0
    %225 = vadd.xlane.f32.xlu0 %v224
    %v226 = vpop.xlane.xlu0 %225
    %v227 = vsel %vm109, %v84, 0.0
    %228 = vadd.xlane.f32.xlu0 %v227
    %v229 = vpop.xlane.xlu0 %228
    %v230 = vsel %vm109, %v85, 0.0
    %231 = vadd.xlane.f32.xlu0 %v230
    %v232 = vpop.xlane.xlu0 %231
    %v233 = vsel %vm109, %v86, 0.0
    %234 = vadd.xlane.f32.xlu0 %v233
    %v235 = vpop.xlane.xlu0 %234
    %v236 = vsel %vm109, %v87, 0.0
    %237 = vadd.xlane.f32.xlu0 %v236
    %v238 = vpop.xlane.xlu0 %237
    %v239 = vsel %vm109, %v88, 0.0
    %240 = vadd.xlane.f32.xlu0 %v239
    %v241 = vpop.xlane.xlu0 %240
    %v242 = vsel %vm109, %v89, 0.0
    %243 = vadd.xlane.f32.xlu0 %v242
    %v244 = vpop.xlane.xlu0 %243
    %v245 = vsel %vm109, %v90, 0.0
    %246 = vadd.xlane.f32.xlu0 %v245
    %v247 = vpop.xlane.xlu0 %246
    %v248 = vsel %vm109, %v91, 0.0
    %249 = vadd.xlane.f32.xlu0 %v248
    %v250 = vpop.xlane.xlu0 %249
    %v251 = vsel %vm109, %v92, 0.0
    %252 = vadd.xlane.f32.xlu0 %v251
    %v253 = vpop.xlane.xlu0 %252
    %v254 = vsel %vm109, %v93, 0.0
    %255 = vadd.xlane.f32.xlu0 %v254
    %v256 = vpop.xlane.xlu0 %255
    %v257 = vsel %vm109, %v94, 0.0
    %258 = vadd.xlane.f32.xlu0 %v257
    %v259 = vpop.xlane.xlu0 %258
    %v260 = vsel %vm109, %v95, 0.0
    %261 = vadd.xlane.f32.xlu0 %v260
    %v262 = vpop.xlane.xlu0 %261
    %v263 = vsel %vm109, %v96, 0.0
    %264 = vadd.xlane.f32.xlu0 %v263
    %v265 = vpop.xlane.xlu0 %264
    %v266 = vsel %vm109, %v97, 0.0
    %267 = vadd.xlane.f32.xlu0 %v266
    %v268 = vpop.xlane.xlu0 %267
    %v269 = vsel %vm109, %v98, 0.0
    %270 = vadd.xlane.f32.xlu0 %v269
    %v271 = vpop.xlane.xlu0 %270
    %v272 = vsel %vm109, %v99, 0.0
    %273 = vadd.xlane.f32.xlu0 %v272
    %v274 = vpop.xlane.xlu0 %273
    %v275 = vsel %vm109, %v100, 0.0
    %276 = vadd.xlane.f32.xlu0 %v275
    %v277 = vpop.xlane.xlu0 %276
    %v278 = vsel %vm109, %v101, 0.0
    %279 = vadd.xlane.f32.xlu0 %v278
    %v280 = vpop.xlane.xlu0 %279
    %v281 = vsel %vm109, %v102, 0.0
    %282 = vadd.xlane.f32.xlu0 %v281
    %v283 = vpop.xlane.xlu0 %282
    %v284 = vsel %vm109, %v103, 0.0
    %285 = vadd.xlane.f32.xlu0 %v284
    %v286 = vpop.xlane.xlu0 %285
    %v287 = vsel %vm109, %v104, 0.0
    %288 = vadd.xlane.f32.xlu0 %v287
    %v289 = vpop.xlane.xlu0 %288
    %v290 = vsel %vm109, %v105, 0.0
    %291 = vadd.xlane.f32.xlu0 %v290
    %v292 = vpop.xlane.xlu0 %291
    %v293 = vsel %vm109, %v106, 0.0
    %294 = vadd.xlane.f32.xlu0 %v293
    %v295 = vpop.xlane.xlu0 %294
    %v296 = vsel %vm109, %v107, 0.0
    %297 = vadd.xlane.f32.xlu0 %v296
    %v298 = vpop.xlane.xlu0 %297
    %v299 = vsel %vm109, %v108, 0.0
    %300 = vadd.xlane.f32.xlu0 %v299
    %v301 = vpop.xlane.xlu0 %300
    %v302 = vrcp.pop 32.0
    %v303 = vmul.f32 %v112, %v302
    %v304 = vmul.f32 %v115, %v302
    %v305 = vmul.f32 %v118, %v302
    %v306 = vmul.f32 %v121, %v302
    %v307 = vmul.f32 %v124, %v302
    %v308 = vmul.f32 %v127, %v302
    %v309 = vmul.f32 %v130, %v302
    %v310 = vmul.f32 %v133, %v302
    %v311 = vmul.f32 %v136, %v302
    %v312 = vmul.f32 %v139, %v302
    %v313 = vmul.f32 %v142, %v302
    %v314 = vmul.f32 %v145, %v302
    %v315 = vmul.f32 %v148, %v302
    %v316 = vmul.f32 %v151, %v302
    %v317 = vmul.f32 %v154, %v302
    %v318 = vmul.f32 %v157, %v302
    %v319 = vmul.f32 %v160, %v302
    %v320 = vmul.f32 %v163, %v302
    %v321 = vmul.f32 %v166, %v302
    %v322 = vmul.f32 %v169, %v302
    %v323 = vmul.f32 %v172, %v302
    %v324 = vmul.f32 %v175, %v302
    %v325 = vmul.f32 %v178, %v302
    %v326 = vmul.f32 %v181, %v302
    %v327 = vmul.f32 %v184, %v302
    %v328 = vmul.f32 %v187, %v302
    %v329 = vmul.f32 %v190, %v302
    %v330 = vmul.f32 %v193, %v302
    %v331 = vmul.f32 %v196, %v302
    %v332 = vmul.f32 %v199, %v302
    %v333 = vmul.f32 %v202, %v302
    %v334 = vmul.f32 %v205, %v302
    %v335 = vmul.f32 %v208, %v302
    %v336 = vmul.f32 %v211, %v302
    %v337 = vmul.f32 %v214, %v302
    %v338 = vmul.f32 %v217, %v302
    %v339 = vmul.f32 %v220, %v302
    %v340 = vmul.f32 %v223, %v302
    %v341 = vmul.f32 %v226, %v302
    %v342 = vmul.f32 %v229, %v302
    %v343 = vmul.f32 %v232, %v302
    %v344 = vmul.f32 %v235, %v302
    %v345 = vmul.f32 %v238, %v302
    %v346 = vmul.f32 %v241, %v302
    %v347 = vmul.f32 %v244, %v302
    %v348 = vmul.f32 %v247, %v302
    %v349 = vmul.f32 %v250, %v302
    %v350 = vmul.f32 %v253, %v302
    %v351 = vmul.f32 %v256, %v302
    %v352 = vmul.f32 %v259, %v302
    %v353 = vmul.f32 %v262, %v302
    %v354 = vmul.f32 %v265, %v302
    %v355 = vmul.f32 %v268, %v302
    %v356 = vmul.f32 %v271, %v302
    %v357 = vmul.f32 %v274, %v302
    %v358 = vmul.f32 %v277, %v302
    %v359 = vmul.f32 %v280, %v302
    %v360 = vmul.f32 %v283, %v302
    %v361 = vmul.f32 %v286, %v302
    %v362 = vmul.f32 %v289, %v302
    %v363 = vmul.f32 %v292, %v302
    %v364 = vmul.f32 %v295, %v302
    %v365 = vmul.f32 %v298, %v302
    %v366 = vmul.f32 %v301, %v302
    %v367 = vsub.f32 %v45, %v303
    %v368 = vsub.f32 %v46, %v304
    %v369 = vsub.f32 %v47, %v305
    %v370 = vsub.f32 %v48, %v306
    %v371 = vsub.f32 %v49, %v307
    %v372 = vsub.f32 %v50, %v308
    %v373 = vsub.f32 %v51, %v309
    %v374 = vsub.f32 %v52, %v310
    %v375 = vsub.f32 %v53, %v311
    %v376 = vsub.f32 %v54, %v312
    %v377 = vsub.f32 %v55, %v313
    %v378 = vsub.f32 %v56, %v314
    %v379 = vsub.f32 %v57, %v315
    %v380 = vsub.f32 %v58, %v316
    %v381 = vsub.f32 %v59, %v317
    %v382 = vsub.f32 %v60, %v318
    %v383 = vsub.f32 %v61, %v319
    %v384 = vsub.f32 %v62, %v320
    %v385 = vsub.f32 %v63, %v321
    %v386 = vsub.f32 %v64, %v322
    %v387 = vsub.f32 %v65, %v323
    %v388 = vsub.f32 %v66, %v324
    %v389 = vsub.f32 %v67, %v325
    %v390 = vsub.f32 %v68, %v326
    %v391 = vsub.f32 %v69, %v327
    %v392 = vsub.f32 %v70, %v328
    %v393 = vsub.f32 %v71, %v329
    %v394 = vsub.f32 %v72, %v330
    %v395 = vsub.f32 %v73, %v331
    %v396 = vsub.f32 %v74, %v332
    %v397 = vsub.f32 %v75, %v333
    %v398 = vsub.f32 %v76, %v334
    %v399 = vsub.f32 %v77, %v335
    %v400 = vsub.f32 %v78, %v336
    %v401 = vsub.f32 %v79, %v337
    %v402 = vsub.f32 %v80, %v338
    %v403 = vsub.f32 %v81, %v339
    %v404 = vsub.f32 %v82, %v340
    %v405 = vsub.f32 %v83, %v341
    %v406 = vsub.f32 %v84, %v342
    %v407 = vsub.f32 %v85, %v343
    %v408 = vsub.f32 %v86, %v344
    %v409 = vsub.f32 %v87, %v345
    %v410 = vsub.f32 %v88, %v346
    %v411 = vsub.f32 %v89, %v347
    %v412 = vsub.f32 %v90, %v348
    %v413 = vsub.f32 %v91, %v349
    %v414 = vsub.f32 %v92, %v350
    %v415 = vsub.f32 %v93, %v351
    %v416 = vsub.f32 %v94, %v352
    %v417 = vsub.f32 %v95, %v353
    %v418 = vsub.f32 %v96, %v354
    %v419 = vsub.f32 %v97, %v355
    %v420 = vsub.f32 %v98, %v356
    %v421 = vsub.f32 %v99, %v357
    %v422 = vsub.f32 %v100, %v358
    %v423 = vsub.f32 %v101, %v359
    %v424 = vsub.f32 %v102, %v360
    %v425 = vsub.f32 %v103, %v361
    %v426 = vsub.f32 %v104, %v362
    %v427 = vsub.f32 %v105, %v363
    %v428 = vsub.f32 %v106, %v364
    %v429 = vsub.f32 %v107, %v365
    %v430 = vsub.f32 %v108, %v366
    %v431 = vmul.f32 %v367, %v367
    %v432 = vmul.f32 %v368, %v368
    %v433 = vmul.f32 %v369, %v369
    %v434 = vmul.f32 %v370, %v370
    %v435 = vmul.f32 %v371, %v371
    %v436 = vmul.f32 %v372, %v372
    %v437 = vmul.f32 %v373, %v373
    %v438 = vmul.f32 %v374, %v374
    %v439 = vmul.f32 %v375, %v375
    %v440 = vmul.f32 %v376, %v376
    %v441 = vmul.f32 %v377, %v377
    %v442 = vmul.f32 %v378, %v378
    %v443 = vmul.f32 %v379, %v379
    %v444 = vmul.f32 %v380, %v380
    %v445 = vmul.f32 %v381, %v381
    %v446 = vmul.f32 %v382, %v382
    %v447 = vmul.f32 %v383, %v383
    %v448 = vmul.f32 %v384, %v384
    %v449 = vmul.f32 %v385, %v385
    %v450 = vmul.f32 %v386, %v386
    %v451 = vmul.f32 %v387, %v387
    %v452 = vmul.f32 %v388, %v388
    %v453 = vmul.f32 %v389, %v389
    %v454 = vmul.f32 %v390, %v390
    %v455 = vmul.f32 %v391, %v391
    %v456 = vmul.f32 %v392, %v392
    %v457 = vmul.f32 %v393, %v393
    %v458 = vmul.f32 %v394, %v394
    %v459 = vmul.f32 %v395, %v395
    %v460 = vmul.f32 %v396, %v396
    %v461 = vmul.f32 %v397, %v397
    %v462 = vmul.f32 %v398, %v398
    %v463 = vmul.f32 %v399, %v399
    %v464 = vmul.f32 %v400, %v400
    %v465 = vmul.f32 %v401, %v401
    %v466 = vmul.f32 %v402, %v402
    %v467 = vmul.f32 %v403, %v403
    %v468 = vmul.f32 %v404, %v404
    %v469 = vmul.f32 %v405, %v405
    %v470 = vmul.f32 %v406, %v406
    %v471 = vmul.f32 %v407, %v407
    %v472 = vmul.f32 %v408, %v408
    %v473 = vmul.f32 %v409, %v409
    %v474 = vmul.f32 %v410, %v410
    %v475 = vmul.f32 %v411, %v411
    %v476 = vmul.f32 %v412, %v412
    %v477 = vmul.f32 %v413, %v413
    %v478 = vmul.f32 %v414, %v414
    %v479 = vmul.f32 %v415, %v415
    %v480 = vmul.f32 %v416, %v416
    %v481 = vmul.f32 %v417, %v417
    %v482 = vmul.f32 %v418, %v418
    %v483 = vmul.f32 %v419, %v419
    %v484 = vmul.f32 %v420, %v420
    %v485 = vmul.f32 %v421, %v421
    %v486 = vmul.f32 %v422, %v422
    %v487 = vmul.f32 %v423, %v423
    %v488 = vmul.f32 %v424, %v424
    %v489 = vmul.f32 %v425, %v425
    %v490 = vmul.f32 %v426, %v426
    %v491 = vmul.f32 %v427, %v427
    %v492 = vmul.f32 %v428, %v428
    %v493 = vmul.f32 %v429, %v429
    %v494 = vmul.f32 %v430, %v430
    %v495 = vsel %vm109, %v431, 0.0
    %496 = vadd.xlane.f32.xlu0 %v495
    %v497 = vpop.xlane.xlu0 %496
    %v498 = vsel %vm109, %v432, 0.0
    %499 = vadd.xlane.f32.xlu0 %v498
    %v500 = vpop.xlane.xlu0 %499
    %v501 = vsel %vm109, %v433, 0.0
    %502 = vadd.xlane.f32.xlu0 %v501
    %v503 = vpop.xlane.xlu0 %502
    %v504 = vsel %vm109, %v434, 0.0
    %505 = vadd.xlane.f32.xlu0 %v504
    %v506 = vpop.xlane.xlu0 %505
    %v507 = vsel %vm109, %v435, 0.0
    %508 = vadd.xlane.f32.xlu0 %v507
    %v509 = vpop.xlane.xlu0 %508
    %v510 = vsel %vm109, %v436, 0.0
    %511 = vadd.xlane.f32.xlu0 %v510
    %v512 = vpop.xlane.xlu0 %511
    %v513 = vsel %vm109, %v437, 0.0
    %514 = vadd.xlane.f32.xlu0 %v513
    %v515 = vpop.xlane.xlu0 %514
    %v516 = vsel %vm109, %v438, 0.0
    %517 = vadd.xlane.f32.xlu0 %v516
    %v518 = vpop.xlane.xlu0 %517
    %v519 = vsel %vm109, %v439, 0.0
    %520 = vadd.xlane.f32.xlu0 %v519
    %v521 = vpop.xlane.xlu0 %520
    %v522 = vsel %vm109, %v440, 0.0
    %523 = vadd.xlane.f32.xlu0 %v522
    %v524 = vpop.xlane.xlu0 %523
    %v525 = vsel %vm109, %v441, 0.0
    %526 = vadd.xlane.f32.xlu0 %v525
    %v527 = vpop.xlane.xlu0 %526
    %v528 = vsel %vm109, %v442, 0.0
    %529 = vadd.xlane.f32.xlu0 %v528
    %v530 = vpop.xlane.xlu0 %529
    %v531 = vsel %vm109, %v443, 0.0
    %532 = vadd.xlane.f32.xlu0 %v531
    %v533 = vpop.xlane.xlu0 %532
    %v534 = vsel %vm109, %v444, 0.0
    %535 = vadd.xlane.f32.xlu0 %v534
    %v536 = vpop.xlane.xlu0 %535
    %v537 = vsel %vm109, %v445, 0.0
    %538 = vadd.xlane.f32.xlu0 %v537
    %v539 = vpop.xlane.xlu0 %538
    %v540 = vsel %vm109, %v446, 0.0
    %541 = vadd.xlane.f32.xlu0 %v540
    %v542 = vpop.xlane.xlu0 %541
    %v543 = vsel %vm109, %v447, 0.0
    %544 = vadd.xlane.f32.xlu0 %v543
    %v545 = vpop.xlane.xlu0 %544
    %v546 = vsel %vm109, %v448, 0.0
    %547 = vadd.xlane.f32.xlu0 %v546
    %v548 = vpop.xlane.xlu0 %547
    %v549 = vsel %vm109, %v449, 0.0
    %550 = vadd.xlane.f32.xlu0 %v549
    %v551 = vpop.xlane.xlu0 %550
    %v552 = vsel %vm109, %v450, 0.0
    %553 = vadd.xlane.f32.xlu0 %v552
    %v554 = vpop.xlane.xlu0 %553
    %v555 = vsel %vm109, %v451, 0.0
    %556 = vadd.xlane.f32.xlu0 %v555
    %v557 = vpop.xlane.xlu0 %556
    %v558 = vsel %vm109, %v452, 0.0
    %559 = vadd.xlane.f32.xlu0 %v558
    %v560 = vpop.xlane.xlu0 %559
    %v561 = vsel %vm109, %v453, 0.0
    %562 = vadd.xlane.f32.xlu0 %v561
    %v563 = vpop.xlane.xlu0 %562
    %v564 = vsel %vm109, %v454, 0.0
    %565 = vadd.xlane.f32.xlu0 %v564
    %v566 = vpop.xlane.xlu0 %565
    %v567 = vsel %vm109, %v455, 0.0
    %568 = vadd.xlane.f32.xlu0 %v567
    %v569 = vpop.xlane.xlu0 %568
    %v570 = vsel %vm109, %v456, 0.0
    %571 = vadd.xlane.f32.xlu0 %v570
    %v572 = vpop.xlane.xlu0 %571
    %v573 = vsel %vm109, %v457, 0.0
    %574 = vadd.xlane.f32.xlu0 %v573
    %v575 = vpop.xlane.xlu0 %574
    %v576 = vsel %vm109, %v458, 0.0
    %577 = vadd.xlane.f32.xlu0 %v576
    %v578 = vpop.xlane.xlu0 %577
    %v579 = vsel %vm109, %v459, 0.0
    %580 = vadd.xlane.f32.xlu0 %v579
    %v581 = vpop.xlane.xlu0 %580
    %v582 = vsel %vm109, %v460, 0.0
    %583 = vadd.xlane.f32.xlu0 %v582
    %v584 = vpop.xlane.xlu0 %583
    %v585 = vsel %vm109, %v461, 0.0
    %586 = vadd.xlane.f32.xlu0 %v585
    %v587 = vpop.xlane.xlu0 %586
    %v588 = vsel %vm109, %v462, 0.0
    %589 = vadd.xlane.f32.xlu0 %v588
    %v590 = vpop.xlane.xlu0 %589
    %v591 = vsel %vm109, %v463, 0.0
    %592 = vadd.xlane.f32.xlu0 %v591
    %v593 = vpop.xlane.xlu0 %592
    %v594 = vsel %vm109, %v464, 0.0
    %595 = vadd.xlane.f32.xlu0 %v594
    %v596 = vpop.xlane.xlu0 %595
    %v597 = vsel %vm109, %v465, 0.0
    %598 = vadd.xlane.f32.xlu0 %v597
    %v599 = vpop.xlane.xlu0 %598
    %v600 = vsel %vm109, %v466, 0.0
    %601 = vadd.xlane.f32.xlu0 %v600
    %v602 = vpop.xlane.xlu0 %601
    %v603 = vsel %vm109, %v467, 0.0
    %604 = vadd.xlane.f32.xlu0 %v603
    %v605 = vpop.xlane.xlu0 %604
    %v606 = vsel %vm109, %v468, 0.0
    %607 = vadd.xlane.f32.xlu0 %v606
    %v608 = vpop.xlane.xlu0 %607
    %v609 = vsel %vm109, %v469, 0.0
    %610 = vadd.xlane.f32.xlu0 %v609
    %v611 = vpop.xlane.xlu0 %610
    %v612 = vsel %vm109, %v470, 0.0
    %613 = vadd.xlane.f32.xlu0 %v612
    %v614 = vpop.xlane.xlu0 %613
    %v615 = vsel %vm109, %v471, 0.0
    %616 = vadd.xlane.f32.xlu0 %v615
    %v617 = vpop.xlane.xlu0 %616
    %v618 = vsel %vm109, %v472, 0.0
    %619 = vadd.xlane.f32.xlu0 %v618
    %v620 = vpop.xlane.xlu0 %619
    %v621 = vsel %vm109, %v473, 0.0
    %622 = vadd.xlane.f32.xlu0 %v621
    %v623 = vpop.xlane.xlu0 %622
    %v624 = vsel %vm109, %v474, 0.0
    %625 = vadd.xlane.f32.xlu0 %v624
    %v626 = vpop.xlane.xlu0 %625
    %v627 = vsel %vm109, %v475, 0.0
    %628 = vadd.xlane.f32.xlu0 %v627
    %v629 = vpop.xlane.xlu0 %628
    %v630 = vsel %vm109, %v476, 0.0
    %631 = vadd.xlane.f32.xlu0 %v630
    %v632 = vpop.xlane.xlu0 %631
    %v633 = vsel %vm109, %v477, 0.0
    %634 = vadd.xlane.f32.xlu0 %v633
    %v635 = vpop.xlane.xlu0 %634
    %v636 = vsel %vm109, %v478, 0.0
    %637 = vadd.xlane.f32.xlu0 %v636
    %v638 = vpop.xlane.xlu0 %637
    %v639 = vsel %vm109, %v479, 0.0
    %640 = vadd.xlane.f32.xlu0 %v639
    %v641 = vpop.xlane.xlu0 %640
    %v642 = vsel %vm109, %v480, 0.0
    %643 = vadd.xlane.f32.xlu0 %v642
    %v644 = vpop.xlane.xlu0 %643
    %v645 = vsel %vm109, %v481, 0.0
    %646 = vadd.xlane.f32.xlu0 %v645
    %v647 = vpop.xlane.xlu0 %646
    %v648 = vsel %vm109, %v482, 0.0
    %649 = vadd.xlane.f32.xlu0 %v648
    %v650 = vpop.xlane.xlu0 %649
    %v651 = vsel %vm109, %v483, 0.0
    %652 = vadd.xlane.f32.xlu0 %v651
    %v653 = vpop.xlane.xlu0 %652
    %v654 = vsel %vm109, %v484, 0.0
    %655 = vadd.xlane.f32.xlu0 %v654
    %v656 = vpop.xlane.xlu0 %655
    %v657 = vsel %vm109, %v485, 0.0
    %658 = vadd.xlane.f32.xlu0 %v657
    %v659 = vpop.xlane.xlu0 %658
    %v660 = vsel %vm109, %v486, 0.0
    %661 = vadd.xlane.f32.xlu0 %v660
    %v662 = vpop.xlane.xlu0 %661
    %v663 = vsel %vm109, %v487, 0.0
    %664 = vadd.xlane.f32.xlu0 %v663
    %v665 = vpop.xlane.xlu0 %664
    %v666 = vsel %vm109, %v488, 0.0
    %667 = vadd.xlane.f32.xlu0 %v666
    %v668 = vpop.xlane.xlu0 %667
    %v669 = vsel %vm109, %v489, 0.0
    %670 = vadd.xlane.f32.xlu0 %v669
    %v671 = vpop.xlane.xlu0 %670
    %v672 = vsel %vm109, %v490, 0.0
    %673 = vadd.xlane.f32.xlu0 %v672
    %v674 = vpop.xlane.xlu0 %673
    %v675 = vsel %vm109, %v491, 0.0
    %676 = vadd.xlane.f32.xlu0 %v675
    %v677 = vpop.xlane.xlu0 %676
    %v678 = vsel %vm109, %v492, 0.0
    %679 = vadd.xlane.f32.xlu0 %v678
    %v680 = vpop.xlane.xlu0 %679
    %v681 = vsel %vm109, %v493, 0.0
    %682 = vadd.xlane.f32.xlu0 %v681
    %v683 = vpop.xlane.xlu0 %682
    %v684 = vsel %vm109, %v494, 0.0
    %685 = vadd.xlane.f32.xlu0 %v684
    %v686 = vpop.xlane.xlu0 %685
    %v687 = vmul.f32 %v497, %v302
    %v688 = vmul.f32 %v500, %v302
    %v689 = vmul.f32 %v503, %v302
    %v690 = vmul.f32 %v506, %v302
    %v691 = vmul.f32 %v509, %v302
    %v692 = vmul.f32 %v512, %v302
    %v693 = vmul.f32 %v515, %v302
    %v694 = vmul.f32 %v518, %v302
    %v695 = vmul.f32 %v521, %v302
    %v696 = vmul.f32 %v524, %v302
    %v697 = vmul.f32 %v527, %v302
    %v698 = vmul.f32 %v530, %v302
    %v699 = vmul.f32 %v533, %v302
    %v700 = vmul.f32 %v536, %v302
    %v701 = vmul.f32 %v539, %v302
    %v702 = vmul.f32 %v542, %v302
    %v703 = vmul.f32 %v545, %v302
    %v704 = vmul.f32 %v548, %v302
    %v705 = vmul.f32 %v551, %v302
    %v706 = vmul.f32 %v554, %v302
    %v707 = vmul.f32 %v557, %v302
    %v708 = vmul.f32 %v560, %v302
    %v709 = vmul.f32 %v563, %v302
    %v710 = vmul.f32 %v566, %v302
    %v711 = vmul.f32 %v569, %v302
    %v712 = vmul.f32 %v572, %v302
    %v713 = vmul.f32 %v575, %v302
    %v714 = vmul.f32 %v578, %v302
    %v715 = vmul.f32 %v581, %v302
    %v716 = vmul.f32 %v584, %v302
    %v717 = vmul.f32 %v587, %v302
    %v718 = vmul.f32 %v590, %v302
    %v719 = vmul.f32 %v593, %v302
    %v720 = vmul.f32 %v596, %v302
    %v721 = vmul.f32 %v599, %v302
    %v722 = vmul.f32 %v602, %v302
    %v723 = vmul.f32 %v605, %v302
    %v724 = vmul.f32 %v608, %v302
    %v725 = vmul.f32 %v611, %v302
    %v726 = vmul.f32 %v614, %v302
    %v727 = vmul.f32 %v617, %v302
    %v728 = vmul.f32 %v620, %v302
    %v729 = vmul.f32 %v623, %v302
    %v730 = vmul.f32 %v626, %v302
    %v731 = vmul.f32 %v629, %v302
    %v732 = vmul.f32 %v632, %v302
    %v733 = vmul.f32 %v635, %v302
    %v734 = vmul.f32 %v638, %v302
    %v735 = vmul.f32 %v641, %v302
    %v736 = vmul.f32 %v644, %v302
    %v737 = vmul.f32 %v647, %v302
    %v738 = vmul.f32 %v650, %v302
    %v739 = vmul.f32 %v653, %v302
    %v740 = vmul.f32 %v656, %v302
    %v741 = vmul.f32 %v659, %v302
    %v742 = vmul.f32 %v662, %v302
    %v743 = vmul.f32 %v665, %v302
    %v744 = vmul.f32 %v668, %v302
    %v745 = vmul.f32 %v671, %v302
    %v746 = vmul.f32 %v674, %v302
    %v747 = vmul.f32 %v677, %v302
    %v748 = vmul.f32 %v680, %v302
    %v749 = vmul.f32 %v683, %v302
    %v750 = vmul.f32 %v686, %v302
    %v751 = vadd.f32 %v687, 1e-05
    %v752 = vadd.f32 %v688, 1e-05
    %v753 = vadd.f32 %v689, 1e-05
    %v754 = vadd.f32 %v690, 1e-05
    %v755 = vadd.f32 %v691, 1e-05
    %v756 = vadd.f32 %v692, 1e-05
    %v757 = vadd.f32 %v693, 1e-05
    %v758 = vadd.f32 %v694, 1e-05
    %v759 = vadd.f32 %v695, 1e-05
    %v760 = vadd.f32 %v696, 1e-05
    %v761 = vadd.f32 %v697, 1e-05
    %v762 = vadd.f32 %v698, 1e-05
    %v763 = vadd.f32 %v699, 1e-05
    %v764 = vadd.f32 %v700, 1e-05
    %v765 = vadd.f32 %v701, 1e-05
    %v766 = vadd.f32 %v702, 1e-05
    %v767 = vadd.f32 %v703, 1e-05
    %v768 = vadd.f32 %v704, 1e-05
    %v769 = vadd.f32 %v705, 1e-05
    %v770 = vadd.f32 %v706, 1e-05
    %v771 = vadd.f32 %v707, 1e-05
    %v772 = vadd.f32 %v708, 1e-05
    %v773 = vadd.f32 %v709, 1e-05
    %v774 = vadd.f32 %v710, 1e-05
    %v775 = vadd.f32 %v711, 1e-05
    %v776 = vadd.f32 %v712, 1e-05
    %v777 = vadd.f32 %v713, 1e-05
    %v778 = vadd.f32 %v714, 1e-05
    %v779 = vadd.f32 %v715, 1e-05
    %v780 = vadd.f32 %v716, 1e-05
    %v781 = vadd.f32 %v717, 1e-05
    %v782 = vadd.f32 %v718, 1e-05
    %v783 = vadd.f32 %v719, 1e-05
    %v784 = vadd.f32 %v720, 1e-05
    %v785 = vadd.f32 %v721, 1e-05
    %v786 = vadd.f32 %v722, 1e-05
    %v787 = vadd.f32 %v723, 1e-05
    %v788 = vadd.f32 %v724, 1e-05
    %v789 = vadd.f32 %v725, 1e-05
    %v790 = vadd.f32 %v726, 1e-05
    %v791 = vadd.f32 %v727, 1e-05
    %v792 = vadd.f32 %v728, 1e-05
    %v793 = vadd.f32 %v729, 1e-05
    %v794 = vadd.f32 %v730, 1e-05
    %v795 = vadd.f32 %v731, 1e-05
    %v796 = vadd.f32 %v732, 1e-05
    %v797 = vadd.f32 %v733, 1e-05
    %v798 = vadd.f32 %v734, 1e-05
    %v799 = vadd.f32 %v735, 1e-05
    %v800 = vadd.f32 %v736, 1e-05
    %v801 = vadd.f32 %v737, 1e-05
    %v802 = vadd.f32 %v738, 1e-05
    %v803 = vadd.f32 %v739, 1e-05
    %v804 = vadd.f32 %v740, 1e-05
    %v805 = vadd.f32 %v741, 1e-05
    %v806 = vadd.f32 %v742, 1e-05
    %v807 = vadd.f32 %v743, 1e-05
    %v808 = vadd.f32 %v744, 1e-05
    %v809 = vadd.f32 %v745, 1e-05
    %v810 = vadd.f32 %v746, 1e-05
    %v811 = vadd.f32 %v747, 1e-05
    %v812 = vadd.f32 %v748, 1e-05
    %v813 = vadd.f32 %v749, 1e-05
    %v814 = vadd.f32 %v750, 1e-05
    %v815 = vrsqrt.pop %v751
    %v816 = vrsqrt.pop %v752
    %v817 = vrsqrt.pop %v753
    %v818 = vrsqrt.pop %v754
    %v819 = vrsqrt.pop %v755
    %v820 = vrsqrt.pop %v756
    %v821 = vrsqrt.pop %v757
    %v822 = vrsqrt.pop %v758
    %v823 = vrsqrt.pop %v759
    %v824 = vrsqrt.pop %v760
    %v825 = vrsqrt.pop %v761
    %v826 = vrsqrt.pop %v762
    %v827 = vrsqrt.pop %v763
    %v828 = vrsqrt.pop %v764
    %v829 = vrsqrt.pop %v765
    %v830 = vrsqrt.pop %v766
    %v831 = vrsqrt.pop %v767
    %v832 = vrsqrt.pop %v768
    %v833 = vrsqrt.pop %v769
    %v834 = vrsqrt.pop %v770
    %v835 = vrsqrt.pop %v771
    %v836 = vrsqrt.pop %v772
    %v837 = vrsqrt.pop %v773
    %v838 = vrsqrt.pop %v774
    %v839 = vrsqrt.pop %v775
    %v840 = vrsqrt.pop %v776
    %v841 = vrsqrt.pop %v777
    %v842 = vrsqrt.pop %v778
    %v843 = vrsqrt.pop %v779
    %v844 = vrsqrt.pop %v780
    %v845 = vrsqrt.pop %v781
    %v846 = vrsqrt.pop %v782
    %v847 = vrsqrt.pop %v783
    %v848 = vrsqrt.pop %v784
    %v849 = vrsqrt.pop %v785
    %v850 = vrsqrt.pop %v786
    %v851 = vrsqrt.pop %v787
    %v852 = vrsqrt.pop %v788
    %v853 = vrsqrt.pop %v789
    %v854 = vrsqrt.pop %v790
    %v855 = vrsqrt.pop %v791
    %v856 = vrsqrt.pop %v792
    %v857 = vrsqrt.pop %v793
    %v858 = vrsqrt.pop %v794
    %v859 = vrsqrt.pop %v795
    %v860 = vrsqrt.pop %v796
    %v861 = vrsqrt.pop %v797
    %v862 = vrsqrt.pop %v798
    %v863 = vrsqrt.pop %v799
    %v864 = vrsqrt.pop %v800
    %v865 = vrsqrt.pop %v801
    %v866 = vrsqrt.pop %v802
    %v867 = vrsqrt.pop %v803
    %v868 = vrsqrt.pop %v804
    %v869 = vrsqrt.pop %v805
    %v870 = vrsqrt.pop %v806
    %v871 = vrsqrt.pop %v807
    %v872 = vrsqrt.pop %v808
    %v873 = vrsqrt.pop %v809
    %v874 = vrsqrt.pop %v810
    %v875 = vrsqrt.pop %v811
    %v876 = vrsqrt.pop %v812
    %v877 = vrsqrt.pop %v813
    %v878 = vrsqrt.pop %v814
    %v879 = vmul.f32 %v367, %v815
    %v880 = vmul.f32 %v368, %v816
    %v881 = vmul.f32 %v369, %v817
    %v882 = vmul.f32 %v370, %v818
    %v883 = vmul.f32 %v371, %v819
    %v884 = vmul.f32 %v372, %v820
    %v885 = vmul.f32 %v373, %v821
    %v886 = vmul.f32 %v374, %v822
    %v887 = vmul.f32 %v375, %v823
    %v888 = vmul.f32 %v376, %v824
    %v889 = vmul.f32 %v377, %v825
    %v890 = vmul.f32 %v378, %v826
    %v891 = vmul.f32 %v379, %v827
    %v892 = vmul.f32 %v380, %v828
    %v893 = vmul.f32 %v381, %v829
    %v894 = vmul.f32 %v382, %v830
    %v895 = vmul.f32 %v383, %v831
    %v896 = vmul.f32 %v384, %v832
    %v897 = vmul.f32 %v385, %v833
    %v898 = vmul.f32 %v386, %v834
    %v899 = vmul.f32 %v387, %v835
    %v900 = vmul.f32 %v388, %v836
    %v901 = vmul.f32 %v389, %v837
    %v902 = vmul.f32 %v390, %v838
    %v903 = vmul.f32 %v391, %v839
    %v904 = vmul.f32 %v392, %v840
    %v905 = vmul.f32 %v393, %v841
    %v906 = vmul.f32 %v394, %v842
    %v907 = vmul.f32 %v395, %v843
    %v908 = vmul.f32 %v396, %v844
    %v909 = vmul.f32 %v397, %v845
    %v910 = vmul.f32 %v398, %v846
    %v911 = vmul.f32 %v399, %v847
    %v912 = vmul.f32 %v400, %v848
    %v913 = vmul.f32 %v401, %v849
    %v914 = vmul.f32 %v402, %v850
    %v915 = vmul.f32 %v403, %v851
    %v916 = vmul.f32 %v404, %v852
    %v917 = vmul.f32 %v405, %v853
    %v918 = vmul.f32 %v406, %v854
    %v919 = vmul.f32 %v407, %v855
    %v920 = vmul.f32 %v408, %v856
    %v921 = vmul.f32 %v409, %v857
    %v922 = vmul.f32 %v410, %v858
    %v923 = vmul.f32 %v411, %v859
    %v924 = vmul.f32 %v412, %v860
    %v925 = vmul.f32 %v413, %v861
    %v926 = vmul.f32 %v414, %v862
    %v927 = vmul.f32 %v415, %v863
    %v928 = vmul.f32 %v416, %v864
    %v929 = vmul.f32 %v417, %v865
    %v930 = vmul.f32 %v418, %v866
    %v931 = vmul.f32 %v419, %v867
    %v932 = vmul.f32 %v420, %v868
    %v933 = vmul.f32 %v421, %v869
    %v934 = vmul.f32 %v422, %v870
    %v935 = vmul.f32 %v423, %v871
    %v936 = vmul.f32 %v424, %v872
    %v937 = vmul.f32 %v425, %v873
    %v938 = vmul.f32 %v426, %v874
    %v939 = vmul.f32 %v427, %v875
    %v940 = vmul.f32 %v428, %v876
    %v941 = vmul.f32 %v429, %v877
    %v942 = vmul.f32 %v430, %v878
    %v943 = vpack.c.bf16 %v880, %v879
    %v944 = vpack.c.bf16 %v882, %v881
    %v945 = vpack.c.bf16 %v884, %v883
    %v946 = vpack.c.bf16 %v886, %v885
    %v947 = vpack.c.bf16 %v888, %v887
    %v948 = vpack.c.bf16 %v890, %v889
    %v949 = vpack.c.bf16 %v892, %v891
    %v950 = vpack.c.bf16 %v894, %v893
    %v951 = vpack.c.bf16 %v896, %v895
    %v952 = vpack.c.bf16 %v898, %v897
    %v953 = vpack.c.bf16 %v900, %v899
    %v954 = vpack.c.bf16 %v902, %v901
    %v955 = vpack.c.bf16 %v904, %v903
    %v956 = vpack.c.bf16 %v906, %v905
    %v957 = vpack.c.bf16 %v908, %v907
    %v958 = vpack.c.bf16 %v910, %v909
    %v959 = vpack.c.bf16 %v912, %v911
    %v960 = vpack.c.bf16 %v914, %v913
    %v961 = vpack.c.bf16 %v916, %v915
    %v962 = vpack.c.bf16 %v918, %v917
    %v963 = vpack.c.bf16 %v920, %v919
    %v964 = vpack.c.bf16 %v922, %v921
    %v965 = vpack.c.bf16 %v924, %v923
    %v966 = vpack.c.bf16 %v926, %v925
    %v967 = vpack.c.bf16 %v928, %v927
    %v968 = vpack.c.bf16 %v930, %v929
    %v969 = vpack.c.bf16 %v932, %v931
    %v970 = vpack.c.bf16 %v934, %v933
    %v971 = vpack.c.bf16 %v936, %v935
    %v972 = vpack.c.bf16 %v938, %v937
    %v973 = vpack.c.bf16 %v940, %v939
    %v974 = vpack.c.bf16 %v942, %v941
    %v975 = vld [vmem:[%s1] sm:$0xf]
    %v976 = vld [vmem:[%s1 + $0x4] sm:$0xf]
    %v977 = vld [vmem:[%s1 + $0x8] sm:$0xf]
    %v978 = vld [vmem:[%s1 + $0xc] sm:$0xf]
    %v979 = vpack.c.bf16 %v46, %v45
    %v980 = vpack.c.bf16 %v48, %v47
    %v981 = vpack.c.bf16 %v50, %v49
    %v982 = vpack.c.bf16 %v52, %v51
    %v983 = vpack.c.bf16 %v54, %v53
    %v984 = vpack.c.bf16 %v56, %v55
    %v985 = vpack.c.bf16 %v58, %v57
    %v986 = vpack.c.bf16 %v60, %v59
    %v987 = vpack.c.bf16 %v62, %v61
    %v988 = vpack.c.bf16 %v64, %v63
    %v989 = vpack.c.bf16 %v66, %v65
    %v990 = vpack.c.bf16 %v68, %v67
    %v991 = vpack.c.bf16 %v70, %v69
    %v992 = vpack.c.bf16 %v72, %v71
    %v993 = vpack.c.bf16 %v74, %v73
    %v994 = vpack.c.bf16 %v76, %v75
    %v995 = vpack.c.bf16 %v78, %v77
    %v996 = vpack.c.bf16 %v80, %v79
    %v997 = vpack.c.bf16 %v82, %v81
    %v998 = vpack.c.bf16 %v84, %v83
    %v999 = vpack.c.bf16 %v86, %v85
    %v1000 = vpack.c.bf16 %v88, %v87
    %v1001 = vpack.c.bf16 %v90, %v89
    %v1002 = vpack.c.bf16 %v92, %v91
    %v1003 = vpack.c.bf16 %v94, %v93
    %v1004 = vpack.c.bf16 %v96, %v95
    %v1005 = vpack.c.bf16 %v98, %v97
    %v1006 = vpack.c.bf16 %v100, %v99
    %v1007 = vpack.c.bf16 %v102, %v101
    %v1008 = vpack.c.bf16 %v104, %v103
    %v1009 = vpack.c.bf16 %v106, %v105
    %v1010 = vpack.c.bf16 %v108, %v107
    %v1011 = vld [vmem:[%s2] sm:$0xf]
    %v1012 = vld [vmem:[%s2 + $0x4] sm:$0xf]
    %v1013 = vld [vmem:[%s2 + $0x8] sm:$0xf]
    %v1014 = vld [vmem:[%s2 + $0xc] sm:$0xf]
    %v1019 = vunpack.c.l.b16 %v1011
    %v1020 = vunpack.c.l.b16 %v1012
    %v1021 = vunpack.c.l.b16 %v1013
    %v1022 = vunpack.c.l.b16 %v1014
    %v1023 = vpack.c.b16 %v1020, %v1019
    %v1024 = vpack.c.b16 %v1022, %v1021
    %v1028 = vsel %vm109, %v979, 0
    %v1031 = vsel %vm109, %v980, 0
    %v1034 = vsel %vm109, %v981, 0
    %v1037 = vsel %vm109, %v982, 0
    %v1040 = vsel %vm109, %v983, 0
    %v1043 = vsel %vm109, %v984, 0
    %v1046 = vsel %vm109, %v985, 0
    %v1049 = vsel %vm109, %v986, 0
    %v1052 = vsel %vm109, %v987, 0
    %v1055 = vsel %vm109, %v988, 0
    %v1058 = vsel %vm109, %v989, 0
    %v1061 = vsel %vm109, %v990, 0
    %v1064 = vsel %vm109, %v991, 0
    %v1067 = vsel %vm109, %v992, 0
    %v1070 = vsel %vm109, %v993, 0
    %v1073 = vsel %vm109, %v994, 0
    %v1076 = vsel %vm109, %v995, 0
    %v1079 = vsel %vm109, %v996, 0
    %v1082 = vsel %vm109, %v997, 0
    %v1085 = vsel %vm109, %v998, 0
    %v1088 = vsel %vm109, %v999, 0
    %v1091 = vsel %vm109, %v1000, 0
    %v1094 = vsel %vm109, %v1001, 0
    %v1097 = vsel %vm109, %v1002, 0
    %v1100 = vsel %vm109, %v1003, 0
    %v1103 = vsel %vm109, %v1004, 0
    %v1106 = vsel %vm109, %v1005, 0
    %v1109 = vsel %vm109, %v1006, 0
    %v1112 = vsel %vm109, %v1007, 0
    %v1115 = vsel %vm109, %v1008, 0
    %v1118 = vsel %vm109, %v1009, 0
    %v1121 = vsel %vm109, %v1010, 0
    %1123 = vmatprep.subr.bf16.mxu0 0
    %1124 = vmatpush1.bf16.msra.mxu0 %v1023
    %1125 = vmatprep.subr.bf16.mxu0 0
    %1126 = vmatpush1.bf16.msra.mxu0 %v1024
    %1127 = vmatprep.subr.bf16.mxu0 0
    %1128 = vmatpush1.bf16.msra.mxu0 0
    %1129 = vmatprep.subr.bf16.mxu0 0
    %1130 = vmatpush1.bf16.msra.mxu0 0
    %1131 = vmatprep.subr.bf16.mxu0 0
    %1132 = vmatpush1.bf16.msra.mxu0 0
    %1133 = vmatprep.subr.bf16.mxu0 0
    %1134 = vmatpush1.bf16.msra.mxu0 0
    %1135 = vmatprep.subr.bf16.mxu0 0
    %1136 = vmatpush1.bf16.msra.mxu0 0
    %1137 = vmatprep.subr.bf16.mxu0 0
    %1138 = vmatpush1.bf16.msra.mxu0 0
    %1139 = vmatprep.subr.bf16.mxu0 0
    %1140 = vmatpush1.bf16.msra.mxu0 0
    %1141 = vmatprep.subr.bf16.mxu0 0
    %1142 = vmatpush1.bf16.msra.mxu0 0
    %1143 = vmatprep.subr.bf16.mxu0 0
    %1144 = vmatpush1.bf16.msra.mxu0 0
    %1145 = vmatprep.subr.bf16.mxu0 0
    %1146 = vmatpush1.bf16.msra.mxu0 0
    %1147 = vmatprep.subr.bf16.mxu0 0
    %1148 = vmatpush1.bf16.msra.mxu0 0
    %1149 = vmatprep.subr.bf16.mxu0 0
    %1150 = vmatpush1.bf16.msra.mxu0 0
    %1151 = vmatprep.subr.bf16.mxu0 0
    %1152 = vmatpush1.bf16.msra.mxu0 0
    %1153 = vmatprep.subr.bf16.mxu0 0
    %1154 = vmatpush1.bf16.msra.mxu0 0
    %1155 = vmatprep.mubr.bf16.mxu0 0
    %1156 = vmatmul.mubr.bf16.gmra.mrb[0].mxu0 %v1028
    %v1157 = vpop.f32.mrb[0].mxu0
    %v1158 = vadd.f32 0.0, %v1157
    %v1159 = vpop.f32.mrb[0].mxu0
    %v1160 = vpop.f32.mrb[0].mxu0
    %v1161 = vadd.f32 0.0, %v1160
    %v1162 = vpop.f32.mrb[0].mxu0
    %1163 = vmatprep.mubr.bf16.mxu0 0
    %1164 = vmatmul.mubr.bf16.gmra.mrb[0].mxu0 %v1031
    %v1165 = vpop.f32.mrb[0].mxu0
    %v1166 = vadd.f32 0.0, %v1165
    %v1167 = vpop.f32.mrb[0].mxu0
    %v1168 = vpop.f32.mrb[0].mxu0
    %v1169 = vadd.f32 0.0, %v1168
    %v1170 = vpop.f32.mrb[0].mxu0
    %1171 = vmatprep.mubr.bf16.mxu0 0
    %1172 = vmatmul.mubr.bf16.gmra.mrb[0].mxu0 %v1034
    %v1173 = vpop.f32.mrb[0].mxu0
    %v1174 = vadd.f32 0.0, %v1173
    %v1175 = vpop.f32.mrb[0].mxu0
    %v1176 = vpop.f32.mrb[0].mxu0
    %v1177 = vadd.f32 0.0, %v1176
    %v1178 = vpop.f32.mrb[0].mxu0
    %1179 = vmatprep.mubr.bf16.mxu0 0
    %1180 = vmatmul.mubr.bf16.gmra.mrb[0].mxu0 %v1037
    %v1181 = vpop.f32.mrb[0].mxu0
    %v1182 = vadd.f32 0.0, %v1181
    %v1183 = vpop.f32.mrb[0].mxu0
    %v1184 = vpop.f32.mrb[0].mxu0
    %v1185 = vadd.f32 0.0, %v1184
    %v1186 = vpop.f32.mrb[0].mxu0
    %1187 = vmatprep.mubr.bf16.mxu0 0
    %1188 = vmatmul.mubr.bf16.gmra.mrb[0].mxu0 %v1040
    %v1189 = vpop.f32.mrb[0].mxu0
    %v1190 = vadd.f32 0.0, %v1189
    %v1191 = vpop.f32.mrb[0].mxu0
    %v1192 = vpop.f32.mrb[0].mxu0
    %v1193 = vadd.f32 0.0, %v1192
    %v1194 = vpop.f32.mrb[0].mxu0
    %1195 = vmatprep.mubr.bf16.mxu0 0
    %1196 = vmatmul.mubr.bf16.gmra.mrb[0].mxu0 %v1043
    %v1197 = vpop.f32.mrb[0].mxu0
    %v1198 = vadd.f32 0.0, %v1197
    %v1199 = vpop.f32.mrb[0].mxu0
    %v1200 = vpop.f32.mrb[0].mxu0
    %v1201 = vadd.f32 0.0, %v1200
    %v1202 = vpop.f32.mrb[0].mxu0
    %1203 = vmatprep.mubr.bf16.mxu0 0
    %1204 = vmatmul.mubr.bf16.gmra.mrb[0].mxu0 %v1046
    %v1205 = vpop.f32.mrb[0].mxu0
    %v1206 = vadd.f32 0.0, %v1205
    %v1207 = vpop.f32.mrb[0].mxu0
    %v1208 = vpop.f32.mrb[0].mxu0
    %v1209 = vadd.f32 0.0, %v1208
    %v1210 = vpop.f32.mrb[0].mxu0
    %1211 = vmatprep.mubr.bf16.mxu0 0
    %1212 = vmatmul.mubr.bf16.gmra.mrb[0].mxu0 %v1049
    %v1213 = vpop.f32.mrb[0].mxu0
    %v1214 = vadd.f32 0.0, %v1213
    %v1215 = vpop.f32.mrb[0].mxu0
    %v1216 = vpop.f32.mrb[0].mxu0
    %v1217 = vadd.f32 0.0, %v1216
    %v1218 = vpop.f32.mrb[0].mxu0
    %1219 = vmatprep.mubr.bf16.mxu0 0
    %1220 = vmatmul.mubr.bf16.gmra.mrb[0].mxu0 %v1052
    %v1221 = vpop.f32.mrb[0].mxu0
    %v1222 = vadd.f32 0.0, %v1221
    %v1223 = vpop.f32.mrb[0].mxu0
    %v1224 = vpop.f32.mrb[0].mxu0
    %v1225 = vadd.f32 0.0, %v1224
    %v1226 = vpop.f32.mrb[0].mxu0
    %1227 = vmatprep.mubr.bf16.mxu0 0
    %1228 = vmatmul.mubr.bf16.gmra.mrb[0].mxu0 %v1055
    %v1229 = vpop.f32.mrb[0].mxu0
    %v1230 = vadd.f32 0.0, %v1229
    %v1231 = vpop.f32.mrb[0].mxu0
    %v1232 = vpop.f32.mrb[0].mxu0
    %v1233 = vadd.f32 0.0, %v1232
    %v1234 = vpop.f32.mrb[0].mxu0
    %1235 = vmatprep.mubr.bf16.mxu0 0
    %1236 = vmatmul.mubr.bf16.gmra.mrb[0].mxu0 %v1058
    %v1237 = vpop.f32.mrb[0].mxu0
    %v1238 = vadd.f32 0.0, %v1237
    %v1239 = vpop.f32.mrb[0].mxu0
    %v1240 = vpop.f32.mrb[0].mxu0
    %v1241 = vadd.f32 0.0, %v1240
    %v1242 = vpop.f32.mrb[0].mxu0
    %1243 = vmatprep.mubr.bf16.mxu0 0
    %1244 = vmatmul.mubr.bf16.gmra.mrb[0].mxu0 %v1061
    %v1245 = vpop.f32.mrb[0].mxu0
    %v1246 = vadd.f32 0.0, %v1245
    %v1247 = vpop.f32.mrb[0].mxu0
    %v1248 = vpop.f32.mrb[0].mxu0
    %v1249 = vadd.f32 0.0, %v1248
    %v1250 = vpop.f32.mrb[0].mxu0
    %1251 = vmatprep.mubr.bf16.mxu0 0
    %1252 = vmatmul.mubr.bf16.gmra.mrb[0].mxu0 %v1064
    %v1253 = vpop.f32.mrb[0].mxu0
    %v1254 = vadd.f32 0.0, %v1253
    %v1255 = vpop.f32.mrb[0].mxu0
    %v1256 = vpop.f32.mrb[0].mxu0
    %v1257 = vadd.f32 0.0, %v1256
    %v1258 = vpop.f32.mrb[0].mxu0
    %1259 = vmatprep.mubr.bf16.mxu0 0
    %1260 = vmatmul.mubr.bf16.gmra.mrb[0].mxu0 %v1067
    %v1261 = vpop.f32.mrb[0].mxu0
    %v1262 = vadd.f32 0.0, %v1261
    %v1263 = vpop.f32.mrb[0].mxu0
    %v1264 = vpop.f32.mrb[0].mxu0
    %v1265 = vadd.f32 0.0, %v1264
    %v1266 = vpop.f32.mrb[0].mxu0
    %1267 = vmatprep.mubr.bf16.mxu0 0
    %1268 = vmatmul.mubr.bf16.gmra.mrb[0].mxu0 %v1070
    %v1269 = vpop.f32.mrb[0].mxu0
    %v1270 = vadd.f32 0.0, %v1269
    %v1271 = vpop.f32.mrb[0].mxu0
    %v1272 = vpop.f32.mrb[0].mxu0
    %v1273 = vadd.f32 0.0, %v1272
    %v1274 = vpop.f32.mrb[0].mxu0
    %1275 = vmatprep.mubr.bf16.mxu0 0
    %1276 = vmatmul.mubr.bf16.gmra.mrb[0].mxu0 %v1073
    %v1277 = vpop.f32.mrb[0].mxu0
    %v1278 = vadd.f32 0.0, %v1277
    %v1279 = vpop.f32.mrb[0].mxu0
    %v1280 = vpop.f32.mrb[0].mxu0
    %v1281 = vadd.f32 0.0, %v1280
    %v1282 = vpop.f32.mrb[0].mxu0
    %1283 = vmatprep.mubr.bf16.mxu0 0
    %1284 = vmatmul.mubr.bf16.gmra.mrb[0].mxu0 %v1076
    %v1285 = vpop.f32.mrb[0].mxu0
    %v1286 = vadd.f32 0.0, %v1285
    %v1287 = vpop.f32.mrb[0].mxu0
    %v1288 = vpop.f32.mrb[0].mxu0
    %v1289 = vadd.f32 0.0, %v1288
    %v1290 = vpop.f32.mrb[0].mxu0
    %1291 = vmatprep.mubr.bf16.mxu0 0
    %1292 = vmatmul.mubr.bf16.gmra.mrb[0].mxu0 %v1079
    %v1293 = vpop.f32.mrb[0].mxu0
    %v1294 = vadd.f32 0.0, %v1293
    %v1295 = vpop.f32.mrb[0].mxu0
    %v1296 = vpop.f32.mrb[0].mxu0
    %v1297 = vadd.f32 0.0, %v1296
    %v1298 = vpop.f32.mrb[0].mxu0
    %1299 = vmatprep.mubr.bf16.mxu0 0
    %1300 = vmatmul.mubr.bf16.gmra.mrb[0].mxu0 %v1082
    %v1301 = vpop.f32.mrb[0].mxu0
    %v1302 = vadd.f32 0.0, %v1301
    %v1303 = vpop.f32.mrb[0].mxu0
    %v1304 = vpop.f32.mrb[0].mxu0
    %v1305 = vadd.f32 0.0, %v1304
    %v1306 = vpop.f32.mrb[0].mxu0
    %1307 = vmatprep.mubr.bf16.mxu0 0
    %1308 = vmatmul.mubr.bf16.gmra.mrb[0].mxu0 %v1085
    %v1309 = vpop.f32.mrb[0].mxu0
    %v1310 = vadd.f32 0.0, %v1309
    %v1311 = vpop.f32.mrb[0].mxu0
    %v1312 = vpop.f32.mrb[0].mxu0
    %v1313 = vadd.f32 0.0, %v1312
    %v1314 = vpop.f32.mrb[0].mxu0
    %1315 = vmatprep.mubr.bf16.mxu0 0
    %1316 = vmatmul.mubr.bf16.gmra.mrb[0].mxu0 %v1088
    %v1317 = vpop.f32.mrb[0].mxu0
    %v1318 = vadd.f32 0.0, %v1317
    %v1319 = vpop.f32.mrb[0].mxu0
    %v1320 = vpop.f32.mrb[0].mxu0
    %v1321 = vadd.f32 0.0, %v1320
    %v1322 = vpop.f32.mrb[0].mxu0
    %1323 = vmatprep.mubr.bf16.mxu0 0
    %1324 = vmatmul.mubr.bf16.gmra.mrb[0].mxu0 %v1091
    %v1325 = vpop.f32.mrb[0].mxu0
    %v1326 = vadd.f32 0.0, %v1325
    %v1327 = vpop.f32.mrb[0].mxu0
    %v1328 = vpop.f32.mrb[0].mxu0
    %v1329 = vadd.f32 0.0, %v1328
    %v1330 = vpop.f32.mrb[0].mxu0
    %1331 = vmatprep.mubr.bf16.mxu0 0
    %1332 = vmatmul.mubr.bf16.gmra.mrb[0].mxu0 %v1094
    %v1333 = vpop.f32.mrb[0].mxu0
    %v1334 = vadd.f32 0.0, %v1333
    %v1335 = vpop.f32.mrb[0].mxu0
    %v1336 = vpop.f32.mrb[0].mxu0
    %v1337 = vadd.f32 0.0, %v1336
    %v1338 = vpop.f32.mrb[0].mxu0
    %1339 = vmatprep.mubr.bf16.mxu0 0
    %1340 = vmatmul.mubr.bf16.gmra.mrb[0].mxu0 %v1097
    %v1341 = vpop.f32.mrb[0].mxu0
    %v1342 = vadd.f32 0.0, %v1341
    %v1343 = vpop.f32.mrb[0].mxu0
    %v1344 = vpop.f32.mrb[0].mxu0
    %v1345 = vadd.f32 0.0, %v1344
    %v1346 = vpop.f32.mrb[0].mxu0
    %1347 = vmatprep.mubr.bf16.mxu0 0
    %1348 = vmatmul.mubr.bf16.gmra.mrb[0].mxu0 %v1100
    %v1349 = vpop.f32.mrb[0].mxu0
    %v1350 = vadd.f32 0.0, %v1349
    %v1351 = vpop.f32.mrb[0].mxu0
    %v1352 = vpop.f32.mrb[0].mxu0
    %v1353 = vadd.f32 0.0, %v1352
    %v1354 = vpop.f32.mrb[0].mxu0
    %1355 = vmatprep.mubr.bf16.mxu0 0
    %1356 = vmatmul.mubr.bf16.gmra.mrb[0].mxu0 %v1103
    %v1357 = vpop.f32.mrb[0].mxu0
    %v1358 = vadd.f32 0.0, %v1357
    %v1359 = vpop.f32.mrb[0].mxu0
    %v1360 = vpop.f32.mrb[0].mxu0
    %v1361 = vadd.f32 0.0, %v1360
    %v1362 = vpop.f32.mrb[0].mxu0
    %1363 = vmatprep.mubr.bf16.mxu0 0
    %1364 = vmatmul.mubr.bf16.gmra.mrb[0].mxu0 %v1106
    %v1365 = vpop.f32.mrb[0].mxu0
    %v1366 = vadd.f32 0.0, %v1365
    %v1367 = vpop.f32.mrb[0].mxu0
    %v1368 = vpop.f32.mrb[0].mxu0
    %v1369 = vadd.f32 0.0, %v1368
    %v1370 = vpop.f32.mrb[0].mxu0
    %1371 = vmatprep.mubr.bf16.mxu0 0
    %1372 = vmatmul.mubr.bf16.gmra.mrb[0].mxu0 %v1109
    %v1373 = vpop.f32.mrb[0].mxu0
    %v1374 = vadd.f32 0.0, %v1373
    %v1375 = vpop.f32.mrb[0].mxu0
    %v1376 = vpop.f32.mrb[0].mxu0
    %v1377 = vadd.f32 0.0, %v1376
    %v1378 = vpop.f32.mrb[0].mxu0
    %1379 = vmatprep.mubr.bf16.mxu0 0
    %1380 = vmatmul.mubr.bf16.gmra.mrb[0].mxu0 %v1112
    %v1381 = vpop.f32.mrb[0].mxu0
    %v1382 = vadd.f32 0.0, %v1381
    %v1383 = vpop.f32.mrb[0].mxu0
    %v1384 = vpop.f32.mrb[0].mxu0
    %v1385 = vadd.f32 0.0, %v1384
    %v1386 = vpop.f32.mrb[0].mxu0
    %1387 = vmatprep.mubr.bf16.mxu0 0
    %1388 = vmatmul.mubr.bf16.gmra.mrb[0].mxu0 %v1115
    %v1389 = vpop.f32.mrb[0].mxu0
    %v1390 = vadd.f32 0.0, %v1389
    %v1391 = vpop.f32.mrb[0].mxu0
    %v1392 = vpop.f32.mrb[0].mxu0
    %v1393 = vadd.f32 0.0, %v1392
    %v1394 = vpop.f32.mrb[0].mxu0
    %1395 = vmatprep.mubr.bf16.mxu0 0
    %1396 = vmatmul.mubr.bf16.gmra.mrb[0].mxu0 %v1118
    %v1397 = vpop.f32.mrb[0].mxu0
    %v1398 = vadd.f32 0.0, %v1397
    %v1399 = vpop.f32.mrb[0].mxu0
    %v1400 = vpop.f32.mrb[0].mxu0
    %v1401 = vadd.f32 0.0, %v1400
    %v1402 = vpop.f32.mrb[0].mxu0
    %1403 = vmatprep.mubr.bf16.mxu0 0
    %1404 = vmatmul.mubr.bf16.gmra.mrb[0].mxu0 %v1121
    %v1405 = vpop.f32.mrb[0].mxu0
    %v1406 = vadd.f32 0.0, %v1405
    %v1407 = vpop.f32.mrb[0].mxu0
    %v1408 = vpop.f32.mrb[0].mxu0
    %v1409 = vadd.f32 0.0, %v1408
    %v1410 = vpop.f32.mrb[0].mxu0
    %1411 = vdwg.mxu0
    %v1416 = vunpack.c.l.b16 %v975
    %v1417 = vunpack.c.l.b16 %v976
    %v1418 = vunpack.c.l.b16 %v977
    %v1419 = vunpack.c.l.b16 %v978
    %v1420 = vpack.c.b16 %v1417, %v1416
    %v1421 = vpack.c.b16 %v1419, %v1418
    %v1425 = vsel %vm109, %v943, 0
    %v1428 = vsel %vm109, %v944, 0
    %v1431 = vsel %vm109, %v945, 0
    %v1434 = vsel %vm109, %v946, 0
    %v1437 = vsel %vm109, %v947, 0
    %v1440 = vsel %vm109, %v948, 0
    %v1443 = vsel %vm109, %v949, 0
    %v1446 = vsel %vm109, %v950, 0
    %v1449 = vsel %vm109, %v951, 0
    %v1452 = vsel %vm109, %v952, 0
    %v1455 = vsel %vm109, %v953, 0
    %v1458 = vsel %vm109, %v954, 0
    %v1461 = vsel %vm109, %v955, 0
    %v1464 = vsel %vm109, %v956, 0
    %v1467 = vsel %vm109, %v957, 0
    %v1470 = vsel %vm109, %v958, 0
    %v1473 = vsel %vm109, %v959, 0
    %v1476 = vsel %vm109, %v960, 0
    %v1479 = vsel %vm109, %v961, 0
    %v1482 = vsel %vm109, %v962, 0
    %v1485 = vsel %vm109, %v963, 0
    %v1488 = vsel %vm109, %v964, 0
    %v1491 = vsel %vm109, %v965, 0
    %v1494 = vsel %vm109, %v966, 0
    %v1497 = vsel %vm109, %v967, 0
    %v1500 = vsel %vm109, %v968, 0
    %v1503 = vsel %vm109, %v969, 0
    %v1506 = vsel %vm109, %v970, 0
    %v1509 = vsel %vm109, %v971, 0
    %v1512 = vsel %vm109, %v972, 0
    %v1515 = vsel %vm109, %v973, 0
    %v1518 = vsel %vm109, %v974, 0
    %1520 = vmatprep.subr.bf16.mxu0 0
    %1521 = vmatpush1.bf16.msra.mxu0 %v1420
    %1522 = vmatprep.subr.bf16.mxu0 0
    %1523 = vmatpush1.bf16.msra.mxu0 %v1421
    %1524 = vmatprep.subr.bf16.mxu0 0
    %1525 = vmatpush1.bf16.msra.mxu0 0
    %1526 = vmatprep.subr.bf16.mxu0 0
    %1527 = vmatpush1.bf16.msra.mxu0 0
    %1528 = vmatprep.subr.bf16.mxu0 0
    %1529 = vmatpush1.bf16.msra.mxu0 0
    %1530 = vmatprep.subr.bf16.mxu0 0
    %1531 = vmatpush1.bf16.msra.mxu0 0
    %1532 = vmatprep.subr.bf16.mxu0 0
    %1533 = vmatpush1.bf16.msra.mxu0 0
    %1534 = vmatprep.subr.bf16.mxu0 0
    %1535 = vmatpush1.bf16.msra.mxu0 0
    %1536 = vmatprep.subr.bf16.mxu0 0
    %1537 = vmatpush1.bf16.msra.mxu0 0
    %1538 = vmatprep.subr.bf16.mxu0 0
    %1539 = vmatpush1.bf16.msra.mxu0 0
    %1540 = vmatprep.subr.bf16.mxu0 0
    %1541 = vmatpush1.bf16.msra.mxu0 0
    %1542 = vmatprep.subr.bf16.mxu0 0
    %1543 = vmatpush1.bf16.msra.mxu0 0
    %1544 = vmatprep.subr.bf16.mxu0 0
    %1545 = vmatpush1.bf16.msra.mxu0 0
    %1546 = vmatprep.subr.bf16.mxu0 0
    %1547 = vmatpush1.bf16.msra.mxu0 0
    %1548 = vmatprep.subr.bf16.mxu0 0
    %1549 = vmatpush1.bf16.msra.mxu0 0
    %1550 = vmatprep.subr.bf16.mxu0 0
    %1551 = vmatpush1.bf16.msra.mxu0 0
    %1552 = vmatprep.mubr.bf16.mxu0 0
    %1553 = vmatmul.mubr.bf16.gmra.mrb[0].mxu0 %v1425
    %v1554 = vpop.f32.mrb[0].mxu0
    %v1555 = vadd.f32 %v1158, %v1554
    %v1556 = vpop.f32.mrb[0].mxu0
    %v1557 = vpop.f32.mrb[0].mxu0
    %v1558 = vadd.f32 %v1161, %v1557
    %v1559 = vpop.f32.mrb[0].mxu0
    %1560 = vmatprep.mubr.bf16.mxu0 0
    %1561 = vmatmul.mubr.bf16.gmra.mrb[0].mxu0 %v1428
    %v1562 = vpop.f32.mrb[0].mxu0
    %v1563 = vadd.f32 %v1166, %v1562
    %v1564 = vpop.f32.mrb[0].mxu0
    %v1565 = vpop.f32.mrb[0].mxu0
    %v1566 = vadd.f32 %v1169, %v1565
    %v1567 = vpop.f32.mrb[0].mxu0
    %1568 = vmatprep.mubr.bf16.mxu0 0
    %1569 = vmatmul.mubr.bf16.gmra.mrb[0].mxu0 %v1431
    %v1570 = vpop.f32.mrb[0].mxu0
    %v1571 = vadd.f32 %v1174, %v1570
    %v1572 = vpop.f32.mrb[0].mxu0
    %v1573 = vpop.f32.mrb[0].mxu0
    %v1574 = vadd.f32 %v1177, %v1573
    %v1575 = vpop.f32.mrb[0].mxu0
    %1576 = vmatprep.mubr.bf16.mxu0 0
    %1577 = vmatmul.mubr.bf16.gmra.mrb[0].mxu0 %v1434
    %v1578 = vpop.f32.mrb[0].mxu0
    %v1579 = vadd.f32 %v1182, %v1578
    %v1580 = vpop.f32.mrb[0].mxu0
    %v1581 = vpop.f32.mrb[0].mxu0
    %v1582 = vadd.f32 %v1185, %v1581
    %v1583 = vpop.f32.mrb[0].mxu0
    %1584 = vmatprep.mubr.bf16.mxu0 0
    %1585 = vmatmul.mubr.bf16.gmra.mrb[0].mxu0 %v1437
    %v1586 = vpop.f32.mrb[0].mxu0
    %v1587 = vadd.f32 %v1190, %v1586
    %v1588 = vpop.f32.mrb[0].mxu0
    %v1589 = vpop.f32.mrb[0].mxu0
    %v1590 = vadd.f32 %v1193, %v1589
    %v1591 = vpop.f32.mrb[0].mxu0
    %1592 = vmatprep.mubr.bf16.mxu0 0
    %1593 = vmatmul.mubr.bf16.gmra.mrb[0].mxu0 %v1440
    %v1594 = vpop.f32.mrb[0].mxu0
    %v1595 = vadd.f32 %v1198, %v1594
    %v1596 = vpop.f32.mrb[0].mxu0
    %v1597 = vpop.f32.mrb[0].mxu0
    %v1598 = vadd.f32 %v1201, %v1597
    %v1599 = vpop.f32.mrb[0].mxu0
    %1600 = vmatprep.mubr.bf16.mxu0 0
    %1601 = vmatmul.mubr.bf16.gmra.mrb[0].mxu0 %v1443
    %v1602 = vpop.f32.mrb[0].mxu0
    %v1603 = vadd.f32 %v1206, %v1602
    %v1604 = vpop.f32.mrb[0].mxu0
    %v1605 = vpop.f32.mrb[0].mxu0
    %v1606 = vadd.f32 %v1209, %v1605
    %v1607 = vpop.f32.mrb[0].mxu0
    %1608 = vmatprep.mubr.bf16.mxu0 0
    %1609 = vmatmul.mubr.bf16.gmra.mrb[0].mxu0 %v1446
    %v1610 = vpop.f32.mrb[0].mxu0
    %v1611 = vadd.f32 %v1214, %v1610
    %v1612 = vpop.f32.mrb[0].mxu0
    %v1613 = vpop.f32.mrb[0].mxu0
    %v1614 = vadd.f32 %v1217, %v1613
    %v1615 = vpop.f32.mrb[0].mxu0
    %1616 = vmatprep.mubr.bf16.mxu0 0
    %1617 = vmatmul.mubr.bf16.gmra.mrb[0].mxu0 %v1449
    %v1618 = vpop.f32.mrb[0].mxu0
    %v1619 = vadd.f32 %v1222, %v1618
    %v1620 = vpop.f32.mrb[0].mxu0
    %v1621 = vpop.f32.mrb[0].mxu0
    %v1622 = vadd.f32 %v1225, %v1621
    %v1623 = vpop.f32.mrb[0].mxu0
    %1624 = vmatprep.mubr.bf16.mxu0 0
    %1625 = vmatmul.mubr.bf16.gmra.mrb[0].mxu0 %v1452
    %v1626 = vpop.f32.mrb[0].mxu0
    %v1627 = vadd.f32 %v1230, %v1626
    %v1628 = vpop.f32.mrb[0].mxu0
    %v1629 = vpop.f32.mrb[0].mxu0
    %v1630 = vadd.f32 %v1233, %v1629
    %v1631 = vpop.f32.mrb[0].mxu0
    %1632 = vmatprep.mubr.bf16.mxu0 0
    %1633 = vmatmul.mubr.bf16.gmra.mrb[0].mxu0 %v1455
    %v1634 = vpop.f32.mrb[0].mxu0
    %v1635 = vadd.f32 %v1238, %v1634
    %v1636 = vpop.f32.mrb[0].mxu0
    %v1637 = vpop.f32.mrb[0].mxu0
    %v1638 = vadd.f32 %v1241, %v1637
    %v1639 = vpop.f32.mrb[0].mxu0
    %1640 = vmatprep.mubr.bf16.mxu0 0
    %1641 = vmatmul.mubr.bf16.gmra.mrb[0].mxu0 %v1458
    %v1642 = vpop.f32.mrb[0].mxu0
    %v1643 = vadd.f32 %v1246, %v1642
    %v1644 = vpop.f32.mrb[0].mxu0
    %v1645 = vpop.f32.mrb[0].mxu0
    %v1646 = vadd.f32 %v1249, %v1645
    %v1647 = vpop.f32.mrb[0].mxu0
    %1648 = vmatprep.mubr.bf16.mxu0 0
    %1649 = vmatmul.mubr.bf16.gmra.mrb[0].mxu0 %v1461
    %v1650 = vpop.f32.mrb[0].mxu0
    %v1651 = vadd.f32 %v1254, %v1650
    %v1652 = vpop.f32.mrb[0].mxu0
    %v1653 = vpop.f32.mrb[0].mxu0
    %v1654 = vadd.f32 %v1257, %v1653
    %v1655 = vpop.f32.mrb[0].mxu0
    %1656 = vmatprep.mubr.bf16.mxu0 0
    %1657 = vmatmul.mubr.bf16.gmra.mrb[0].mxu0 %v1464
    %v1658 = vpop.f32.mrb[0].mxu0
    %v1659 = vadd.f32 %v1262, %v1658
    %v1660 = vpop.f32.mrb[0].mxu0
    %v1661 = vpop.f32.mrb[0].mxu0
    %v1662 = vadd.f32 %v1265, %v1661
    %v1663 = vpop.f32.mrb[0].mxu0
    %1664 = vmatprep.mubr.bf16.mxu0 0
    %1665 = vmatmul.mubr.bf16.gmra.mrb[0].mxu0 %v1467
    %v1666 = vpop.f32.mrb[0].mxu0
    %v1667 = vadd.f32 %v1270, %v1666
    %v1668 = vpop.f32.mrb[0].mxu0
    %v1669 = vpop.f32.mrb[0].mxu0
    %v1670 = vadd.f32 %v1273, %v1669
    %v1671 = vpop.f32.mrb[0].mxu0
    %1672 = vmatprep.mubr.bf16.mxu0 0
    %1673 = vmatmul.mubr.bf16.gmra.mrb[0].mxu0 %v1470
    %v1674 = vpop.f32.mrb[0].mxu0
    %v1675 = vadd.f32 %v1278, %v1674
    %v1676 = vpop.f32.mrb[0].mxu0
    %v1677 = vpop.f32.mrb[0].mxu0
    %v1678 = vadd.f32 %v1281, %v1677
    %v1679 = vpop.f32.mrb[0].mxu0
    %1680 = vmatprep.mubr.bf16.mxu0 0
    %1681 = vmatmul.mubr.bf16.gmra.mrb[0].mxu0 %v1473
    %v1682 = vpop.f32.mrb[0].mxu0
    %v1683 = vadd.f32 %v1286, %v1682
    %v1684 = vpop.f32.mrb[0].mxu0
    %v1685 = vpop.f32.mrb[0].mxu0
    %v1686 = vadd.f32 %v1289, %v1685
    %v1687 = vpop.f32.mrb[0].mxu0
    %1688 = vmatprep.mubr.bf16.mxu0 0
    %1689 = vmatmul.mubr.bf16.gmra.mrb[0].mxu0 %v1476
    %v1690 = vpop.f32.mrb[0].mxu0
    %v1691 = vadd.f32 %v1294, %v1690
    %v1692 = vpop.f32.mrb[0].mxu0
    %v1693 = vpop.f32.mrb[0].mxu0
    %v1694 = vadd.f32 %v1297, %v1693
    %v1695 = vpop.f32.mrb[0].mxu0
    %1696 = vmatprep.mubr.bf16.mxu0 0
    %1697 = vmatmul.mubr.bf16.gmra.mrb[0].mxu0 %v1479
    %v1698 = vpop.f32.mrb[0].mxu0
    %v1699 = vadd.f32 %v1302, %v1698
    %v1700 = vpop.f32.mrb[0].mxu0
    %v1701 = vpop.f32.mrb[0].mxu0
    %v1702 = vadd.f32 %v1305, %v1701
    %v1703 = vpop.f32.mrb[0].mxu0
    %1704 = vmatprep.mubr.bf16.mxu0 0
    %1705 = vmatmul.mubr.bf16.gmra.mrb[0].mxu0 %v1482
    %v1706 = vpop.f32.mrb[0].mxu0
    %v1707 = vadd.f32 %v1310, %v1706
    %v1708 = vpop.f32.mrb[0].mxu0
    %v1709 = vpop.f32.mrb[0].mxu0
    %v1710 = vadd.f32 %v1313, %v1709
    %v1711 = vpop.f32.mrb[0].mxu0
    %1712 = vmatprep.mubr.bf16.mxu0 0
    %1713 = vmatmul.mubr.bf16.gmra.mrb[0].mxu0 %v1485
    %v1714 = vpop.f32.mrb[0].mxu0
    %v1715 = vadd.f32 %v1318, %v1714
    %v1716 = vpop.f32.mrb[0].mxu0
    %v1717 = vpop.f32.mrb[0].mxu0
    %v1718 = vadd.f32 %v1321, %v1717
    %v1719 = vpop.f32.mrb[0].mxu0
    %1720 = vmatprep.mubr.bf16.mxu0 0
    %1721 = vmatmul.mubr.bf16.gmra.mrb[0].mxu0 %v1488
    %v1722 = vpop.f32.mrb[0].mxu0
    %v1723 = vadd.f32 %v1326, %v1722
    %v1724 = vpop.f32.mrb[0].mxu0
    %v1725 = vpop.f32.mrb[0].mxu0
    %v1726 = vadd.f32 %v1329, %v1725
    %v1727 = vpop.f32.mrb[0].mxu0
    %1728 = vmatprep.mubr.bf16.mxu0 0
    %1729 = vmatmul.mubr.bf16.gmra.mrb[0].mxu0 %v1491
    %v1730 = vpop.f32.mrb[0].mxu0
    %v1731 = vadd.f32 %v1334, %v1730
    %v1732 = vpop.f32.mrb[0].mxu0
    %v1733 = vpop.f32.mrb[0].mxu0
    %v1734 = vadd.f32 %v1337, %v1733
    %v1735 = vpop.f32.mrb[0].mxu0
    %1736 = vmatprep.mubr.bf16.mxu0 0
    %1737 = vmatmul.mubr.bf16.gmra.mrb[0].mxu0 %v1494
    %v1738 = vpop.f32.mrb[0].mxu0
    %v1739 = vadd.f32 %v1342, %v1738
    %v1740 = vpop.f32.mrb[0].mxu0
    %v1741 = vpop.f32.mrb[0].mxu0
    %v1742 = vadd.f32 %v1345, %v1741
    %v1743 = vpop.f32.mrb[0].mxu0
    %1744 = vmatprep.mubr.bf16.mxu0 0
    %1745 = vmatmul.mubr.bf16.gmra.mrb[0].mxu0 %v1497
    %v1746 = vpop.f32.mrb[0].mxu0
    %v1747 = vadd.f32 %v1350, %v1746
    %v1748 = vpop.f32.mrb[0].mxu0
    %v1749 = vpop.f32.mrb[0].mxu0
    %v1750 = vadd.f32 %v1353, %v1749
    %v1751 = vpop.f32.mrb[0].mxu0
    %1752 = vmatprep.mubr.bf16.mxu0 0
    %1753 = vmatmul.mubr.bf16.gmra.mrb[0].mxu0 %v1500
    %v1754 = vpop.f32.mrb[0].mxu0
    %v1755 = vadd.f32 %v1358, %v1754
    %v1756 = vpop.f32.mrb[0].mxu0
    %v1757 = vpop.f32.mrb[0].mxu0
    %v1758 = vadd.f32 %v1361, %v1757
    %v1759 = vpop.f32.mrb[0].mxu0
    %1760 = vmatprep.mubr.bf16.mxu0 0
    %1761 = vmatmul.mubr.bf16.gmra.mrb[0].mxu0 %v1503
    %v1762 = vpop.f32.mrb[0].mxu0
    %v1763 = vadd.f32 %v1366, %v1762
    %v1764 = vpop.f32.mrb[0].mxu0
    %v1765 = vpop.f32.mrb[0].mxu0
    %v1766 = vadd.f32 %v1369, %v1765
    %v1767 = vpop.f32.mrb[0].mxu0
    %1768 = vmatprep.mubr.bf16.mxu0 0
    %1769 = vmatmul.mubr.bf16.gmra.mrb[0].mxu0 %v1506
    %v1770 = vpop.f32.mrb[0].mxu0
    %v1771 = vadd.f32 %v1374, %v1770
    %v1772 = vpop.f32.mrb[0].mxu0
    %v1773 = vpop.f32.mrb[0].mxu0
    %v1774 = vadd.f32 %v1377, %v1773
    %v1775 = vpop.f32.mrb[0].mxu0
    %1776 = vmatprep.mubr.bf16.mxu0 0
    %1777 = vmatmul.mubr.bf16.gmra.mrb[0].mxu0 %v1509
    %v1778 = vpop.f32.mrb[0].mxu0
    %v1779 = vadd.f32 %v1382, %v1778
    %v1780 = vpop.f32.mrb[0].mxu0
    %v1781 = vpop.f32.mrb[0].mxu0
    %v1782 = vadd.f32 %v1385, %v1781
    %v1783 = vpop.f32.mrb[0].mxu0
    %1784 = vmatprep.mubr.bf16.mxu0 0
    %1785 = vmatmul.mubr.bf16.gmra.mrb[0].mxu0 %v1512
    %v1786 = vpop.f32.mrb[0].mxu0
    %v1787 = vadd.f32 %v1390, %v1786
    %v1788 = vpop.f32.mrb[0].mxu0
    %v1789 = vpop.f32.mrb[0].mxu0
    %v1790 = vadd.f32 %v1393, %v1789
    %v1791 = vpop.f32.mrb[0].mxu0
    %1792 = vmatprep.mubr.bf16.mxu0 0
    %1793 = vmatmul.mubr.bf16.gmra.mrb[0].mxu0 %v1515
    %v1794 = vpop.f32.mrb[0].mxu0
    %v1795 = vadd.f32 %v1398, %v1794
    %v1796 = vpop.f32.mrb[0].mxu0
    %v1797 = vpop.f32.mrb[0].mxu0
    %v1798 = vadd.f32 %v1401, %v1797
    %v1799 = vpop.f32.mrb[0].mxu0
    %1800 = vmatprep.mubr.bf16.mxu0 0
    %1801 = vmatmul.mubr.bf16.gmra.mrb[0].mxu0 %v1518
    %v1802 = vpop.f32.mrb[0].mxu0
    %v1803 = vadd.f32 %v1406, %v1802
    %v1804 = vpop.f32.mrb[0].mxu0
    %v1805 = vpop.f32.mrb[0].mxu0
    %v1806 = vadd.f32 %v1409, %v1805
    %v1807 = vpop.f32.mrb[0].mxu0
    %1808 = vdwg.mxu0
    %v1809 = vld [vmem:[%s3] sm:$0x1]
    %v1811 = vlaneseq
    %v1812 = vshrl.u32 %v1811, 7
    %v1813 = vsub.s32 0, %v1812
    %v1814 = vrot.slane %v1809, %v1813
    %v1816 = vadd.f32 %v1555, %v1814
    %v1817 = vadd.f32 %v1558, %v1814
    %v1818 = vadd.f32 %v1563, %v1814
    %v1819 = vadd.f32 %v1566, %v1814
    %v1820 = vadd.f32 %v1571, %v1814
    %v1821 = vadd.f32 %v1574, %v1814
    %v1822 = vadd.f32 %v1579, %v1814
    %v1823 = vadd.f32 %v1582, %v1814
    %v1824 = vadd.f32 %v1587, %v1814
    %v1825 = vadd.f32 %v1590, %v1814
    %v1826 = vadd.f32 %v1595, %v1814
    %v1827 = vadd.f32 %v1598, %v1814
    %v1828 = vadd.f32 %v1603, %v1814
    %v1829 = vadd.f32 %v1606, %v1814
    %v1830 = vadd.f32 %v1611, %v1814
    %v1831 = vadd.f32 %v1614, %v1814
    %v1832 = vadd.f32 %v1619, %v1814
    %v1833 = vadd.f32 %v1622, %v1814
    %v1834 = vadd.f32 %v1627, %v1814
    %v1835 = vadd.f32 %v1630, %v1814
    %v1836 = vadd.f32 %v1635, %v1814
    %v1837 = vadd.f32 %v1638, %v1814
    %v1838 = vadd.f32 %v1643, %v1814
    %v1839 = vadd.f32 %v1646, %v1814
    %v1840 = vadd.f32 %v1651, %v1814
    %v1841 = vadd.f32 %v1654, %v1814
    %v1842 = vadd.f32 %v1659, %v1814
    %v1843 = vadd.f32 %v1662, %v1814
    %v1844 = vadd.f32 %v1667, %v1814
    %v1845 = vadd.f32 %v1670, %v1814
    %v1846 = vadd.f32 %v1675, %v1814
    %v1847 = vadd.f32 %v1678, %v1814
    %v1848 = vadd.f32 %v1683, %v1814
    %v1849 = vadd.f32 %v1686, %v1814
    %v1850 = vadd.f32 %v1691, %v1814
    %v1851 = vadd.f32 %v1694, %v1814
    %v1852 = vadd.f32 %v1699, %v1814
    %v1853 = vadd.f32 %v1702, %v1814
    %v1854 = vadd.f32 %v1707, %v1814
    %v1855 = vadd.f32 %v1710, %v1814
    %v1856 = vadd.f32 %v1715, %v1814
    %v1857 = vadd.f32 %v1718, %v1814
    %v1858 = vadd.f32 %v1723, %v1814
    %v1859 = vadd.f32 %v1726, %v1814
    %v1860 = vadd.f32 %v1731, %v1814
    %v1861 = vadd.f32 %v1734, %v1814
    %v1862 = vadd.f32 %v1739, %v1814
    %v1863 = vadd.f32 %v1742, %v1814
    %v1864 = vadd.f32 %v1747, %v1814
    %v1865 = vadd.f32 %v1750, %v1814
    %v1866 = vadd.f32 %v1755, %v1814
    %v1867 = vadd.f32 %v1758, %v1814
    %v1868 = vadd.f32 %v1763, %v1814
    %v1869 = vadd.f32 %v1766, %v1814
    %v1870 = vadd.f32 %v1771, %v1814
    %v1871 = vadd.f32 %v1774, %v1814
    %v1872 = vadd.f32 %v1779, %v1814
    %v1873 = vadd.f32 %v1782, %v1814
    %v1874 = vadd.f32 %v1787, %v1814
    %v1875 = vadd.f32 %v1790, %v1814
    %v1876 = vadd.f32 %v1795, %v1814
    %v1877 = vadd.f32 %v1798, %v1814
    %v1878 = vadd.f32 %v1803, %v1814
    %v1879 = vadd.f32 %v1806, %v1814
    %v1880 = vlaneseq
    %v1881 = vshrl.u32 %v1880, 7
    %v1882 = vadd.s32 %v1881, 8
    %vm1883 = vcmp.lt.s32.totalorder %v1881, 15
    %vm1884 = vcmp.lt.s32.totalorder %v1882, 15
    %v1885 = vrot.slane %v1816, 1
    %v1886 = vrot.slane %v1818, 1
    %v1887 = vrot.slane %v1820, 1
    %v1888 = vrot.slane %v1822, 1
    %v1889 = vrot.slane %v1824, 1
    %v1890 = vrot.slane %v1826, 1
    %v1891 = vrot.slane %v1828, 1
    %v1892 = vrot.slane %v1830, 1
    %v1893 = vrot.slane %v1832, 1
    %v1894 = vrot.slane %v1834, 1
    %v1895 = vrot.slane %v1836, 1
    %v1896 = vrot.slane %v1838, 1
    %v1897 = vrot.slane %v1840, 1
    %v1898 = vrot.slane %v1842, 1
    %v1899 = vrot.slane %v1844, 1
    %v1900 = vrot.slane %v1846, 1
    %v1901 = vrot.slane %v1848, 1
    %v1902 = vrot.slane %v1850, 1
    %v1903 = vrot.slane %v1852, 1
    %v1904 = vrot.slane %v1854, 1
    %v1905 = vrot.slane %v1856, 1
    %v1906 = vrot.slane %v1858, 1
    %v1907 = vrot.slane %v1860, 1
    %v1908 = vrot.slane %v1862, 1
    %v1909 = vrot.slane %v1864, 1
    %v1910 = vrot.slane %v1866, 1
    %v1911 = vrot.slane %v1868, 1
    %v1912 = vrot.slane %v1870, 1
    %v1913 = vrot.slane %v1872, 1
    %v1914 = vrot.slane %v1874, 1
    %v1915 = vrot.slane %v1876, 1
    %v1916 = vrot.slane %v1878, 1
    %v1917 = vrot.slane %v1817, 1
    %v1918 = vrot.slane %v1819, 1
    %v1919 = vrot.slane %v1821, 1
    %v1920 = vrot.slane %v1823, 1
    %v1921 = vrot.slane %v1825, 1
    %v1922 = vrot.slane %v1827, 1
    %v1923 = vrot.slane %v1829, 1
    %v1924 = vrot.slane %v1831, 1
    %v1925 = vrot.slane %v1833, 1
    %v1926 = vrot.slane %v1835, 1
    %v1927 = vrot.slane %v1837, 1
    %v1928 = vrot.slane %v1839, 1
    %v1929 = vrot.slane %v1841, 1
    %v1930 = vrot.slane %v1843, 1
    %v1931 = vrot.slane %v1845, 1
    %v1932 = vrot.slane %v1847, 1
    %v1933 = vrot.slane %v1849, 1
    %v1934 = vrot.slane %v1851, 1
    %v1935 = vrot.slane %v1853, 1
    %v1936 = vrot.slane %v1855, 1
    %v1937 = vrot.slane %v1857, 1
    %v1938 = vrot.slane %v1859, 1
    %v1939 = vrot.slane %v1861, 1
    %v1940 = vrot.slane %v1863, 1
    %v1941 = vrot.slane %v1865, 1
    %v1942 = vrot.slane %v1867, 1
    %v1943 = vrot.slane %v1869, 1
    %v1944 = vrot.slane %v1871, 1
    %v1945 = vrot.slane %v1873, 1
    %v1946 = vrot.slane %v1875, 1
    %v1947 = vrot.slane %v1877, 1
    %v1948 = vrot.slane %v1879, 1
    %vm1949 = vcmp.lt.s32.totalorder %v1881, 7
    %v1950 = vsel %vm1949, %v1885, %v1917
    %v1951 = vsel %vm1949, %v1886, %v1918
    %v1952 = vsel %vm1949, %v1887, %v1919
    %v1953 = vsel %vm1949, %v1888, %v1920
    %v1954 = vsel %vm1949, %v1889, %v1921
    %v1955 = vsel %vm1949, %v1890, %v1922
    %v1956 = vsel %vm1949, %v1891, %v1923
    %v1957 = vsel %vm1949, %v1892, %v1924
    %v1958 = vsel %vm1949, %v1893, %v1925
    %v1959 = vsel %vm1949, %v1894, %v1926
    %v1960 = vsel %vm1949, %v1895, %v1927
    %v1961 = vsel %vm1949, %v1896, %v1928
    %v1962 = vsel %vm1949, %v1897, %v1929
    %v1963 = vsel %vm1949, %v1898, %v1930
    %v1964 = vsel %vm1949, %v1899, %v1931
    %v1965 = vsel %vm1949, %v1900, %v1932
    %v1966 = vsel %vm1949, %v1901, %v1933
    %v1967 = vsel %vm1949, %v1902, %v1934
    %v1968 = vsel %vm1949, %v1903, %v1935
    %v1969 = vsel %vm1949, %v1904, %v1936
    %v1970 = vsel %vm1949, %v1905, %v1937
    %v1971 = vsel %vm1949, %v1906, %v1938
    %v1972 = vsel %vm1949, %v1907, %v1939
    %v1973 = vsel %vm1949, %v1908, %v1940
    %v1974 = vsel %vm1949, %v1909, %v1941
    %v1975 = vsel %vm1949, %v1910, %v1942
    %v1976 = vsel %vm1949, %v1911, %v1943
    %v1977 = vsel %vm1949, %v1912, %v1944
    %v1978 = vsel %vm1949, %v1913, %v1945
    %v1979 = vsel %vm1949, %v1914, %v1946
    %v1980 = vsel %vm1949, %v1915, %v1947
    %v1981 = vsel %vm1949, %v1916, %v1948
    %v1982 = vsel %vm1949, %v1917, %v1885
    %v1983 = vsel %vm1949, %v1918, %v1886
    %v1984 = vsel %vm1949, %v1919, %v1887
    %v1985 = vsel %vm1949, %v1920, %v1888
    %v1986 = vsel %vm1949, %v1921, %v1889
    %v1987 = vsel %vm1949, %v1922, %v1890
    %v1988 = vsel %vm1949, %v1923, %v1891
    %v1989 = vsel %vm1949, %v1924, %v1892
    %v1990 = vsel %vm1949, %v1925, %v1893
    %v1991 = vsel %vm1949, %v1926, %v1894
    %v1992 = vsel %vm1949, %v1927, %v1895
    %v1993 = vsel %vm1949, %v1928, %v1896
    %v1994 = vsel %vm1949, %v1929, %v1897
    %v1995 = vsel %vm1949, %v1930, %v1898
    %v1996 = vsel %vm1949, %v1931, %v1899
    %v1997 = vsel %vm1949, %v1932, %v1900
    %v1998 = vsel %vm1949, %v1933, %v1901
    %v1999 = vsel %vm1949, %v1934, %v1902
    %v2000 = vsel %vm1949, %v1935, %v1903
    %v2001 = vsel %vm1949, %v1936, %v1904
    %v2002 = vsel %vm1949, %v1937, %v1905
    %v2003 = vsel %vm1949, %v1938, %v1906
    %v2004 = vsel %vm1949, %v1939, %v1907
    %v2005 = vsel %vm1949, %v1940, %v1908
    %v2006 = vsel %vm1949, %v1941, %v1909
    %v2007 = vsel %vm1949, %v1942, %v1910
    %v2008 = vsel %vm1949, %v1943, %v1911
    %v2009 = vsel %vm1949, %v1944, %v1912
    %v2010 = vsel %vm1949, %v1945, %v1913
    %v2011 = vsel %vm1949, %v1946, %v1914
    %v2012 = vsel %vm1949, %v1947, %v1915
    %v2013 = vsel %vm1949, %v1948, %v1916
    %v2014 = vsel %vm1883, %v1950, 0.0
    %v2015 = vsel %vm1884, %v1982, 0.0
    %v2016 = vsel %vm1883, %v1951, 0.0
    %v2017 = vsel %vm1884, %v1983, 0.0
    %v2018 = vsel %vm1883, %v1952, 0.0
    %v2019 = vsel %vm1884, %v1984, 0.0
    %v2020 = vsel %vm1883, %v1953, 0.0
    %v2021 = vsel %vm1884, %v1985, 0.0
    %v2022 = vsel %vm1883, %v1954, 0.0
    %v2023 = vsel %vm1884, %v1986, 0.0
    %v2024 = vsel %vm1883, %v1955, 0.0
    %v2025 = vsel %vm1884, %v1987, 0.0
    %v2026 = vsel %vm1883, %v1956, 0.0
    %v2027 = vsel %vm1884, %v1988, 0.0
    %v2028 = vsel %vm1883, %v1957, 0.0
    %v2029 = vsel %vm1884, %v1989, 0.0
    %v2030 = vsel %vm1883, %v1958, 0.0
    %v2031 = vsel %vm1884, %v1990, 0.0
    %v2032 = vsel %vm1883, %v1959, 0.0
    %v2033 = vsel %vm1884, %v1991, 0.0
    %v2034 = vsel %vm1883, %v1960, 0.0
    %v2035 = vsel %vm1884, %v1992, 0.0
    %v2036 = vsel %vm1883, %v1961, 0.0
    %v2037 = vsel %vm1884, %v1993, 0.0
    %v2038 = vsel %vm1883, %v1962, 0.0
    %v2039 = vsel %vm1884, %v1994, 0.0
    %v2040 = vsel %vm1883, %v1963, 0.0
    %v2041 = vsel %vm1884, %v1995, 0.0
    %v2042 = vsel %vm1883, %v1964, 0.0
    %v2043 = vsel %vm1884, %v1996, 0.0
    %v2044 = vsel %vm1883, %v1965, 0.0
    %v2045 = vsel %vm1884, %v1997, 0.0
    %v2046 = vsel %vm1883, %v1966, 0.0
    %v2047 = vsel %vm1884, %v1998, 0.0
    %v2048 = vsel %vm1883, %v1967, 0.0
    %v2049 = vsel %vm1884, %v1999, 0.0
    %v2050 = vsel %vm1883, %v1968, 0.0
    %v2051 = vsel %vm1884, %v2000, 0.0
    %v2052 = vsel %vm1883, %v1969, 0.0
    %v2053 = vsel %vm1884, %v2001, 0.0
    %v2054 = vsel %vm1883, %v1970, 0.0
    %v2055 = vsel %vm1884, %v2002, 0.0
    %v2056 = vsel %vm1883, %v1971, 0.0
    %v2057 = vsel %vm1884, %v2003, 0.0
    %v2058 = vsel %vm1883, %v1972, 0.0
    %v2059 = vsel %vm1884, %v2004, 0.0
    %v2060 = vsel %vm1883, %v1973, 0.0
    %v2061 = vsel %vm1884, %v2005, 0.0
    %v2062 = vsel %vm1883, %v1974, 0.0
    %v2063 = vsel %vm1884, %v2006, 0.0
    %v2064 = vsel %vm1883, %v1975, 0.0
    %v2065 = vsel %vm1884, %v2007, 0.0
    %v2066 = vsel %vm1883, %v1976, 0.0
    %v2067 = vsel %vm1884, %v2008, 0.0
    %v2068 = vsel %vm1883, %v1977, 0.0
    %v2069 = vsel %vm1884, %v2009, 0.0
    %v2070 = vsel %vm1883, %v1978, 0.0
    %v2071 = vsel %vm1884, %v2010, 0.0
    %v2072 = vsel %vm1883, %v1979, 0.0
    %v2073 = vsel %vm1884, %v2011, 0.0
    %v2074 = vsel %vm1883, %v1980, 0.0
    %v2075 = vsel %vm1884, %v2012, 0.0
    %v2076 = vsel %vm1883, %v1981, 0.0
    %v2077 = vsel %vm1884, %v2013, 0.0
    %vm2078 = vcmp.gt.s32.totalorder %v1881, 0
    %vm2079 = vcmp.gt.s32.totalorder %v1882, 0
    %v2080 = vrot.slane %v1816, 7
    %v2081 = vrot.slane %v1818, 7
    %v2082 = vrot.slane %v1820, 7
    %v2083 = vrot.slane %v1822, 7
    %v2084 = vrot.slane %v1824, 7
    %v2085 = vrot.slane %v1826, 7
    %v2086 = vrot.slane %v1828, 7
    %v2087 = vrot.slane %v1830, 7
    %v2088 = vrot.slane %v1832, 7
    %v2089 = vrot.slane %v1834, 7
    %v2090 = vrot.slane %v1836, 7
    %v2091 = vrot.slane %v1838, 7
    %v2092 = vrot.slane %v1840, 7
    %v2093 = vrot.slane %v1842, 7
    %v2094 = vrot.slane %v1844, 7
    %v2095 = vrot.slane %v1846, 7
    %v2096 = vrot.slane %v1848, 7
    %v2097 = vrot.slane %v1850, 7
    %v2098 = vrot.slane %v1852, 7
    %v2099 = vrot.slane %v1854, 7
    %v2100 = vrot.slane %v1856, 7
    %v2101 = vrot.slane %v1858, 7
    %v2102 = vrot.slane %v1860, 7
    %v2103 = vrot.slane %v1862, 7
    %v2104 = vrot.slane %v1864, 7
    %v2105 = vrot.slane %v1866, 7
    %v2106 = vrot.slane %v1868, 7
    %v2107 = vrot.slane %v1870, 7
    %v2108 = vrot.slane %v1872, 7
    %v2109 = vrot.slane %v1874, 7
    %v2110 = vrot.slane %v1876, 7
    %v2111 = vrot.slane %v1878, 7
    %v2112 = vrot.slane %v1817, 7
    %v2113 = vrot.slane %v1819, 7
    %v2114 = vrot.slane %v1821, 7
    %v2115 = vrot.slane %v1823, 7
    %v2116 = vrot.slane %v1825, 7
    %v2117 = vrot.slane %v1827, 7
    %v2118 = vrot.slane %v1829, 7
    %v2119 = vrot.slane %v1831, 7
    %v2120 = vrot.slane %v1833, 7
    %v2121 = vrot.slane %v1835, 7
    %v2122 = vrot.slane %v1837, 7
    %v2123 = vrot.slane %v1839, 7
    %v2124 = vrot.slane %v1841, 7
    %v2125 = vrot.slane %v1843, 7
    %v2126 = vrot.slane %v1845, 7
    %v2127 = vrot.slane %v1847, 7
    %v2128 = vrot.slane %v1849, 7
    %v2129 = vrot.slane %v1851, 7
    %v2130 = vrot.slane %v1853, 7
    %v2131 = vrot.slane %v1855, 7
    %v2132 = vrot.slane %v1857, 7
    %v2133 = vrot.slane %v1859, 7
    %v2134 = vrot.slane %v1861, 7
    %v2135 = vrot.slane %v1863, 7
    %v2136 = vrot.slane %v1865, 7
    %v2137 = vrot.slane %v1867, 7
    %v2138 = vrot.slane %v1869, 7
    %v2139 = vrot.slane %v1871, 7
    %v2140 = vrot.slane %v1873, 7
    %v2141 = vrot.slane %v1875, 7
    %v2142 = vrot.slane %v1877, 7
    %v2143 = vrot.slane %v1879, 7
    %vm2144 = vcmp.lt.s32.totalorder %v1881, 1
    %v2145 = vsel %vm2144, %v2080, %v2112
    %v2146 = vsel %vm2144, %v2081, %v2113
    %v2147 = vsel %vm2144, %v2082, %v2114
    %v2148 = vsel %vm2144, %v2083, %v2115
    %v2149 = vsel %vm2144, %v2084, %v2116
    %v2150 = vsel %vm2144, %v2085, %v2117
    %v2151 = vsel %vm2144, %v2086, %v2118
    %v2152 = vsel %vm2144, %v2087, %v2119
    %v2153 = vsel %vm2144, %v2088, %v2120
    %v2154 = vsel %vm2144, %v2089, %v2121
    %v2155 = vsel %vm2144, %v2090, %v2122
    %v2156 = vsel %vm2144, %v2091, %v2123
    %v2157 = vsel %vm2144, %v2092, %v2124
    %v2158 = vsel %vm2144, %v2093, %v2125
    %v2159 = vsel %vm2144, %v2094, %v2126
    %v2160 = vsel %vm2144, %v2095, %v2127
    %v2161 = vsel %vm2144, %v2096, %v2128
    %v2162 = vsel %vm2144, %v2097, %v2129
    %v2163 = vsel %vm2144, %v2098, %v2130
    %v2164 = vsel %vm2144, %v2099, %v2131
    %v2165 = vsel %vm2144, %v2100, %v2132
    %v2166 = vsel %vm2144, %v2101, %v2133
    %v2167 = vsel %vm2144, %v2102, %v2134
    %v2168 = vsel %vm2144, %v2103, %v2135
    %v2169 = vsel %vm2144, %v2104, %v2136
    %v2170 = vsel %vm2144, %v2105, %v2137
    %v2171 = vsel %vm2144, %v2106, %v2138
    %v2172 = vsel %vm2144, %v2107, %v2139
    %v2173 = vsel %vm2144, %v2108, %v2140
    %v2174 = vsel %vm2144, %v2109, %v2141
    %v2175 = vsel %vm2144, %v2110, %v2142
    %v2176 = vsel %vm2144, %v2111, %v2143
    %v2177 = vsel %vm2144, %v2112, %v2080
    %v2178 = vsel %vm2144, %v2113, %v2081
    %v2179 = vsel %vm2144, %v2114, %v2082
    %v2180 = vsel %vm2144, %v2115, %v2083
    %v2181 = vsel %vm2144, %v2116, %v2084
    %v2182 = vsel %vm2144, %v2117, %v2085
    %v2183 = vsel %vm2144, %v2118, %v2086
    %v2184 = vsel %vm2144, %v2119, %v2087
    %v2185 = vsel %vm2144, %v2120, %v2088
    %v2186 = vsel %vm2144, %v2121, %v2089
    %v2187 = vsel %vm2144, %v2122, %v2090
    %v2188 = vsel %vm2144, %v2123, %v2091
    %v2189 = vsel %vm2144, %v2124, %v2092
    %v2190 = vsel %vm2144, %v2125, %v2093
    %v2191 = vsel %vm2144, %v2126, %v2094
    %v2192 = vsel %vm2144, %v2127, %v2095
    %v2193 = vsel %vm2144, %v2128, %v2096
    %v2194 = vsel %vm2144, %v2129, %v2097
    %v2195 = vsel %vm2144, %v2130, %v2098
    %v2196 = vsel %vm2144, %v2131, %v2099
    %v2197 = vsel %vm2144, %v2132, %v2100
    %v2198 = vsel %vm2144, %v2133, %v2101
    %v2199 = vsel %vm2144, %v2134, %v2102
    %v2200 = vsel %vm2144, %v2135, %v2103
    %v2201 = vsel %vm2144, %v2136, %v2104
    %v2202 = vsel %vm2144, %v2137, %v2105
    %v2203 = vsel %vm2144, %v2138, %v2106
    %v2204 = vsel %vm2144, %v2139, %v2107
    %v2205 = vsel %vm2144, %v2140, %v2108
    %v2206 = vsel %vm2144, %v2141, %v2109
    %v2207 = vsel %vm2144, %v2142, %v2110
    %v2208 = vsel %vm2144, %v2143, %v2111
    %v2209 = vsel %vm2078, %v2177, 0.0
    %v2210 = vsel %vm2079, %v2145, 0.0
    %v2211 = vsel %vm2078, %v2178, 0.0
    %v2212 = vsel %vm2079, %v2146, 0.0
    %v2213 = vsel %vm2078, %v2179, 0.0
    %v2214 = vsel %vm2079, %v2147, 0.0
    %v2215 = vsel %vm2078, %v2180, 0.0
    %v2216 = vsel %vm2079, %v2148, 0.0
    %v2217 = vsel %vm2078, %v2181, 0.0
    %v2218 = vsel %vm2079, %v2149, 0.0
    %v2219 = vsel %vm2078, %v2182, 0.0
    %v2220 = vsel %vm2079, %v2150, 0.0
    %v2221 = vsel %vm2078, %v2183, 0.0
    %v2222 = vsel %vm2079, %v2151, 0.0
    %v2223 = vsel %vm2078, %v2184, 0.0
    %v2224 = vsel %vm2079, %v2152, 0.0
    %v2225 = vsel %vm2078, %v2185, 0.0
    %v2226 = vsel %vm2079, %v2153, 0.0
    %v2227 = vsel %vm2078, %v2186, 0.0
    %v2228 = vsel %vm2079, %v2154, 0.0
    %v2229 = vsel %vm2078, %v2187, 0.0
    %v2230 = vsel %vm2079, %v2155, 0.0
    %v2231 = vsel %vm2078, %v2188, 0.0
    %v2232 = vsel %vm2079, %v2156, 0.0
    %v2233 = vsel %vm2078, %v2189, 0.0
    %v2234 = vsel %vm2079, %v2157, 0.0
    %v2235 = vsel %vm2078, %v2190, 0.0
    %v2236 = vsel %vm2079, %v2158, 0.0
    %v2237 = vsel %vm2078, %v2191, 0.0
    %v2238 = vsel %vm2079, %v2159, 0.0
    %v2239 = vsel %vm2078, %v2192, 0.0
    %v2240 = vsel %vm2079, %v2160, 0.0
    %v2241 = vsel %vm2078, %v2193, 0.0
    %v2242 = vsel %vm2079, %v2161, 0.0
    %v2243 = vsel %vm2078, %v2194, 0.0
    %v2244 = vsel %vm2079, %v2162, 0.0
    %v2245 = vsel %vm2078, %v2195, 0.0
    %v2246 = vsel %vm2079, %v2163, 0.0
    %v2247 = vsel %vm2078, %v2196, 0.0
    %v2248 = vsel %vm2079, %v2164, 0.0
    %v2249 = vsel %vm2078, %v2197, 0.0
    %v2250 = vsel %vm2079, %v2165, 0.0
    %v2251 = vsel %vm2078, %v2198, 0.0
    %v2252 = vsel %vm2079, %v2166, 0.0
    %v2253 = vsel %vm2078, %v2199, 0.0
    %v2254 = vsel %vm2079, %v2167, 0.0
    %v2255 = vsel %vm2078, %v2200, 0.0
    %v2256 = vsel %vm2079, %v2168, 0.0
    %v2257 = vsel %vm2078, %v2201, 0.0
    %v2258 = vsel %vm2079, %v2169, 0.0
    %v2259 = vsel %vm2078, %v2202, 0.0
    %v2260 = vsel %vm2079, %v2170, 0.0
    %v2261 = vsel %vm2078, %v2203, 0.0
    %v2262 = vsel %vm2079, %v2171, 0.0
    %v2263 = vsel %vm2078, %v2204, 0.0
    %v2264 = vsel %vm2079, %v2172, 0.0
    %v2265 = vsel %vm2078, %v2205, 0.0
    %v2266 = vsel %vm2079, %v2173, 0.0
    %v2267 = vsel %vm2078, %v2206, 0.0
    %v2268 = vsel %vm2079, %v2174, 0.0
    %v2269 = vsel %vm2078, %v2207, 0.0
    %v2270 = vsel %vm2079, %v2175, 0.0
    %v2271 = vsel %vm2078, %v2208, 0.0
    %v2272 = vsel %vm2079, %v2176, 0.0
    %v2273 = vld [vmem:[%s4] sm:$0xff]
    %v2274 = vld [vmem:[%s4 + $0x8] sm:$0x1]
    %v2275 = vld [vmem:[%s5] sm:$0x1]
    %v2277 = vlaneseq
    %v2278 = vshrl.u32 %v2277, 7
    %v2279 = vsub.s32 0, %v2278
    %v2280 = vrot.slane %v2275, %v2279
    %v2282 = vadd.f32 %v1816, %v2280
    %v2283 = vadd.f32 %v1817, %v2280
    %v2284 = vadd.f32 %v1818, %v2280
    %v2285 = vadd.f32 %v1819, %v2280
    %v2286 = vadd.f32 %v1820, %v2280
    %v2287 = vadd.f32 %v1821, %v2280
    %v2288 = vadd.f32 %v1822, %v2280
    %v2289 = vadd.f32 %v1823, %v2280
    %v2290 = vadd.f32 %v1824, %v2280
    %v2291 = vadd.f32 %v1825, %v2280
    %v2292 = vadd.f32 %v1826, %v2280
    %v2293 = vadd.f32 %v1827, %v2280
    %v2294 = vadd.f32 %v1828, %v2280
    %v2295 = vadd.f32 %v1829, %v2280
    %v2296 = vadd.f32 %v1830, %v2280
    %v2297 = vadd.f32 %v1831, %v2280
    %v2298 = vadd.f32 %v1832, %v2280
    %v2299 = vadd.f32 %v1833, %v2280
    %v2300 = vadd.f32 %v1834, %v2280
    %v2301 = vadd.f32 %v1835, %v2280
    %v2302 = vadd.f32 %v1836, %v2280
    %v2303 = vadd.f32 %v1837, %v2280
    %v2304 = vadd.f32 %v1838, %v2280
    %v2305 = vadd.f32 %v1839, %v2280
    %v2306 = vadd.f32 %v1840, %v2280
    %v2307 = vadd.f32 %v1841, %v2280
    %v2308 = vadd.f32 %v1842, %v2280
    %v2309 = vadd.f32 %v1843, %v2280
    %v2310 = vadd.f32 %v1844, %v2280
    %v2311 = vadd.f32 %v1845, %v2280
    %v2312 = vadd.f32 %v1846, %v2280
    %v2313 = vadd.f32 %v1847, %v2280
    %v2314 = vadd.f32 %v1848, %v2280
    %v2315 = vadd.f32 %v1849, %v2280
    %v2316 = vadd.f32 %v1850, %v2280
    %v2317 = vadd.f32 %v1851, %v2280
    %v2318 = vadd.f32 %v1852, %v2280
    %v2319 = vadd.f32 %v1853, %v2280
    %v2320 = vadd.f32 %v1854, %v2280
    %v2321 = vadd.f32 %v1855, %v2280
    %v2322 = vadd.f32 %v1856, %v2280
    %v2323 = vadd.f32 %v1857, %v2280
    %v2324 = vadd.f32 %v1858, %v2280
    %v2325 = vadd.f32 %v1859, %v2280
    %v2326 = vadd.f32 %v1860, %v2280
    %v2327 = vadd.f32 %v1861, %v2280
    %v2328 = vadd.f32 %v1862, %v2280
    %v2329 = vadd.f32 %v1863, %v2280
    %v2330 = vadd.f32 %v1864, %v2280
    %v2331 = vadd.f32 %v1865, %v2280
    %v2332 = vadd.f32 %v1866, %v2280
    %v2333 = vadd.f32 %v1867, %v2280
    %v2334 = vadd.f32 %v1868, %v2280
    %v2335 = vadd.f32 %v1869, %v2280
    %v2336 = vadd.f32 %v1870, %v2280
    %v2337 = vadd.f32 %v1871, %v2280
    %v2338 = vadd.f32 %v1872, %v2280
    %v2339 = vadd.f32 %v1873, %v2280
    %v2340 = vadd.f32 %v1874, %v2280
    %v2341 = vadd.f32 %v1875, %v2280
    %v2342 = vadd.f32 %v1876, %v2280
    %v2343 = vadd.f32 %v1877, %v2280
    %v2344 = vadd.f32 %v1878, %v2280
    %v2345 = vadd.f32 %v1879, %v2280
    %v2346 = vlaneseq
    %v2347 = vshrl.u32 %v2346, 7
    %v2348 = vsub.s32 0, %v2347
    %v2349 = vrot.slane %v2273, %v2348
    %v2350 = vmul.f32 %v2349, 0.0
    %v2351 = vmul.f32 %v2209, %v2349
    %v2352 = vmul.f32 %v2210, %v2349
    %v2353 = vmul.f32 %v2211, %v2349
    %v2354 = vmul.f32 %v2212, %v2349
    %v2355 = vmul.f32 %v2213, %v2349
    %v2356 = vmul.f32 %v2214, %v2349
    %v2357 = vmul.f32 %v2215, %v2349
    %v2358 = vmul.f32 %v2216, %v2349
    %v2359 = vmul.f32 %v2217, %v2349
    %v2360 = vmul.f32 %v2218, %v2349
    %v2361 = vmul.f32 %v2219, %v2349
    %v2362 = vmul.f32 %v2220, %v2349
    %v2363 = vmul.f32 %v2221, %v2349
    %v2364 = vmul.f32 %v2222, %v2349
    %v2365 = vmul.f32 %v2223, %v2349
    %v2366 = vmul.f32 %v2224, %v2349
    %v2367 = vmul.f32 %v2225, %v2349
    %v2368 = vmul.f32 %v2226, %v2349
    %v2369 = vmul.f32 %v2227, %v2349
    %v2370 = vmul.f32 %v2228, %v2349
    %v2371 = vmul.f32 %v2229, %v2349
    %v2372 = vmul.f32 %v2230, %v2349
    %v2373 = vmul.f32 %v2231, %v2349
    %v2374 = vmul.f32 %v2232, %v2349
    %v2375 = vmul.f32 %v2233, %v2349
    %v2376 = vmul.f32 %v2234, %v2349
    %v2377 = vmul.f32 %v2235, %v2349
    %v2378 = vmul.f32 %v2236, %v2349
    %v2379 = vmul.f32 %v2237, %v2349
    %v2380 = vmul.f32 %v2238, %v2349
    %v2381 = vmul.f32 %v2241, %v2349
    %v2382 = vmul.f32 %v2242, %v2349
    %v2383 = vmul.f32 %v2243, %v2349
    %v2384 = vmul.f32 %v2244, %v2349
    %v2385 = vmul.f32 %v2245, %v2349
    %v2386 = vmul.f32 %v2246, %v2349
    %v2387 = vmul.f32 %v2247, %v2349
    %v2388 = vmul.f32 %v2248, %v2349
    %v2389 = vmul.f32 %v2249, %v2349
    %v2390 = vmul.f32 %v2250, %v2349
    %v2391 = vmul.f32 %v2251, %v2349
    %v2392 = vmul.f32 %v2252, %v2349
    %v2393 = vmul.f32 %v2253, %v2349
    %v2394 = vmul.f32 %v2254, %v2349
    %v2395 = vmul.f32 %v2255, %v2349
    %v2396 = vmul.f32 %v2256, %v2349
    %v2397 = vmul.f32 %v2257, %v2349
    %v2398 = vmul.f32 %v2258, %v2349
    %v2399 = vmul.f32 %v2259, %v2349
    %v2400 = vmul.f32 %v2260, %v2349
    %v2401 = vmul.f32 %v2261, %v2349
    %v2402 = vmul.f32 %v2262, %v2349
    %v2403 = vmul.f32 %v2263, %v2349
    %v2404 = vmul.f32 %v2264, %v2349
    %v2405 = vmul.f32 %v2265, %v2349
    %v2406 = vmul.f32 %v2266, %v2349
    %v2407 = vmul.f32 %v2267, %v2349
    %v2408 = vmul.f32 %v2268, %v2349
    %v2409 = vmul.f32 %v2269, %v2349
    %v2410 = vmul.f32 %v2270, %v2349
    %v2411 = vadd.f32 %v2282, %v2350
    %v2412 = vadd.f32 %v2283, %v2350
    %v2413 = vadd.f32 %v2284, %v2351
    %v2414 = vadd.f32 %v2285, %v2352
    %v2415 = vadd.f32 %v2286, %v2353
    %v2416 = vadd.f32 %v2287, %v2354
    %v2417 = vadd.f32 %v2288, %v2355
    %v2418 = vadd.f32 %v2289, %v2356
    %v2419 = vadd.f32 %v2290, %v2357
    %v2420 = vadd.f32 %v2291, %v2358
    %v2421 = vadd.f32 %v2292, %v2359
    %v2422 = vadd.f32 %v2293, %v2360
    %v2423 = vadd.f32 %v2294, %v2361
    %v2424 = vadd.f32 %v2295, %v2362
    %v2425 = vadd.f32 %v2296, %v2363
    %v2426 = vadd.f32 %v2297, %v2364
    %v2427 = vadd.f32 %v2298, %v2365
    %v2428 = vadd.f32 %v2299, %v2366
    %v2429 = vadd.f32 %v2300, %v2367
    %v2430 = vadd.f32 %v2301, %v2368
    %v2431 = vadd.f32 %v2302, %v2369
    %v2432 = vadd.f32 %v2303, %v2370
    %v2433 = vadd.f32 %v2304, %v2371
    %v2434 = vadd.f32 %v2305, %v2372
    %v2435 = vadd.f32 %v2306, %v2373
    %v2436 = vadd.f32 %v2307, %v2374
    %v2437 = vadd.f32 %v2308, %v2375
    %v2438 = vadd.f32 %v2309, %v2376
    %v2439 = vadd.f32 %v2310, %v2377
    %v2440 = vadd.f32 %v2311, %v2378
    %v2441 = vadd.f32 %v2312, %v2379
    %v2442 = vadd.f32 %v2313, %v2380
    %v2443 = vadd.f32 %v2314, %v2350
    %v2444 = vadd.f32 %v2315, %v2350
    %v2445 = vadd.f32 %v2316, %v2381
    %v2446 = vadd.f32 %v2317, %v2382
    %v2447 = vadd.f32 %v2318, %v2383
    %v2448 = vadd.f32 %v2319, %v2384
    %v2449 = vadd.f32 %v2320, %v2385
    %v2450 = vadd.f32 %v2321, %v2386
    %v2451 = vadd.f32 %v2322, %v2387
    %v2452 = vadd.f32 %v2323, %v2388
    %v2453 = vadd.f32 %v2324, %v2389
    %v2454 = vadd.f32 %v2325, %v2390
    %v2455 = vadd.f32 %v2326, %v2391
    %v2456 = vadd.f32 %v2327, %v2392
    %v2457 = vadd.f32 %v2328, %v2393
    %v2458 = vadd.f32 %v2329, %v2394
    %v2459 = vadd.f32 %v2330, %v2395
    %v2460 = vadd.f32 %v2331, %v2396
    %v2461 = vadd.f32 %v2332, %v2397
    %v2462 = vadd.f32 %v2333, %v2398
    %v2463 = vadd.f32 %v2334, %v2399
    %v2464 = vadd.f32 %v2335, %v2400
    %v2465 = vadd.f32 %v2336, %v2401
    %v2466 = vadd.f32 %v2337, %v2402
    %v2467 = vadd.f32 %v2338, %v2403
    %v2468 = vadd.f32 %v2339, %v2404
    %v2469 = vadd.f32 %v2340, %v2405
    %v2470 = vadd.f32 %v2341, %v2406
    %v2471 = vadd.f32 %v2342, %v2407
    %v2472 = vadd.f32 %v2343, %v2408
    %v2473 = vadd.f32 %v2344, %v2409
    %v2474 = vadd.f32 %v2345, %v2410
    %v2475 = vlaneseq
    %v2476 = vshrl.u32 %v2475, 7
    %v2477 = vsub.s32 1, %v2476
    %v2478 = vrot.slane %v2273, %v2477
    %v2479 = vmul.f32 %v2478, 0.0
    %v2480 = vmul.f32 %v1816, %v2478
    %v2481 = vmul.f32 %v1817, %v2478
    %v2482 = vmul.f32 %v1818, %v2478
    %v2483 = vmul.f32 %v1819, %v2478
    %v2484 = vmul.f32 %v1820, %v2478
    %v2485 = vmul.f32 %v1821, %v2478
    %v2486 = vmul.f32 %v1822, %v2478
    %v2487 = vmul.f32 %v1823, %v2478
    %v2488 = vmul.f32 %v1824, %v2478
    %v2489 = vmul.f32 %v1825, %v2478
    %v2490 = vmul.f32 %v1826, %v2478
    %v2491 = vmul.f32 %v1827, %v2478
    %v2492 = vmul.f32 %v1828, %v2478
    %v2493 = vmul.f32 %v1829, %v2478
    %v2494 = vmul.f32 %v1830, %v2478
    %v2495 = vmul.f32 %v1831, %v2478
    %v2496 = vmul.f32 %v1832, %v2478
    %v2497 = vmul.f32 %v1833, %v2478
    %v2498 = vmul.f32 %v1834, %v2478
    %v2499 = vmul.f32 %v1835, %v2478
    %v2500 = vmul.f32 %v1836, %v2478
    %v2501 = vmul.f32 %v1837, %v2478
    %v2502 = vmul.f32 %v1838, %v2478
    %v2503 = vmul.f32 %v1839, %v2478
    %v2504 = vmul.f32 %v1840, %v2478
    %v2505 = vmul.f32 %v1841, %v2478
    %v2506 = vmul.f32 %v1842, %v2478
    %v2507 = vmul.f32 %v1843, %v2478
    %v2508 = vmul.f32 %v1844, %v2478
    %v2509 = vmul.f32 %v1845, %v2478
    %v2510 = vmul.f32 %v1848, %v2478
    %v2511 = vmul.f32 %v1849, %v2478
    %v2512 = vmul.f32 %v1850, %v2478
    %v2513 = vmul.f32 %v1851, %v2478
    %v2514 = vmul.f32 %v1852, %v2478
    %v2515 = vmul.f32 %v1853, %v2478
    %v2516 = vmul.f32 %v1854, %v2478
    %v2517 = vmul.f32 %v1855, %v2478
    %v2518 = vmul.f32 %v1856, %v2478
    %v2519 = vmul.f32 %v1857, %v2478
    %v2520 = vmul.f32 %v1858, %v2478
    %v2521 = vmul.f32 %v1859, %v2478
    %v2522 = vmul.f32 %v1860, %v2478
    %v2523 = vmul.f32 %v1861, %v2478
    %v2524 = vmul.f32 %v1862, %v2478
    %v2525 = vmul.f32 %v1863, %v2478
    %v2526 = vmul.f32 %v1864, %v2478
    %v2527 = vmul.f32 %v1865, %v2478
    %v2528 = vmul.f32 %v1866, %v2478
    %v2529 = vmul.f32 %v1867, %v2478
    %v2530 = vmul.f32 %v1868, %v2478
    %v2531 = vmul.f32 %v1869, %v2478
    %v2532 = vmul.f32 %v1870, %v2478
    %v2533 = vmul.f32 %v1871, %v2478
    %v2534 = vmul.f32 %v1872, %v2478
    %v2535 = vmul.f32 %v1873, %v2478
    %v2536 = vmul.f32 %v1874, %v2478
    %v2537 = vmul.f32 %v1875, %v2478
    %v2538 = vmul.f32 %v1876, %v2478
    %v2539 = vmul.f32 %v1877, %v2478
    %v2540 = vadd.f32 %v2411, %v2479
    %v2541 = vadd.f32 %v2412, %v2479
    %v2542 = vadd.f32 %v2413, %v2480
    %v2543 = vadd.f32 %v2414, %v2481
    %v2544 = vadd.f32 %v2415, %v2482
    %v2545 = vadd.f32 %v2416, %v2483
    %v2546 = vadd.f32 %v2417, %v2484
    %v2547 = vadd.f32 %v2418, %v2485
    %v2548 = vadd.f32 %v2419, %v2486
    %v2549 = vadd.f32 %v2420, %v2487
    %v2550 = vadd.f32 %v2421, %v2488
    %v2551 = vadd.f32 %v2422, %v2489
    %v2552 = vadd.f32 %v2423, %v2490
    %v2553 = vadd.f32 %v2424, %v2491
    %v2554 = vadd.f32 %v2425, %v2492
    %v2555 = vadd.f32 %v2426, %v2493
    %v2556 = vadd.f32 %v2427, %v2494
    %v2557 = vadd.f32 %v2428, %v2495
    %v2558 = vadd.f32 %v2429, %v2496
    %v2559 = vadd.f32 %v2430, %v2497
    %v2560 = vadd.f32 %v2431, %v2498
    %v2561 = vadd.f32 %v2432, %v2499
    %v2562 = vadd.f32 %v2433, %v2500
    %v2563 = vadd.f32 %v2434, %v2501
    %v2564 = vadd.f32 %v2435, %v2502
    %v2565 = vadd.f32 %v2436, %v2503
    %v2566 = vadd.f32 %v2437, %v2504
    %v2567 = vadd.f32 %v2438, %v2505
    %v2568 = vadd.f32 %v2439, %v2506
    %v2569 = vadd.f32 %v2440, %v2507
    %v2570 = vadd.f32 %v2441, %v2508
    %v2571 = vadd.f32 %v2442, %v2509
    %v2572 = vadd.f32 %v2443, %v2479
    %v2573 = vadd.f32 %v2444, %v2479
    %v2574 = vadd.f32 %v2445, %v2510
    %v2575 = vadd.f32 %v2446, %v2511
    %v2576 = vadd.f32 %v2447, %v2512
    %v2577 = vadd.f32 %v2448, %v2513
    %v2578 = vadd.f32 %v2449, %v2514
    %v2579 = vadd.f32 %v2450, %v2515
    %v2580 = vadd.f32 %v2451, %v2516
    %v2581 = vadd.f32 %v2452, %v2517
    %v2582 = vadd.f32 %v2453, %v2518
    %v2583 = vadd.f32 %v2454, %v2519
    %v2584 = vadd.f32 %v2455, %v2520
    %v2585 = vadd.f32 %v2456, %v2521
    %v2586 = vadd.f32 %v2457, %v2522
    %v2587 = vadd.f32 %v2458, %v2523
    %v2588 = vadd.f32 %v2459, %v2524
    %v2589 = vadd.f32 %v2460, %v2525
    %v2590 = vadd.f32 %v2461, %v2526
    %v2591 = vadd.f32 %v2462, %v2527
    %v2592 = vadd.f32 %v2463, %v2528
    %v2593 = vadd.f32 %v2464, %v2529
    %v2594 = vadd.f32 %v2465, %v2530
    %v2595 = vadd.f32 %v2466, %v2531
    %v2596 = vadd.f32 %v2467, %v2532
    %v2597 = vadd.f32 %v2468, %v2533
    %v2598 = vadd.f32 %v2469, %v2534
    %v2599 = vadd.f32 %v2470, %v2535
    %v2600 = vadd.f32 %v2471, %v2536
    %v2601 = vadd.f32 %v2472, %v2537
    %v2602 = vadd.f32 %v2473, %v2538
    %v2603 = vadd.f32 %v2474, %v2539
    %v2604 = vlaneseq
    %v2605 = vshrl.u32 %v2604, 7
    %v2606 = vsub.s32 2, %v2605
    %v2607 = vrot.slane %v2273, %v2606
    %v2608 = vmul.f32 %v2607, 0.0
    %v2609 = vmul.f32 %v2014, %v2607
    %v2610 = vmul.f32 %v2015, %v2607
    %v2611 = vmul.f32 %v2016, %v2607
    %v2612 = vmul.f32 %v2017, %v2607
    %v2613 = vmul.f32 %v2018, %v2607
    %v2614 = vmul.f32 %v2019, %v2607
    %v2615 = vmul.f32 %v2020, %v2607
    %v2616 = vmul.f32 %v2021, %v2607
    %v2617 = vmul.f32 %v2022, %v2607
    %v2618 = vmul.f32 %v2023, %v2607
    %v2619 = vmul.f32 %v2024, %v2607
    %v2620 = vmul.f32 %v2025, %v2607
    %v2621 = vmul.f32 %v2026, %v2607
    %v2622 = vmul.f32 %v2027, %v2607
    %v2623 = vmul.f32 %v2028, %v2607
    %v2624 = vmul.f32 %v2029, %v2607
    %v2625 = vmul.f32 %v2030, %v2607
    %v2626 = vmul.f32 %v2031, %v2607
    %v2627 = vmul.f32 %v2032, %v2607
    %v2628 = vmul.f32 %v2033, %v2607
    %v2629 = vmul.f32 %v2034, %v2607
    %v2630 = vmul.f32 %v2035, %v2607
    %v2631 = vmul.f32 %v2036, %v2607
    %v2632 = vmul.f32 %v2037, %v2607
    %v2633 = vmul.f32 %v2038, %v2607
    %v2634 = vmul.f32 %v2039, %v2607
    %v2635 = vmul.f32 %v2040, %v2607
    %v2636 = vmul.f32 %v2041, %v2607
    %v2637 = vmul.f32 %v2042, %v2607
    %v2638 = vmul.f32 %v2043, %v2607
    %v2639 = vmul.f32 %v2046, %v2607
    %v2640 = vmul.f32 %v2047, %v2607
    %v2641 = vmul.f32 %v2048, %v2607
    %v2642 = vmul.f32 %v2049, %v2607
    %v2643 = vmul.f32 %v2050, %v2607
    %v2644 = vmul.f32 %v2051, %v2607
    %v2645 = vmul.f32 %v2052, %v2607
    %v2646 = vmul.f32 %v2053, %v2607
    %v2647 = vmul.f32 %v2054, %v2607
    %v2648 = vmul.f32 %v2055, %v2607
    %v2649 = vmul.f32 %v2056, %v2607
    %v2650 = vmul.f32 %v2057, %v2607
    %v2651 = vmul.f32 %v2058, %v2607
    %v2652 = vmul.f32 %v2059, %v2607
    %v2653 = vmul.f32 %v2060, %v2607
    %v2654 = vmul.f32 %v2061, %v2607
    %v2655 = vmul.f32 %v2062, %v2607
    %v2656 = vmul.f32 %v2063, %v2607
    %v2657 = vmul.f32 %v2064, %v2607
    %v2658 = vmul.f32 %v2065, %v2607
    %v2659 = vmul.f32 %v2066, %v2607
    %v2660 = vmul.f32 %v2067, %v2607
    %v2661 = vmul.f32 %v2068, %v2607
    %v2662 = vmul.f32 %v2069, %v2607
    %v2663 = vmul.f32 %v2070, %v2607
    %v2664 = vmul.f32 %v2071, %v2607
    %v2665 = vmul.f32 %v2072, %v2607
    %v2666 = vmul.f32 %v2073, %v2607
    %v2667 = vmul.f32 %v2074, %v2607
    %v2668 = vmul.f32 %v2075, %v2607
    %v2669 = vadd.f32 %v2540, %v2608
    %v2670 = vadd.f32 %v2541, %v2608
    %v2671 = vadd.f32 %v2542, %v2609
    %v2672 = vadd.f32 %v2543, %v2610
    %v2673 = vadd.f32 %v2544, %v2611
    %v2674 = vadd.f32 %v2545, %v2612
    %v2675 = vadd.f32 %v2546, %v2613
    %v2676 = vadd.f32 %v2547, %v2614
    %v2677 = vadd.f32 %v2548, %v2615
    %v2678 = vadd.f32 %v2549, %v2616
    %v2679 = vadd.f32 %v2550, %v2617
    %v2680 = vadd.f32 %v2551, %v2618
    %v2681 = vadd.f32 %v2552, %v2619
    %v2682 = vadd.f32 %v2553, %v2620
    %v2683 = vadd.f32 %v2554, %v2621
    %v2684 = vadd.f32 %v2555, %v2622
    %v2685 = vadd.f32 %v2556, %v2623
    %v2686 = vadd.f32 %v2557, %v2624
    %v2687 = vadd.f32 %v2558, %v2625
    %v2688 = vadd.f32 %v2559, %v2626
    %v2689 = vadd.f32 %v2560, %v2627
    %v2690 = vadd.f32 %v2561, %v2628
    %v2691 = vadd.f32 %v2562, %v2629
    %v2692 = vadd.f32 %v2563, %v2630
    %v2693 = vadd.f32 %v2564, %v2631
    %v2694 = vadd.f32 %v2565, %v2632
    %v2695 = vadd.f32 %v2566, %v2633
    %v2696 = vadd.f32 %v2567, %v2634
    %v2697 = vadd.f32 %v2568, %v2635
    %v2698 = vadd.f32 %v2569, %v2636
    %v2699 = vadd.f32 %v2570, %v2637
    %v2700 = vadd.f32 %v2571, %v2638
    %v2701 = vadd.f32 %v2572, %v2608
    %v2702 = vadd.f32 %v2573, %v2608
    %v2703 = vadd.f32 %v2574, %v2639
    %v2704 = vadd.f32 %v2575, %v2640
    %v2705 = vadd.f32 %v2576, %v2641
    %v2706 = vadd.f32 %v2577, %v2642
    %v2707 = vadd.f32 %v2578, %v2643
    %v2708 = vadd.f32 %v2579, %v2644
    %v2709 = vadd.f32 %v2580, %v2645
    %v2710 = vadd.f32 %v2581, %v2646
    %v2711 = vadd.f32 %v2582, %v2647
    %v2712 = vadd.f32 %v2583, %v2648
    %v2713 = vadd.f32 %v2584, %v2649
    %v2714 = vadd.f32 %v2585, %v2650
    %v2715 = vadd.f32 %v2586, %v2651
    %v2716 = vadd.f32 %v2587, %v2652
    %v2717 = vadd.f32 %v2588, %v2653
    %v2718 = vadd.f32 %v2589, %v2654
    %v2719 = vadd.f32 %v2590, %v2655
    %v2720 = vadd.f32 %v2591, %v2656
    %v2721 = vadd.f32 %v2592, %v2657
    %v2722 = vadd.f32 %v2593, %v2658
    %v2723 = vadd.f32 %v2594, %v2659
    %v2724 = vadd.f32 %v2595, %v2660
    %v2725 = vadd.f32 %v2596, %v2661
    %v2726 = vadd.f32 %v2597, %v2662
    %v2727 = vadd.f32 %v2598, %v2663
    %v2728 = vadd.f32 %v2599, %v2664
    %v2729 = vadd.f32 %v2600, %v2665
    %v2730 = vadd.f32 %v2601, %v2666
    %v2731 = vadd.f32 %v2602, %v2667
    %v2732 = vadd.f32 %v2603, %v2668
    %v2733 = vlaneseq
    %v2734 = vshrl.u32 %v2733, 7
    %v2735 = vsub.s32 3, %v2734
    %v2736 = vrot.slane %v2273, %v2735
    %v2737 = vmul.f32 %v2209, %v2736
    %v2738 = vmul.f32 %v2210, %v2736
    %v2739 = vmul.f32 %v2211, %v2736
    %v2740 = vmul.f32 %v2212, %v2736
    %v2741 = vmul.f32 %v2213, %v2736
    %v2742 = vmul.f32 %v2214, %v2736
    %v2743 = vmul.f32 %v2215, %v2736
    %v2744 = vmul.f32 %v2216, %v2736
    %v2745 = vmul.f32 %v2217, %v2736
    %v2746 = vmul.f32 %v2218, %v2736
    %v2747 = vmul.f32 %v2219, %v2736
    %v2748 = vmul.f32 %v2220, %v2736
    %v2749 = vmul.f32 %v2221, %v2736
    %v2750 = vmul.f32 %v2222, %v2736
    %v2751 = vmul.f32 %v2223, %v2736
    %v2752 = vmul.f32 %v2224, %v2736
    %v2753 = vmul.f32 %v2225, %v2736
    %v2754 = vmul.f32 %v2226, %v2736
    %v2755 = vmul.f32 %v2227, %v2736
    %v2756 = vmul.f32 %v2228, %v2736
    %v2757 = vmul.f32 %v2229, %v2736
    %v2758 = vmul.f32 %v2230, %v2736
    %v2759 = vmul.f32 %v2231, %v2736
    %v2760 = vmul.f32 %v2232, %v2736
    %v2761 = vmul.f32 %v2233, %v2736
    %v2762 = vmul.f32 %v2234, %v2736
    %v2763 = vmul.f32 %v2235, %v2736
    %v2764 = vmul.f32 %v2236, %v2736
    %v2765 = vmul.f32 %v2237, %v2736
    %v2766 = vmul.f32 %v2238, %v2736
    %v2767 = vmul.f32 %v2239, %v2736
    %v2768 = vmul.f32 %v2240, %v2736
    %v2769 = vmul.f32 %v2241, %v2736
    %v2770 = vmul.f32 %v2242, %v2736
    %v2771 = vmul.f32 %v2243, %v2736
    %v2772 = vmul.f32 %v2244, %v2736
    %v2773 = vmul.f32 %v2245, %v2736
    %v2774 = vmul.f32 %v2246, %v2736
    %v2775 = vmul.f32 %v2247, %v2736
    %v2776 = vmul.f32 %v2248, %v2736
    %v2777 = vmul.f32 %v2249, %v2736
    %v2778 = vmul.f32 %v2250, %v2736
    %v2779 = vmul.f32 %v2251, %v2736
    %v2780 = vmul.f32 %v2252, %v2736
    %v2781 = vmul.f32 %v2253, %v2736
    %v2782 = vmul.f32 %v2254, %v2736
    %v2783 = vmul.f32 %v2255, %v2736
    %v2784 = vmul.f32 %v2256, %v2736
    %v2785 = vmul.f32 %v2257, %v2736
    %v2786 = vmul.f32 %v2258, %v2736
    %v2787 = vmul.f32 %v2259, %v2736
    %v2788 = vmul.f32 %v2260, %v2736
    %v2789 = vmul.f32 %v2261, %v2736
    %v2790 = vmul.f32 %v2262, %v2736
    %v2791 = vmul.f32 %v2263, %v2736
    %v2792 = vmul.f32 %v2264, %v2736
    %v2793 = vmul.f32 %v2265, %v2736
    %v2794 = vmul.f32 %v2266, %v2736
    %v2795 = vmul.f32 %v2267, %v2736
    %v2796 = vmul.f32 %v2268, %v2736
    %v2797 = vmul.f32 %v2269, %v2736
    %v2798 = vmul.f32 %v2270, %v2736
    %v2799 = vmul.f32 %v2271, %v2736
    %v2800 = vmul.f32 %v2272, %v2736
    %v2801 = vadd.f32 %v2669, %v2737
    %v2802 = vadd.f32 %v2670, %v2738
    %v2803 = vadd.f32 %v2671, %v2739
    %v2804 = vadd.f32 %v2672, %v2740
    %v2805 = vadd.f32 %v2673, %v2741
    %v2806 = vadd.f32 %v2674, %v2742
    %v2807 = vadd.f32 %v2675, %v2743
    %v2808 = vadd.f32 %v2676, %v2744
    %v2809 = vadd.f32 %v2677, %v2745
    %v2810 = vadd.f32 %v2678, %v2746
    %v2811 = vadd.f32 %v2679, %v2747
    %v2812 = vadd.f32 %v2680, %v2748
    %v2813 = vadd.f32 %v2681, %v2749
    %v2814 = vadd.f32 %v2682, %v2750
    %v2815 = vadd.f32 %v2683, %v2751
    %v2816 = vadd.f32 %v2684, %v2752
    %v2817 = vadd.f32 %v2685, %v2753
    %v2818 = vadd.f32 %v2686, %v2754
    %v2819 = vadd.f32 %v2687, %v2755
    %v2820 = vadd.f32 %v2688, %v2756
    %v2821 = vadd.f32 %v2689, %v2757
    %v2822 = vadd.f32 %v2690, %v2758
    %v2823 = vadd.f32 %v2691, %v2759
    %v2824 = vadd.f32 %v2692, %v2760
    %v2825 = vadd.f32 %v2693, %v2761
    %v2826 = vadd.f32 %v2694, %v2762
    %v2827 = vadd.f32 %v2695, %v2763
    %v2828 = vadd.f32 %v2696, %v2764
    %v2829 = vadd.f32 %v2697, %v2765
    %v2830 = vadd.f32 %v2698, %v2766
    %v2831 = vadd.f32 %v2699, %v2767
    %v2832 = vadd.f32 %v2700, %v2768
    %v2833 = vadd.f32 %v2701, %v2769
    %v2834 = vadd.f32 %v2702, %v2770
    %v2835 = vadd.f32 %v2703, %v2771
    %v2836 = vadd.f32 %v2704, %v2772
    %v2837 = vadd.f32 %v2705, %v2773
    %v2838 = vadd.f32 %v2706, %v2774
    %v2839 = vadd.f32 %v2707, %v2775
    %v2840 = vadd.f32 %v2708, %v2776
    %v2841 = vadd.f32 %v2709, %v2777
    %v2842 = vadd.f32 %v2710, %v2778
    %v2843 = vadd.f32 %v2711, %v2779
    %v2844 = vadd.f32 %v2712, %v2780
    %v2845 = vadd.f32 %v2713, %v2781
    %v2846 = vadd.f32 %v2714, %v2782
    %v2847 = vadd.f32 %v2715, %v2783
    %v2848 = vadd.f32 %v2716, %v2784
    %v2849 = vadd.f32 %v2717, %v2785
    %v2850 = vadd.f32 %v2718, %v2786
    %v2851 = vadd.f32 %v2719, %v2787
    %v2852 = vadd.f32 %v2720, %v2788
    %v2853 = vadd.f32 %v2721, %v2789
    %v2854 = vadd.f32 %v2722, %v2790
    %v2855 = vadd.f32 %v2723, %v2791
    %v2856 = vadd.f32 %v2724, %v2792
    %v2857 = vadd.f32 %v2725, %v2793
    %v2858 = vadd.f32 %v2726, %v2794
    %v2859 = vadd.f32 %v2727, %v2795
    %v2860 = vadd.f32 %v2728, %v2796
    %v2861 = vadd.f32 %v2729, %v2797
    %v2862 = vadd.f32 %v2730, %v2798
    %v2863 = vadd.f32 %v2731, %v2799
    %v2864 = vadd.f32 %v2732, %v2800
    %v2865 = vlaneseq
    %v2866 = vshrl.u32 %v2865, 7
    %v2867 = vsub.s32 4, %v2866
    %v2868 = vrot.slane %v2273, %v2867
    %v2869 = vmul.f32 %v1816, %v2868
    %v2870 = vmul.f32 %v1817, %v2868
    %v2871 = vmul.f32 %v1818, %v2868
    %v2872 = vmul.f32 %v1819, %v2868
    %v2873 = vmul.f32 %v1820, %v2868
    %v2874 = vmul.f32 %v1821, %v2868
    %v2875 = vmul.f32 %v1822, %v2868
    %v2876 = vmul.f32 %v1823, %v2868
    %v2877 = vmul.f32 %v1824, %v2868
    %v2878 = vmul.f32 %v1825, %v2868
    %v2879 = vmul.f32 %v1826, %v2868
    %v2880 = vmul.f32 %v1827, %v2868
    %v2881 = vmul.f32 %v1828, %v2868
    %v2882 = vmul.f32 %v1829, %v2868
    %v2883 = vmul.f32 %v1830, %v2868
    %v2884 = vmul.f32 %v1831, %v2868
    %v2885 = vmul.f32 %v1832, %v2868
    %v2886 = vmul.f32 %v1833, %v2868
    %v2887 = vmul.f32 %v1834, %v2868
    %v2888 = vmul.f32 %v1835, %v2868
    %v2889 = vmul.f32 %v1836, %v2868
    %v2890 = vmul.f32 %v1837, %v2868
    %v2891 = vmul.f32 %v1838, %v2868
    %v2892 = vmul.f32 %v1839, %v2868
    %v2893 = vmul.f32 %v1840, %v2868
    %v2894 = vmul.f32 %v1841, %v2868
    %v2895 = vmul.f32 %v1842, %v2868
    %v2896 = vmul.f32 %v1843, %v2868
    %v2897 = vmul.f32 %v1844, %v2868
    %v2898 = vmul.f32 %v1845, %v2868
    %v2899 = vmul.f32 %v1846, %v2868
    %v2900 = vmul.f32 %v1847, %v2868
    %v2901 = vmul.f32 %v1848, %v2868
    %v2902 = vmul.f32 %v1849, %v2868
    %v2903 = vmul.f32 %v1850, %v2868
    %v2904 = vmul.f32 %v1851, %v2868
    %v2905 = vmul.f32 %v1852, %v2868
    %v2906 = vmul.f32 %v1853, %v2868
    %v2907 = vmul.f32 %v1854, %v2868
    %v2908 = vmul.f32 %v1855, %v2868
    %v2909 = vmul.f32 %v1856, %v2868
    %v2910 = vmul.f32 %v1857, %v2868
    %v2911 = vmul.f32 %v1858, %v2868
    %v2912 = vmul.f32 %v1859, %v2868
    %v2913 = vmul.f32 %v1860, %v2868
    %v2914 = vmul.f32 %v1861, %v2868
    %v2915 = vmul.f32 %v1862, %v2868
    %v2916 = vmul.f32 %v1863, %v2868
    %v2917 = vmul.f32 %v1864, %v2868
    %v2918 = vmul.f32 %v1865, %v2868
    %v2919 = vmul.f32 %v1866, %v2868
    %v2920 = vmul.f32 %v1867, %v2868
    %v2921 = vmul.f32 %v1868, %v2868
    %v2922 = vmul.f32 %v1869, %v2868
    %v2923 = vmul.f32 %v1870, %v2868
    %v2924 = vmul.f32 %v1871, %v2868
    %v2925 = vmul.f32 %v1872, %v2868
    %v2926 = vmul.f32 %v1873, %v2868
    %v2927 = vmul.f32 %v1874, %v2868
    %v2928 = vmul.f32 %v1875, %v2868
    %v2929 = vmul.f32 %v1876, %v2868
    %v2930 = vmul.f32 %v1877, %v2868
    %v2931 = vmul.f32 %v1878, %v2868
    %v2932 = vmul.f32 %v1879, %v2868
    %v2933 = vadd.f32 %v2801, %v2869
    %v2934 = vadd.f32 %v2802, %v2870
    %v2935 = vadd.f32 %v2803, %v2871
    %v2936 = vadd.f32 %v2804, %v2872
    %v2937 = vadd.f32 %v2805, %v2873
    %v2938 = vadd.f32 %v2806, %v2874
    %v2939 = vadd.f32 %v2807, %v2875
    %v2940 = vadd.f32 %v2808, %v2876
    %v2941 = vadd.f32 %v2809, %v2877
    %v2942 = vadd.f32 %v2810, %v2878
    %v2943 = vadd.f32 %v2811, %v2879
    %v2944 = vadd.f32 %v2812, %v2880
    %v2945 = vadd.f32 %v2813, %v2881
    %v2946 = vadd.f32 %v2814, %v2882
    %v2947 = vadd.f32 %v2815, %v2883
    %v2948 = vadd.f32 %v2816, %v2884
    %v2949 = vadd.f32 %v2817, %v2885
    %v2950 = vadd.f32 %v2818, %v2886
    %v2951 = vadd.f32 %v2819, %v2887
    %v2952 = vadd.f32 %v2820, %v2888
    %v2953 = vadd.f32 %v2821, %v2889
    %v2954 = vadd.f32 %v2822, %v2890
    %v2955 = vadd.f32 %v2823, %v2891
    %v2956 = vadd.f32 %v2824, %v2892
    %v2957 = vadd.f32 %v2825, %v2893
    %v2958 = vadd.f32 %v2826, %v2894
    %v2959 = vadd.f32 %v2827, %v2895
    %v2960 = vadd.f32 %v2828, %v2896
    %v2961 = vadd.f32 %v2829, %v2897
    %v2962 = vadd.f32 %v2830, %v2898
    %v2963 = vadd.f32 %v2831, %v2899
    %v2964 = vadd.f32 %v2832, %v2900
    %v2965 = vadd.f32 %v2833, %v2901
    %v2966 = vadd.f32 %v2834, %v2902
    %v2967 = vadd.f32 %v2835, %v2903
    %v2968 = vadd.f32 %v2836, %v2904
    %v2969 = vadd.f32 %v2837, %v2905
    %v2970 = vadd.f32 %v2838, %v2906
    %v2971 = vadd.f32 %v2839, %v2907
    %v2972 = vadd.f32 %v2840, %v2908
    %v2973 = vadd.f32 %v2841, %v2909
    %v2974 = vadd.f32 %v2842, %v2910
    %v2975 = vadd.f32 %v2843, %v2911
    %v2976 = vadd.f32 %v2844, %v2912
    %v2977 = vadd.f32 %v2845, %v2913
    %v2978 = vadd.f32 %v2846, %v2914
    %v2979 = vadd.f32 %v2847, %v2915
    %v2980 = vadd.f32 %v2848, %v2916
    %v2981 = vadd.f32 %v2849, %v2917
    %v2982 = vadd.f32 %v2850, %v2918
    %v2983 = vadd.f32 %v2851, %v2919
    %v2984 = vadd.f32 %v2852, %v2920
    %v2985 = vadd.f32 %v2853, %v2921
    %v2986 = vadd.f32 %v2854, %v2922
    %v2987 = vadd.f32 %v2855, %v2923
    %v2988 = vadd.f32 %v2856, %v2924
    %v2989 = vadd.f32 %v2857, %v2925
    %v2990 = vadd.f32 %v2858, %v2926
    %v2991 = vadd.f32 %v2859, %v2927
    %v2992 = vadd.f32 %v2860, %v2928
    %v2993 = vadd.f32 %v2861, %v2929
    %v2994 = vadd.f32 %v2862, %v2930
    %v2995 = vadd.f32 %v2863, %v2931
    %v2996 = vadd.f32 %v2864, %v2932
    %v2997 = vlaneseq
    %v2998 = vshrl.u32 %v2997, 7
    %v2999 = vsub.s32 5, %v2998
    %v3000 = vrot.slane %v2273, %v2999
    %v3001 = vmul.f32 %v2014, %v3000
    %v3002 = vmul.f32 %v2015, %v3000
    %v3003 = vmul.f32 %v2016, %v3000
    %v3004 = vmul.f32 %v2017, %v3000
    %v3005 = vmul.f32 %v2018, %v3000
    %v3006 = vmul.f32 %v2019, %v3000
    %v3007 = vmul.f32 %v2020, %v3000
    %v3008 = vmul.f32 %v2021, %v3000
    %v3009 = vmul.f32 %v2022, %v3000
    %v3010 = vmul.f32 %v2023, %v3000
    %v3011 = vmul.f32 %v2024, %v3000
    %v3012 = vmul.f32 %v2025, %v3000
    %v3013 = vmul.f32 %v2026, %v3000
    %v3014 = vmul.f32 %v2027, %v3000
    %v3015 = vmul.f32 %v2028, %v3000
    %v3016 = vmul.f32 %v2029, %v3000
    %v3017 = vmul.f32 %v2030, %v3000
    %v3018 = vmul.f32 %v2031, %v3000
    %v3019 = vmul.f32 %v2032, %v3000
    %v3020 = vmul.f32 %v2033, %v3000
    %v3021 = vmul.f32 %v2034, %v3000
    %v3022 = vmul.f32 %v2035, %v3000
    %v3023 = vmul.f32 %v2036, %v3000
    %v3024 = vmul.f32 %v2037, %v3000
    %v3025 = vmul.f32 %v2038, %v3000
    %v3026 = vmul.f32 %v2039, %v3000
    %v3027 = vmul.f32 %v2040, %v3000
    %v3028 = vmul.f32 %v2041, %v3000
    %v3029 = vmul.f32 %v2042, %v3000
    %v3030 = vmul.f32 %v2043, %v3000
    %v3031 = vmul.f32 %v2044, %v3000
    %v3032 = vmul.f32 %v2045, %v3000
    %v3033 = vmul.f32 %v2046, %v3000
    %v3034 = vmul.f32 %v2047, %v3000
    %v3035 = vmul.f32 %v2048, %v3000
    %v3036 = vmul.f32 %v2049, %v3000
    %v3037 = vmul.f32 %v2050, %v3000
    %v3038 = vmul.f32 %v2051, %v3000
    %v3039 = vmul.f32 %v2052, %v3000
    %v3040 = vmul.f32 %v2053, %v3000
    %v3041 = vmul.f32 %v2054, %v3000
    %v3042 = vmul.f32 %v2055, %v3000
    %v3043 = vmul.f32 %v2056, %v3000
    %v3044 = vmul.f32 %v2057, %v3000
    %v3045 = vmul.f32 %v2058, %v3000
    %v3046 = vmul.f32 %v2059, %v3000
    %v3047 = vmul.f32 %v2060, %v3000
    %v3048 = vmul.f32 %v2061, %v3000
    %v3049 = vmul.f32 %v2062, %v3000
    %v3050 = vmul.f32 %v2063, %v3000
    %v3051 = vmul.f32 %v2064, %v3000
    %v3052 = vmul.f32 %v2065, %v3000
    %v3053 = vmul.f32 %v2066, %v3000
    %v3054 = vmul.f32 %v2067, %v3000
    %v3055 = vmul.f32 %v2068, %v3000
    %v3056 = vmul.f32 %v2069, %v3000
    %v3057 = vmul.f32 %v2070, %v3000
    %v3058 = vmul.f32 %v2071, %v3000
    %v3059 = vmul.f32 %v2072, %v3000
    %v3060 = vmul.f32 %v2073, %v3000
    %v3061 = vmul.f32 %v2074, %v3000
    %v3062 = vmul.f32 %v2075, %v3000
    %v3063 = vmul.f32 %v2076, %v3000
    %v3064 = vmul.f32 %v2077, %v3000
    %v3065 = vadd.f32 %v2933, %v3001
    %v3066 = vadd.f32 %v2934, %v3002
    %v3067 = vadd.f32 %v2935, %v3003
    %v3068 = vadd.f32 %v2936, %v3004
    %v3069 = vadd.f32 %v2937, %v3005
    %v3070 = vadd.f32 %v2938, %v3006
    %v3071 = vadd.f32 %v2939, %v3007
    %v3072 = vadd.f32 %v2940, %v3008
    %v3073 = vadd.f32 %v2941, %v3009
    %v3074 = vadd.f32 %v2942, %v3010
    %v3075 = vadd.f32 %v2943, %v3011
    %v3076 = vadd.f32 %v2944, %v3012
    %v3077 = vadd.f32 %v2945, %v3013
    %v3078 = vadd.f32 %v2946, %v3014
    %v3079 = vadd.f32 %v2947, %v3015
    %v3080 = vadd.f32 %v2948, %v3016
    %v3081 = vadd.f32 %v2949, %v3017
    %v3082 = vadd.f32 %v2950, %v3018
    %v3083 = vadd.f32 %v2951, %v3019
    %v3084 = vadd.f32 %v2952, %v3020
    %v3085 = vadd.f32 %v2953, %v3021
    %v3086 = vadd.f32 %v2954, %v3022
    %v3087 = vadd.f32 %v2955, %v3023
    %v3088 = vadd.f32 %v2956, %v3024
    %v3089 = vadd.f32 %v2957, %v3025
    %v3090 = vadd.f32 %v2958, %v3026
    %v3091 = vadd.f32 %v2959, %v3027
    %v3092 = vadd.f32 %v2960, %v3028
    %v3093 = vadd.f32 %v2961, %v3029
    %v3094 = vadd.f32 %v2962, %v3030
    %v3095 = vadd.f32 %v2963, %v3031
    %v3096 = vadd.f32 %v2964, %v3032
    %v3097 = vadd.f32 %v2965, %v3033
    %v3098 = vadd.f32 %v2966, %v3034
    %v3099 = vadd.f32 %v2967, %v3035
    %v3100 = vadd.f32 %v2968, %v3036
    %v3101 = vadd.f32 %v2969, %v3037
    %v3102 = vadd.f32 %v2970, %v3038
    %v3103 = vadd.f32 %v2971, %v3039
    %v3104 = vadd.f32 %v2972, %v3040
    %v3105 = vadd.f32 %v2973, %v3041
    %v3106 = vadd.f32 %v2974, %v3042
    %v3107 = vadd.f32 %v2975, %v3043
    %v3108 = vadd.f32 %v2976, %v3044
    %v3109 = vadd.f32 %v2977, %v3045
    %v3110 = vadd.f32 %v2978, %v3046
    %v3111 = vadd.f32 %v2979, %v3047
    %v3112 = vadd.f32 %v2980, %v3048
    %v3113 = vadd.f32 %v2981, %v3049
    %v3114 = vadd.f32 %v2982, %v3050
    %v3115 = vadd.f32 %v2983, %v3051
    %v3116 = vadd.f32 %v2984, %v3052
    %v3117 = vadd.f32 %v2985, %v3053
    %v3118 = vadd.f32 %v2986, %v3054
    %v3119 = vadd.f32 %v2987, %v3055
    %v3120 = vadd.f32 %v2988, %v3056
    %v3121 = vadd.f32 %v2989, %v3057
    %v3122 = vadd.f32 %v2990, %v3058
    %v3123 = vadd.f32 %v2991, %v3059
    %v3124 = vadd.f32 %v2992, %v3060
    %v3125 = vadd.f32 %v2993, %v3061
    %v3126 = vadd.f32 %v2994, %v3062
    %v3127 = vadd.f32 %v2995, %v3063
    %v3128 = vadd.f32 %v2996, %v3064
    %v3129 = vlaneseq
    %v3130 = vshrl.u32 %v3129, 7
    %v3131 = vsub.s32 6, %v3130
    %v3132 = vrot.slane %v2273, %v3131
    %v3133 = vmul.f32 %v2211, %v3132
    %v3134 = vmul.f32 %v2212, %v3132
    %v3135 = vmul.f32 %v2213, %v3132
    %v3136 = vmul.f32 %v2214, %v3132
    %v3137 = vmul.f32 %v2215, %v3132
    %v3138 = vmul.f32 %v2216, %v3132
    %v3139 = vmul.f32 %v2217, %v3132
    %v3140 = vmul.f32 %v2218, %v3132
    %v3141 = vmul.f32 %v2219, %v3132
    %v3142 = vmul.f32 %v2220, %v3132
    %v3143 = vmul.f32 %v2221, %v3132
    %v3144 = vmul.f32 %v2222, %v3132
    %v3145 = vmul.f32 %v2223, %v3132
    %v3146 = vmul.f32 %v2224, %v3132
    %v3147 = vmul.f32 %v2225, %v3132
    %v3148 = vmul.f32 %v2226, %v3132
    %v3149 = vmul.f32 %v2227, %v3132
    %v3150 = vmul.f32 %v2228, %v3132
    %v3151 = vmul.f32 %v2229, %v3132
    %v3152 = vmul.f32 %v2230, %v3132
    %v3153 = vmul.f32 %v2231, %v3132
    %v3154 = vmul.f32 %v2232, %v3132
    %v3155 = vmul.f32 %v2233, %v3132
    %v3156 = vmul.f32 %v2234, %v3132
    %v3157 = vmul.f32 %v2235, %v3132
    %v3158 = vmul.f32 %v2236, %v3132
    %v3159 = vmul.f32 %v2237, %v3132
    %v3160 = vmul.f32 %v2238, %v3132
    %v3161 = vmul.f32 %v2239, %v3132
    %v3162 = vmul.f32 %v2240, %v3132
    %v3163 = vmul.f32 %v3132, 0.0
    %v3164 = vmul.f32 %v2243, %v3132
    %v3165 = vmul.f32 %v2244, %v3132
    %v3166 = vmul.f32 %v2245, %v3132
    %v3167 = vmul.f32 %v2246, %v3132
    %v3168 = vmul.f32 %v2247, %v3132
    %v3169 = vmul.f32 %v2248, %v3132
    %v3170 = vmul.f32 %v2249, %v3132
    %v3171 = vmul.f32 %v2250, %v3132
    %v3172 = vmul.f32 %v2251, %v3132
    %v3173 = vmul.f32 %v2252, %v3132
    %v3174 = vmul.f32 %v2253, %v3132
    %v3175 = vmul.f32 %v2254, %v3132
    %v3176 = vmul.f32 %v2255, %v3132
    %v3177 = vmul.f32 %v2256, %v3132
    %v3178 = vmul.f32 %v2257, %v3132
    %v3179 = vmul.f32 %v2258, %v3132
    %v3180 = vmul.f32 %v2259, %v3132
    %v3181 = vmul.f32 %v2260, %v3132
    %v3182 = vmul.f32 %v2261, %v3132
    %v3183 = vmul.f32 %v2262, %v3132
    %v3184 = vmul.f32 %v2263, %v3132
    %v3185 = vmul.f32 %v2264, %v3132
    %v3186 = vmul.f32 %v2265, %v3132
    %v3187 = vmul.f32 %v2266, %v3132
    %v3188 = vmul.f32 %v2267, %v3132
    %v3189 = vmul.f32 %v2268, %v3132
    %v3190 = vmul.f32 %v2269, %v3132
    %v3191 = vmul.f32 %v2270, %v3132
    %v3192 = vmul.f32 %v2271, %v3132
    %v3193 = vmul.f32 %v2272, %v3132
    %v3194 = vadd.f32 %v3065, %v3133
    %v3195 = vadd.f32 %v3066, %v3134
    %v3196 = vadd.f32 %v3067, %v3135
    %v3197 = vadd.f32 %v3068, %v3136
    %v3198 = vadd.f32 %v3069, %v3137
    %v3199 = vadd.f32 %v3070, %v3138
    %v3200 = vadd.f32 %v3071, %v3139
    %v3201 = vadd.f32 %v3072, %v3140
    %v3202 = vadd.f32 %v3073, %v3141
    %v3203 = vadd.f32 %v3074, %v3142
    %v3204 = vadd.f32 %v3075, %v3143
    %v3205 = vadd.f32 %v3076, %v3144
    %v3206 = vadd.f32 %v3077, %v3145
    %v3207 = vadd.f32 %v3078, %v3146
    %v3208 = vadd.f32 %v3079, %v3147
    %v3209 = vadd.f32 %v3080, %v3148
    %v3210 = vadd.f32 %v3081, %v3149
    %v3211 = vadd.f32 %v3082, %v3150
    %v3212 = vadd.f32 %v3083, %v3151
    %v3213 = vadd.f32 %v3084, %v3152
    %v3214 = vadd.f32 %v3085, %v3153
    %v3215 = vadd.f32 %v3086, %v3154
    %v3216 = vadd.f32 %v3087, %v3155
    %v3217 = vadd.f32 %v3088, %v3156
    %v3218 = vadd.f32 %v3089, %v3157
    %v3219 = vadd.f32 %v3090, %v3158
    %v3220 = vadd.f32 %v3091, %v3159
    %v3221 = vadd.f32 %v3092, %v3160
    %v3222 = vadd.f32 %v3093, %v3161
    %v3223 = vadd.f32 %v3094, %v3162
    %v3224 = vadd.f32 %v3095, %v3163
    %v3225 = vadd.f32 %v3096, %v3163
    %v3226 = vadd.f32 %v3097, %v3164
    %v3227 = vadd.f32 %v3098, %v3165
    %v3228 = vadd.f32 %v3099, %v3166
    %v3229 = vadd.f32 %v3100, %v3167
    %v3230 = vadd.f32 %v3101, %v3168
    %v3231 = vadd.f32 %v3102, %v3169
    %v3232 = vadd.f32 %v3103, %v3170
    %v3233 = vadd.f32 %v3104, %v3171
    %v3234 = vadd.f32 %v3105, %v3172
    %v3235 = vadd.f32 %v3106, %v3173
    %v3236 = vadd.f32 %v3107, %v3174
    %v3237 = vadd.f32 %v3108, %v3175
    %v3238 = vadd.f32 %v3109, %v3176
    %v3239 = vadd.f32 %v3110, %v3177
    %v3240 = vadd.f32 %v3111, %v3178
    %v3241 = vadd.f32 %v3112, %v3179
    %v3242 = vadd.f32 %v3113, %v3180
    %v3243 = vadd.f32 %v3114, %v3181
    %v3244 = vadd.f32 %v3115, %v3182
    %v3245 = vadd.f32 %v3116, %v3183
    %v3246 = vadd.f32 %v3117, %v3184
    %v3247 = vadd.f32 %v3118, %v3185
    %v3248 = vadd.f32 %v3119, %v3186
    %v3249 = vadd.f32 %v3120, %v3187
    %v3250 = vadd.f32 %v3121, %v3188
    %v3251 = vadd.f32 %v3122, %v3189
    %v3252 = vadd.f32 %v3123, %v3190
    %v3253 = vadd.f32 %v3124, %v3191
    %v3254 = vadd.f32 %v3125, %v3192
    %v3255 = vadd.f32 %v3126, %v3193
    %v3256 = vadd.f32 %v3127, %v3163
    %v3257 = vadd.f32 %v3128, %v3163
    %v3258 = vlaneseq
    %v3259 = vshrl.u32 %v3258, 7
    %v3260 = vsub.s32 7, %v3259
    %v3261 = vrot.slane %v2273, %v3260
    %v3262 = vmul.f32 %v1818, %v3261
    %v3263 = vmul.f32 %v1819, %v3261
    %v3264 = vmul.f32 %v1820, %v3261
    %v3265 = vmul.f32 %v1821, %v3261
    %v3266 = vmul.f32 %v1822, %v3261
    %v3267 = vmul.f32 %v1823, %v3261
    %v3268 = vmul.f32 %v1824, %v3261
    %v3269 = vmul.f32 %v1825, %v3261
    %v3270 = vmul.f32 %v1826, %v3261
    %v3271 = vmul.f32 %v1827, %v3261
    %v3272 = vmul.f32 %v1828, %v3261
    %v3273 = vmul.f32 %v1829, %v3261
    %v3274 = vmul.f32 %v1830, %v3261
    %v3275 = vmul.f32 %v1831, %v3261
    %v3276 = vmul.f32 %v1832, %v3261
    %v3277 = vmul.f32 %v1833, %v3261
    %v3278 = vmul.f32 %v1834, %v3261
    %v3279 = vmul.f32 %v1835, %v3261
    %v3280 = vmul.f32 %v1836, %v3261
    %v3281 = vmul.f32 %v1837, %v3261
    %v3282 = vmul.f32 %v1838, %v3261
    %v3283 = vmul.f32 %v1839, %v3261
    %v3284 = vmul.f32 %v1840, %v3261
    %v3285 = vmul.f32 %v1841, %v3261
    %v3286 = vmul.f32 %v1842, %v3261
    %v3287 = vmul.f32 %v1843, %v3261
    %v3288 = vmul.f32 %v1844, %v3261
    %v3289 = vmul.f32 %v1845, %v3261
    %v3290 = vmul.f32 %v1846, %v3261
    %v3291 = vmul.f32 %v1847, %v3261
    %v3292 = vmul.f32 %v3261, 0.0
    %v3293 = vmul.f32 %v1850, %v3261
    %v3294 = vmul.f32 %v1851, %v3261
    %v3295 = vmul.f32 %v1852, %v3261
    %v3296 = vmul.f32 %v1853, %v3261
    %v3297 = vmul.f32 %v1854, %v3261
    %v3298 = vmul.f32 %v1855, %v3261
    %v3299 = vmul.f32 %v1856, %v3261
    %v3300 = vmul.f32 %v1857, %v3261
    %v3301 = vmul.f32 %v1858, %v3261
    %v3302 = vmul.f32 %v1859, %v3261
    %v3303 = vmul.f32 %v1860, %v3261
    %v3304 = vmul.f32 %v1861, %v3261
    %v3305 = vmul.f32 %v1862, %v3261
    %v3306 = vmul.f32 %v1863, %v3261
    %v3307 = vmul.f32 %v1864, %v3261
    %v3308 = vmul.f32 %v1865, %v3261
    %v3309 = vmul.f32 %v1866, %v3261
    %v3310 = vmul.f32 %v1867, %v3261
    %v3311 = vmul.f32 %v1868, %v3261
    %v3312 = vmul.f32 %v1869, %v3261
    %v3313 = vmul.f32 %v1870, %v3261
    %v3314 = vmul.f32 %v1871, %v3261
    %v3315 = vmul.f32 %v1872, %v3261
    %v3316 = vmul.f32 %v1873, %v3261
    %v3317 = vmul.f32 %v1874, %v3261
    %v3318 = vmul.f32 %v1875, %v3261
    %v3319 = vmul.f32 %v1876, %v3261
    %v3320 = vmul.f32 %v1877, %v3261
    %v3321 = vmul.f32 %v1878, %v3261
    %v3322 = vmul.f32 %v1879, %v3261
    %v3323 = vadd.f32 %v3194, %v3262
    %v3324 = vadd.f32 %v3195, %v3263
    %v3325 = vadd.f32 %v3196, %v3264
    %v3326 = vadd.f32 %v3197, %v3265
    %v3327 = vadd.f32 %v3198, %v3266
    %v3328 = vadd.f32 %v3199, %v3267
    %v3329 = vadd.f32 %v3200, %v3268
    %v3330 = vadd.f32 %v3201, %v3269
    %v3331 = vadd.f32 %v3202, %v3270
    %v3332 = vadd.f32 %v3203, %v3271
    %v3333 = vadd.f32 %v3204, %v3272
    %v3334 = vadd.f32 %v3205, %v3273
    %v3335 = vadd.f32 %v3206, %v3274
    %v3336 = vadd.f32 %v3207, %v3275
    %v3337 = vadd.f32 %v3208, %v3276
    %v3338 = vadd.f32 %v3209, %v3277
    %v3339 = vadd.f32 %v3210, %v3278
    %v3340 = vadd.f32 %v3211, %v3279
    %v3341 = vadd.f32 %v3212, %v3280
    %v3342 = vadd.f32 %v3213, %v3281
    %v3343 = vadd.f32 %v3214, %v3282
    %v3344 = vadd.f32 %v3215, %v3283
    %v3345 = vadd.f32 %v3216, %v3284
    %v3346 = vadd.f32 %v3217, %v3285
    %v3347 = vadd.f32 %v3218, %v3286
    %v3348 = vadd.f32 %v3219, %v3287
    %v3349 = vadd.f32 %v3220, %v3288
    %v3350 = vadd.f32 %v3221, %v3289
    %v3351 = vadd.f32 %v3222, %v3290
    %v3352 = vadd.f32 %v3223, %v3291
    %v3353 = vadd.f32 %v3224, %v3292
    %v3354 = vadd.f32 %v3225, %v3292
    %v3355 = vadd.f32 %v3226, %v3293
    %v3356 = vadd.f32 %v3227, %v3294
    %v3357 = vadd.f32 %v3228, %v3295
    %v3358 = vadd.f32 %v3229, %v3296
    %v3359 = vadd.f32 %v3230, %v3297
    %v3360 = vadd.f32 %v3231, %v3298
    %v3361 = vadd.f32 %v3232, %v3299
    %v3362 = vadd.f32 %v3233, %v3300
    %v3363 = vadd.f32 %v3234, %v3301
    %v3364 = vadd.f32 %v3235, %v3302
    %v3365 = vadd.f32 %v3236, %v3303
    %v3366 = vadd.f32 %v3237, %v3304
    %v3367 = vadd.f32 %v3238, %v3305
    %v3368 = vadd.f32 %v3239, %v3306
    %v3369 = vadd.f32 %v3240, %v3307
    %v3370 = vadd.f32 %v3241, %v3308
    %v3371 = vadd.f32 %v3242, %v3309
    %v3372 = vadd.f32 %v3243, %v3310
    %v3373 = vadd.f32 %v3244, %v3311
    %v3374 = vadd.f32 %v3245, %v3312
    %v3375 = vadd.f32 %v3246, %v3313
    %v3376 = vadd.f32 %v3247, %v3314
    %v3377 = vadd.f32 %v3248, %v3315
    %v3378 = vadd.f32 %v3249, %v3316
    %v3379 = vadd.f32 %v3250, %v3317
    %v3380 = vadd.f32 %v3251, %v3318
    %v3381 = vadd.f32 %v3252, %v3319
    %v3382 = vadd.f32 %v3253, %v3320
    %v3383 = vadd.f32 %v3254, %v3321
    %v3384 = vadd.f32 %v3255, %v3322
    %v3385 = vadd.f32 %v3256, %v3292
    %v3386 = vadd.f32 %v3257, %v3292
    %v3387 = vlaneseq
    %v3388 = vshrl.u32 %v3387, 7
    %v3389 = vsub.s32 0, %v3388
    %v3390 = vrot.slane %v2274, %v3389
    %v3391 = vmul.f32 %v2016, %v3390
    %v3392 = vmul.f32 %v2017, %v3390
    %v3393 = vmul.f32 %v2018, %v3390
    %v3394 = vmul.f32 %v2019, %v3390
    %v3395 = vmul.f32 %v2020, %v3390
    %v3396 = vmul.f32 %v2021, %v3390
    %v3397 = vmul.f32 %v2022, %v3390
    %v3398 = vmul.f32 %v2023, %v3390
    %v3399 = vmul.f32 %v2024, %v3390
    %v3400 = vmul.f32 %v2025, %v3390
    %v3401 = vmul.f32 %v2026, %v3390
    %v3402 = vmul.f32 %v2027, %v3390
    %v3403 = vmul.f32 %v2028, %v3390
    %v3404 = vmul.f32 %v2029, %v3390
    %v3405 = vmul.f32 %v2030, %v3390
    %v3406 = vmul.f32 %v2031, %v3390
    %v3407 = vmul.f32 %v2032, %v3390
    %v3408 = vmul.f32 %v2033, %v3390
    %v3409 = vmul.f32 %v2034, %v3390
    %v3410 = vmul.f32 %v2035, %v3390
    %v3411 = vmul.f32 %v2036, %v3390
    %v3412 = vmul.f32 %v2037, %v3390
    %v3413 = vmul.f32 %v2038, %v3390
    %v3414 = vmul.f32 %v2039, %v3390
    %v3415 = vmul.f32 %v2040, %v3390
    %v3416 = vmul.f32 %v2041, %v3390
    %v3417 = vmul.f32 %v2042, %v3390
    %v3418 = vmul.f32 %v2043, %v3390
    %v3419 = vmul.f32 %v2044, %v3390
    %v3420 = vmul.f32 %v2045, %v3390
    %v3421 = vmul.f32 %v3390, 0.0
    %v3422 = vmul.f32 %v2048, %v3390
    %v3423 = vmul.f32 %v2049, %v3390
    %v3424 = vmul.f32 %v2050, %v3390
    %v3425 = vmul.f32 %v2051, %v3390
    %v3426 = vmul.f32 %v2052, %v3390
    %v3427 = vmul.f32 %v2053, %v3390
    %v3428 = vmul.f32 %v2054, %v3390
    %v3429 = vmul.f32 %v2055, %v3390
    %v3430 = vmul.f32 %v2056, %v3390
    %v3431 = vmul.f32 %v2057, %v3390
    %v3432 = vmul.f32 %v2058, %v3390
    %v3433 = vmul.f32 %v2059, %v3390
    %v3434 = vmul.f32 %v2060, %v3390
    %v3435 = vmul.f32 %v2061, %v3390
    %v3436 = vmul.f32 %v2062, %v3390
    %v3437 = vmul.f32 %v2063, %v3390
    %v3438 = vmul.f32 %v2064, %v3390
    %v3439 = vmul.f32 %v2065, %v3390
    %v3440 = vmul.f32 %v2066, %v3390
    %v3441 = vmul.f32 %v2067, %v3390
    %v3442 = vmul.f32 %v2068, %v3390
    %v3443 = vmul.f32 %v2069, %v3390
    %v3444 = vmul.f32 %v2070, %v3390
    %v3445 = vmul.f32 %v2071, %v3390
    %v3446 = vmul.f32 %v2072, %v3390
    %v3447 = vmul.f32 %v2073, %v3390
    %v3448 = vmul.f32 %v2074, %v3390
    %v3449 = vmul.f32 %v2075, %v3390
    %v3450 = vmul.f32 %v2076, %v3390
    %v3451 = vmul.f32 %v2077, %v3390
    %v3452 = vadd.f32 %v3323, %v3391
    %v3453 = vadd.f32 %v3324, %v3392
    %v3454 = vadd.f32 %v3325, %v3393
    %v3455 = vadd.f32 %v3326, %v3394
    %v3456 = vadd.f32 %v3327, %v3395
    %v3457 = vadd.f32 %v3328, %v3396
    %v3458 = vadd.f32 %v3329, %v3397
    %v3459 = vadd.f32 %v3330, %v3398
    %v3460 = vadd.f32 %v3331, %v3399
    %v3461 = vadd.f32 %v3332, %v3400
    %v3462 = vadd.f32 %v3333, %v3401
    %v3463 = vadd.f32 %v3334, %v3402
    %v3464 = vadd.f32 %v3335, %v3403
    %v3465 = vadd.f32 %v3336, %v3404
    %v3466 = vadd.f32 %v3337, %v3405
    %v3467 = vadd.f32 %v3338, %v3406
    %v3468 = vadd.f32 %v3339, %v3407
    %v3469 = vadd.f32 %v3340, %v3408
    %v3470 = vadd.f32 %v3341, %v3409
    %v3471 = vadd.f32 %v3342, %v3410
    %v3472 = vadd.f32 %v3343, %v3411
    %v3473 = vadd.f32 %v3344, %v3412
    %v3474 = vadd.f32 %v3345, %v3413
    %v3475 = vadd.f32 %v3346, %v3414
    %v3476 = vadd.f32 %v3347, %v3415
    %v3477 = vadd.f32 %v3348, %v3416
    %v3478 = vadd.f32 %v3349, %v3417
    %v3479 = vadd.f32 %v3350, %v3418
    %v3480 = vadd.f32 %v3351, %v3419
    %v3481 = vadd.f32 %v3352, %v3420
    %v3482 = vadd.f32 %v3353, %v3421
    %v3483 = vadd.f32 %v3354, %v3421
    %v3484 = vadd.f32 %v3355, %v3422
    %v3485 = vadd.f32 %v3356, %v3423
    %v3486 = vadd.f32 %v3357, %v3424
    %v3487 = vadd.f32 %v3358, %v3425
    %v3488 = vadd.f32 %v3359, %v3426
    %v3489 = vadd.f32 %v3360, %v3427
    %v3490 = vadd.f32 %v3361, %v3428
    %v3491 = vadd.f32 %v3362, %v3429
    %v3492 = vadd.f32 %v3363, %v3430
    %v3493 = vadd.f32 %v3364, %v3431
    %v3494 = vadd.f32 %v3365, %v3432
    %v3495 = vadd.f32 %v3366, %v3433
    %v3496 = vadd.f32 %v3367, %v3434
    %v3497 = vadd.f32 %v3368, %v3435
    %v3498 = vadd.f32 %v3369, %v3436
    %v3499 = vadd.f32 %v3370, %v3437
    %v3500 = vadd.f32 %v3371, %v3438
    %v3501 = vadd.f32 %v3372, %v3439
    %v3502 = vadd.f32 %v3373, %v3440
    %v3503 = vadd.f32 %v3374, %v3441
    %v3504 = vadd.f32 %v3375, %v3442
    %v3505 = vadd.f32 %v3376, %v3443
    %v3506 = vadd.f32 %v3377, %v3444
    %v3507 = vadd.f32 %v3378, %v3445
    %v3508 = vadd.f32 %v3379, %v3446
    %v3509 = vadd.f32 %v3380, %v3447
    %v3510 = vadd.f32 %v3381, %v3448
    %v3511 = vadd.f32 %v3382, %v3449
    %v3512 = vadd.f32 %v3383, %v3450
    %v3513 = vadd.f32 %v3384, %v3451
    %v3514 = vadd.f32 %v3385, %v3421
    %v3515 = vadd.f32 %v3386, %v3421
    %v3516 = vmul.f32 %v3452, 0.5
    %v3517 = vmul.f32 %v3453, 0.5
    %v3518 = vmul.f32 %v3454, 0.5
    %v3519 = vmul.f32 %v3455, 0.5
    %v3520 = vmul.f32 %v3456, 0.5
    %v3521 = vmul.f32 %v3457, 0.5
    %v3522 = vmul.f32 %v3458, 0.5
    %v3523 = vmul.f32 %v3459, 0.5
    %v3524 = vmul.f32 %v3460, 0.5
    %v3525 = vmul.f32 %v3461, 0.5
    %v3526 = vmul.f32 %v3462, 0.5
    %v3527 = vmul.f32 %v3463, 0.5
    %v3528 = vmul.f32 %v3464, 0.5
    %v3529 = vmul.f32 %v3465, 0.5
    %v3530 = vmul.f32 %v3466, 0.5
    %v3531 = vmul.f32 %v3467, 0.5
    %v3532 = vmul.f32 %v3468, 0.5
    %v3533 = vmul.f32 %v3469, 0.5
    %v3534 = vmul.f32 %v3470, 0.5
    %v3535 = vmul.f32 %v3471, 0.5
    %v3536 = vmul.f32 %v3472, 0.5
    %v3537 = vmul.f32 %v3473, 0.5
    %v3538 = vmul.f32 %v3474, 0.5
    %v3539 = vmul.f32 %v3475, 0.5
    %v3540 = vmul.f32 %v3476, 0.5
    %v3541 = vmul.f32 %v3477, 0.5
    %v3542 = vmul.f32 %v3478, 0.5
    %v3543 = vmul.f32 %v3479, 0.5
    %v3544 = vmul.f32 %v3480, 0.5
    %v3545 = vmul.f32 %v3481, 0.5
    %v3546 = vmul.f32 %v3482, 0.5
    %v3547 = vmul.f32 %v3483, 0.5
    %v3548 = vmul.f32 %v3484, 0.5
    %v3549 = vmul.f32 %v3485, 0.5
    %v3550 = vmul.f32 %v3486, 0.5
    %v3551 = vmul.f32 %v3487, 0.5
    %v3552 = vmul.f32 %v3488, 0.5
    %v3553 = vmul.f32 %v3489, 0.5
    %v3554 = vmul.f32 %v3490, 0.5
    %v3555 = vmul.f32 %v3491, 0.5
    %v3556 = vmul.f32 %v3492, 0.5
    %v3557 = vmul.f32 %v3493, 0.5
    %v3558 = vmul.f32 %v3494, 0.5
    %v3559 = vmul.f32 %v3495, 0.5
    %v3560 = vmul.f32 %v3496, 0.5
    %v3561 = vmul.f32 %v3497, 0.5
    %v3562 = vmul.f32 %v3498, 0.5
    %v3563 = vmul.f32 %v3499, 0.5
    %v3564 = vmul.f32 %v3500, 0.5
    %v3565 = vmul.f32 %v3501, 0.5
    %v3566 = vmul.f32 %v3502, 0.5
    %v3567 = vmul.f32 %v3503, 0.5
    %v3568 = vmul.f32 %v3504, 0.5
    %v3569 = vmul.f32 %v3505, 0.5
    %v3570 = vmul.f32 %v3506, 0.5
    %v3571 = vmul.f32 %v3507, 0.5
    %v3572 = vmul.f32 %v3508, 0.5
    %v3573 = vmul.f32 %v3509, 0.5
    %v3574 = vmul.f32 %v3510, 0.5
    %v3575 = vmul.f32 %v3511, 0.5
    %v3576 = vmul.f32 %v3512, 0.5
    %v3577 = vmul.f32 %v3513, 0.5
    %v3578 = vmul.f32 %v3514, 0.5
    %v3579 = vmul.f32 %v3515, 0.5
    %v3580 = vmul.f32 %v3452, 0.70710677
    %v3581 = vmul.f32 %v3453, 0.70710677
    %v3582 = vmul.f32 %v3454, 0.70710677
    %v3583 = vmul.f32 %v3455, 0.70710677
    %v3584 = vmul.f32 %v3456, 0.70710677
    %v3585 = vmul.f32 %v3457, 0.70710677
    %v3586 = vmul.f32 %v3458, 0.70710677
    %v3587 = vmul.f32 %v3459, 0.70710677
    %v3588 = vmul.f32 %v3460, 0.70710677
    %v3589 = vmul.f32 %v3461, 0.70710677
    %v3590 = vmul.f32 %v3462, 0.70710677
    %v3591 = vmul.f32 %v3463, 0.70710677
    %v3592 = vmul.f32 %v3464, 0.70710677
    %v3593 = vmul.f32 %v3465, 0.70710677
    %v3594 = vmul.f32 %v3466, 0.70710677
    %v3595 = vmul.f32 %v3467, 0.70710677
    %v3596 = vmul.f32 %v3468, 0.70710677
    %v3597 = vmul.f32 %v3469, 0.70710677
    %v3598 = vmul.f32 %v3470, 0.70710677
    %v3599 = vmul.f32 %v3471, 0.70710677
    %v3600 = vmul.f32 %v3472, 0.70710677
    %v3601 = vmul.f32 %v3473, 0.70710677
    %v3602 = vmul.f32 %v3474, 0.70710677
    %v3603 = vmul.f32 %v3475, 0.70710677
    %v3604 = vmul.f32 %v3476, 0.70710677
    %v3605 = vmul.f32 %v3477, 0.70710677
    %v3606 = vmul.f32 %v3478, 0.70710677
    %v3607 = vmul.f32 %v3479, 0.70710677
    %v3608 = vmul.f32 %v3480, 0.70710677
    %v3609 = vmul.f32 %v3481, 0.70710677
    %v3610 = vmul.f32 %v3482, 0.70710677
    %v3611 = vmul.f32 %v3483, 0.70710677
    %v3612 = vmul.f32 %v3484, 0.70710677
    %v3613 = vmul.f32 %v3485, 0.70710677
    %v3614 = vmul.f32 %v3486, 0.70710677
    %v3615 = vmul.f32 %v3487, 0.70710677
    %v3616 = vmul.f32 %v3488, 0.70710677
    %v3617 = vmul.f32 %v3489, 0.70710677
    %v3618 = vmul.f32 %v3490, 0.70710677
    %v3619 = vmul.f32 %v3491, 0.70710677
    %v3620 = vmul.f32 %v3492, 0.70710677
    %v3621 = vmul.f32 %v3493, 0.70710677
    %v3622 = vmul.f32 %v3494, 0.70710677
    %v3623 = vmul.f32 %v3495, 0.70710677
    %v3624 = vmul.f32 %v3496, 0.70710677
    %v3625 = vmul.f32 %v3497, 0.70710677
    %v3626 = vmul.f32 %v3498, 0.70710677
    %v3627 = vmul.f32 %v3499, 0.70710677
    %v3628 = vmul.f32 %v3500, 0.70710677
    %v3629 = vmul.f32 %v3501, 0.70710677
    %v3630 = vmul.f32 %v3502, 0.70710677
    %v3631 = vmul.f32 %v3503, 0.70710677
    %v3632 = vmul.f32 %v3504, 0.70710677
    %v3633 = vmul.f32 %v3505, 0.70710677
    %v3634 = vmul.f32 %v3506, 0.70710677
    %v3635 = vmul.f32 %v3507, 0.70710677
    %v3636 = vmul.f32 %v3508, 0.70710677
    %v3637 = vmul.f32 %v3509, 0.70710677
    %v3638 = vmul.f32 %v3510, 0.70710677
    %v3639 = vmul.f32 %v3511, 0.70710677
    %v3640 = vmul.f32 %v3512, 0.70710677
    %v3641 = vmul.f32 %v3513, 0.70710677
    %v3642 = vmul.f32 %v3514, 0.70710677
    %v3643 = vmul.f32 %v3515, 0.70710677
    %vm3644 = vcmp.ge.f32.partialorder %v3580, 0.0
    %vm3645 = vcmp.ge.f32.partialorder %v3581, 0.0
    %vm3646 = vcmp.ge.f32.partialorder %v3582, 0.0
    %vm3647 = vcmp.ge.f32.partialorder %v3583, 0.0
    %vm3648 = vcmp.ge.f32.partialorder %v3584, 0.0
    %vm3649 = vcmp.ge.f32.partialorder %v3585, 0.0
    %vm3650 = vcmp.ge.f32.partialorder %v3586, 0.0
    %vm3651 = vcmp.ge.f32.partialorder %v3587, 0.0
    %vm3652 = vcmp.ge.f32.partialorder %v3588, 0.0
    %vm3653 = vcmp.ge.f32.partialorder %v3589, 0.0
    %vm3654 = vcmp.ge.f32.partialorder %v3590, 0.0
    %vm3655 = vcmp.ge.f32.partialorder %v3591, 0.0
    %vm3656 = vcmp.ge.f32.partialorder %v3592, 0.0
    %vm3657 = vcmp.ge.f32.partialorder %v3593, 0.0
    %vm3658 = vcmp.ge.f32.partialorder %v3594, 0.0
    %vm3659 = vcmp.ge.f32.partialorder %v3595, 0.0
    %vm3660 = vcmp.ge.f32.partialorder %v3596, 0.0
    %vm3661 = vcmp.ge.f32.partialorder %v3597, 0.0
    %vm3662 = vcmp.ge.f32.partialorder %v3598, 0.0
    %vm3663 = vcmp.ge.f32.partialorder %v3599, 0.0
    %vm3664 = vcmp.ge.f32.partialorder %v3600, 0.0
    %vm3665 = vcmp.ge.f32.partialorder %v3601, 0.0
    %vm3666 = vcmp.ge.f32.partialorder %v3602, 0.0
    %vm3667 = vcmp.ge.f32.partialorder %v3603, 0.0
    %vm3668 = vcmp.ge.f32.partialorder %v3604, 0.0
    %vm3669 = vcmp.ge.f32.partialorder %v3605, 0.0
    %vm3670 = vcmp.ge.f32.partialorder %v3606, 0.0
    %vm3671 = vcmp.ge.f32.partialorder %v3607, 0.0
    %vm3672 = vcmp.ge.f32.partialorder %v3608, 0.0
    %vm3673 = vcmp.ge.f32.partialorder %v3609, 0.0
    %vm3674 = vcmp.ge.f32.partialorder %v3610, 0.0
    %vm3675 = vcmp.ge.f32.partialorder %v3611, 0.0
    %vm3676 = vcmp.ge.f32.partialorder %v3612, 0.0
    %vm3677 = vcmp.ge.f32.partialorder %v3613, 0.0
    %vm3678 = vcmp.ge.f32.partialorder %v3614, 0.0
    %vm3679 = vcmp.ge.f32.partialorder %v3615, 0.0
    %vm3680 = vcmp.ge.f32.partialorder %v3616, 0.0
    %vm3681 = vcmp.ge.f32.partialorder %v3617, 0.0
    %vm3682 = vcmp.ge.f32.partialorder %v3618, 0.0
    %vm3683 = vcmp.ge.f32.partialorder %v3619, 0.0
    %vm3684 = vcmp.ge.f32.partialorder %v3620, 0.0
    %vm3685 = vcmp.ge.f32.partialorder %v3621, 0.0
    %vm3686 = vcmp.ge.f32.partialorder %v3622, 0.0
    %vm3687 = vcmp.ge.f32.partialorder %v3623, 0.0
    %vm3688 = vcmp.ge.f32.partialorder %v3624, 0.0
    %vm3689 = vcmp.ge.f32.partialorder %v3625, 0.0
    %vm3690 = vcmp.ge.f32.partialorder %v3626, 0.0
    %vm3691 = vcmp.ge.f32.partialorder %v3627, 0.0
    %vm3692 = vcmp.ge.f32.partialorder %v3628, 0.0
    %vm3693 = vcmp.ge.f32.partialorder %v3629, 0.0
    %vm3694 = vcmp.ge.f32.partialorder %v3630, 0.0
    %vm3695 = vcmp.ge.f32.partialorder %v3631, 0.0
    %vm3696 = vcmp.ge.f32.partialorder %v3632, 0.0
    %vm3697 = vcmp.ge.f32.partialorder %v3633, 0.0
    %vm3698 = vcmp.ge.f32.partialorder %v3634, 0.0
    %vm3699 = vcmp.ge.f32.partialorder %v3635, 0.0
    %vm3700 = vcmp.ge.f32.partialorder %v3636, 0.0
    %vm3701 = vcmp.ge.f32.partialorder %v3637, 0.0
    %vm3702 = vcmp.ge.f32.partialorder %v3638, 0.0
    %vm3703 = vcmp.ge.f32.partialorder %v3639, 0.0
    %vm3704 = vcmp.ge.f32.partialorder %v3640, 0.0
    %vm3705 = vcmp.ge.f32.partialorder %v3641, 0.0
    %vm3706 = vcmp.ge.f32.partialorder %v3642, 0.0
    %vm3707 = vcmp.ge.f32.partialorder %v3643, 0.0
    %v3708 = vsel %vm3644, 1.0, -1.0
    %v3709 = vsel %vm3645, 1.0, -1.0
    %v3710 = vsel %vm3646, 1.0, -1.0
    %v3711 = vsel %vm3647, 1.0, -1.0
    %v3712 = vsel %vm3648, 1.0, -1.0
    %v3713 = vsel %vm3649, 1.0, -1.0
    %v3714 = vsel %vm3650, 1.0, -1.0
    %v3715 = vsel %vm3651, 1.0, -1.0
    %v3716 = vsel %vm3652, 1.0, -1.0
    %v3717 = vsel %vm3653, 1.0, -1.0
    %v3718 = vsel %vm3654, 1.0, -1.0
    %v3719 = vsel %vm3655, 1.0, -1.0
    %v3720 = vsel %vm3656, 1.0, -1.0
    %v3721 = vsel %vm3657, 1.0, -1.0
    %v3722 = vsel %vm3658, 1.0, -1.0
    %v3723 = vsel %vm3659, 1.0, -1.0
    %v3724 = vsel %vm3660, 1.0, -1.0
    %v3725 = vsel %vm3661, 1.0, -1.0
    %v3726 = vsel %vm3662, 1.0, -1.0
    %v3727 = vsel %vm3663, 1.0, -1.0
    %v3728 = vsel %vm3664, 1.0, -1.0
    %v3729 = vsel %vm3665, 1.0, -1.0
    %v3730 = vsel %vm3666, 1.0, -1.0
    %v3731 = vsel %vm3667, 1.0, -1.0
    %v3732 = vsel %vm3668, 1.0, -1.0
    %v3733 = vsel %vm3669, 1.0, -1.0
    %v3734 = vsel %vm3670, 1.0, -1.0
    %v3735 = vsel %vm3671, 1.0, -1.0
    %v3736 = vsel %vm3672, 1.0, -1.0
    %v3737 = vsel %vm3673, 1.0, -1.0
    %v3738 = vsel %vm3674, 1.0, -1.0
    %v3739 = vsel %vm3675, 1.0, -1.0
    %v3740 = vsel %vm3676, 1.0, -1.0
    %v3741 = vsel %vm3677, 1.0, -1.0
    %v3742 = vsel %vm3678, 1.0, -1.0
    %v3743 = vsel %vm3679, 1.0, -1.0
    %v3744 = vsel %vm3680, 1.0, -1.0
    %v3745 = vsel %vm3681, 1.0, -1.0
    %v3746 = vsel %vm3682, 1.0, -1.0
    %v3747 = vsel %vm3683, 1.0, -1.0
    %v3748 = vsel %vm3684, 1.0, -1.0
    %v3749 = vsel %vm3685, 1.0, -1.0
    %v3750 = vsel %vm3686, 1.0, -1.0
    %v3751 = vsel %vm3687, 1.0, -1.0
    %v3752 = vsel %vm3688, 1.0, -1.0
    %v3753 = vsel %vm3689, 1.0, -1.0
    %v3754 = vsel %vm3690, 1.0, -1.0
    %v3755 = vsel %vm3691, 1.0, -1.0
    %v3756 = vsel %vm3692, 1.0, -1.0
    %v3757 = vsel %vm3693, 1.0, -1.0
    %v3758 = vsel %vm3694, 1.0, -1.0
    %v3759 = vsel %vm3695, 1.0, -1.0
    %v3760 = vsel %vm3696, 1.0, -1.0
    %v3761 = vsel %vm3697, 1.0, -1.0
    %v3762 = vsel %vm3698, 1.0, -1.0
    %v3763 = vsel %vm3699, 1.0, -1.0
    %v3764 = vsel %vm3700, 1.0, -1.0
    %v3765 = vsel %vm3701, 1.0, -1.0
    %v3766 = vsel %vm3702, 1.0, -1.0
    %v3767 = vsel %vm3703, 1.0, -1.0
    %v3768 = vsel %vm3704, 1.0, -1.0
    %v3769 = vsel %vm3705, 1.0, -1.0
    %v3770 = vsel %vm3706, 1.0, -1.0
    %v3771 = vsel %vm3707, 1.0, -1.0
    %v3772 = vand.u32 2147483647, %v3580
    %v3773 = vand.u32 2147483647, %v3581
    %v3774 = vand.u32 2147483647, %v3582
    %v3775 = vand.u32 2147483647, %v3583
    %v3776 = vand.u32 2147483647, %v3584
    %v3777 = vand.u32 2147483647, %v3585
    %v3778 = vand.u32 2147483647, %v3586
    %v3779 = vand.u32 2147483647, %v3587
    %v3780 = vand.u32 2147483647, %v3588
    %v3781 = vand.u32 2147483647, %v3589
    %v3782 = vand.u32 2147483647, %v3590
    %v3783 = vand.u32 2147483647, %v3591
    %v3784 = vand.u32 2147483647, %v3592
    %v3785 = vand.u32 2147483647, %v3593
    %v3786 = vand.u32 2147483647, %v3594
    %v3787 = vand.u32 2147483647, %v3595
    %v3788 = vand.u32 2147483647, %v3596
    %v3789 = vand.u32 2147483647, %v3597
    %v3790 = vand.u32 2147483647, %v3598
    %v3791 = vand.u32 2147483647, %v3599
    %v3792 = vand.u32 2147483647, %v3600
    %v3793 = vand.u32 2147483647, %v3601
    %v3794 = vand.u32 2147483647, %v3602
    %v3795 = vand.u32 2147483647, %v3603
    %v3796 = vand.u32 2147483647, %v3604
    %v3797 = vand.u32 2147483647, %v3605
    %v3798 = vand.u32 2147483647, %v3606
    %v3799 = vand.u32 2147483647, %v3607
    %v3800 = vand.u32 2147483647, %v3608
    %v3801 = vand.u32 2147483647, %v3609
    %v3802 = vand.u32 2147483647, %v3610
    %v3803 = vand.u32 2147483647, %v3611
    %v3804 = vand.u32 2147483647, %v3612
    %v3805 = vand.u32 2147483647, %v3613
    %v3806 = vand.u32 2147483647, %v3614
    %v3807 = vand.u32 2147483647, %v3615
    %v3808 = vand.u32 2147483647, %v3616
    %v3809 = vand.u32 2147483647, %v3617
    %v3810 = vand.u32 2147483647, %v3618
    %v3811 = vand.u32 2147483647, %v3619
    %v3812 = vand.u32 2147483647, %v3620
    %v3813 = vand.u32 2147483647, %v3621
    %v3814 = vand.u32 2147483647, %v3622
    %v3815 = vand.u32 2147483647, %v3623
    %v3816 = vand.u32 2147483647, %v3624
    %v3817 = vand.u32 2147483647, %v3625
    %v3818 = vand.u32 2147483647, %v3626
    %v3819 = vand.u32 2147483647, %v3627
    %v3820 = vand.u32 2147483647, %v3628
    %v3821 = vand.u32 2147483647, %v3629
    %v3822 = vand.u32 2147483647, %v3630
    %v3823 = vand.u32 2147483647, %v3631
    %v3824 = vand.u32 2147483647, %v3632
    %v3825 = vand.u32 2147483647, %v3633
    %v3826 = vand.u32 2147483647, %v3634
    %v3827 = vand.u32 2147483647, %v3635
    %v3828 = vand.u32 2147483647, %v3636
    %v3829 = vand.u32 2147483647, %v3637
    %v3830 = vand.u32 2147483647, %v3638
    %v3831 = vand.u32 2147483647, %v3639
    %v3832 = vand.u32 2147483647, %v3640
    %v3833 = vand.u32 2147483647, %v3641
    %v3834 = vand.u32 2147483647, %v3642
    %v3835 = vand.u32 2147483647, %v3643
    %v3836 = vmul.f32 %v3772, 0.3275911
    %v3837 = vmul.f32 %v3773, 0.3275911
    %v3838 = vmul.f32 %v3774, 0.3275911
    %v3839 = vmul.f32 %v3775, 0.3275911
    %v3840 = vmul.f32 %v3776, 0.3275911
    %v3841 = vmul.f32 %v3777, 0.3275911
    %v3842 = vmul.f32 %v3778, 0.3275911
    %v3843 = vmul.f32 %v3779, 0.3275911
    %v3844 = vmul.f32 %v3780, 0.3275911
    %v3845 = vmul.f32 %v3781, 0.3275911
    %v3846 = vmul.f32 %v3782, 0.3275911
    %v3847 = vmul.f32 %v3783, 0.3275911
    %v3848 = vmul.f32 %v3784, 0.3275911
    %v3849 = vmul.f32 %v3785, 0.3275911
    %v3850 = vmul.f32 %v3786, 0.3275911
    %v3851 = vmul.f32 %v3787, 0.3275911
    %v3852 = vmul.f32 %v3788, 0.3275911
    %v3853 = vmul.f32 %v3789, 0.3275911
    %v3854 = vmul.f32 %v3790, 0.3275911
    %v3855 = vmul.f32 %v3791, 0.3275911
    %v3856 = vmul.f32 %v3792, 0.3275911
    %v3857 = vmul.f32 %v3793, 0.3275911
    %v3858 = vmul.f32 %v3794, 0.3275911
    %v3859 = vmul.f32 %v3795, 0.3275911
    %v3860 = vmul.f32 %v3796, 0.3275911
    %v3861 = vmul.f32 %v3797, 0.3275911
    %v3862 = vmul.f32 %v3798, 0.3275911
    %v3863 = vmul.f32 %v3799, 0.3275911
    %v3864 = vmul.f32 %v3800, 0.3275911
    %v3865 = vmul.f32 %v3801, 0.3275911
    %v3866 = vmul.f32 %v3802, 0.3275911
    %v3867 = vmul.f32 %v3803, 0.3275911
    %v3868 = vmul.f32 %v3804, 0.3275911
    %v3869 = vmul.f32 %v3805, 0.3275911
    %v3870 = vmul.f32 %v3806, 0.3275911
    %v3871 = vmul.f32 %v3807, 0.3275911
    %v3872 = vmul.f32 %v3808, 0.3275911
    %v3873 = vmul.f32 %v3809, 0.3275911
    %v3874 = vmul.f32 %v3810, 0.3275911
    %v3875 = vmul.f32 %v3811, 0.3275911
    %v3876 = vmul.f32 %v3812, 0.3275911
    %v3877 = vmul.f32 %v3813, 0.3275911
    %v3878 = vmul.f32 %v3814, 0.3275911
    %v3879 = vmul.f32 %v3815, 0.3275911
    %v3880 = vmul.f32 %v3816, 0.3275911
    %v3881 = vmul.f32 %v3817, 0.3275911
    %v3882 = vmul.f32 %v3818, 0.3275911
    %v3883 = vmul.f32 %v3819, 0.3275911
    %v3884 = vmul.f32 %v3820, 0.3275911
    %v3885 = vmul.f32 %v3821, 0.3275911
    %v3886 = vmul.f32 %v3822, 0.3275911
    %v3887 = vmul.f32 %v3823, 0.3275911
    %v3888 = vmul.f32 %v3824, 0.3275911
    %v3889 = vmul.f32 %v3825, 0.3275911
    %v3890 = vmul.f32 %v3826, 0.3275911
    %v3891 = vmul.f32 %v3827, 0.3275911
    %v3892 = vmul.f32 %v3828, 0.3275911
    %v3893 = vmul.f32 %v3829, 0.3275911
    %v3894 = vmul.f32 %v3830, 0.3275911
    %v3895 = vmul.f32 %v3831, 0.3275911
    %v3896 = vmul.f32 %v3832, 0.3275911
    %v3897 = vmul.f32 %v3833, 0.3275911
    %v3898 = vmul.f32 %v3834, 0.3275911
    %v3899 = vmul.f32 %v3835, 0.3275911
    %v3900 = vadd.f32 %v3836, 1.0
    %v3901 = vadd.f32 %v3837, 1.0
    %v3902 = vadd.f32 %v3838, 1.0
    %v3903 = vadd.f32 %v3839, 1.0
    %v3904 = vadd.f32 %v3840, 1.0
    %v3905 = vadd.f32 %v3841, 1.0
    %v3906 = vadd.f32 %v3842, 1.0
    %v3907 = vadd.f32 %v3843, 1.0
    %v3908 = vadd.f32 %v3844, 1.0
    %v3909 = vadd.f32 %v3845, 1.0
    %v3910 = vadd.f32 %v3846, 1.0
    %v3911 = vadd.f32 %v3847, 1.0
    %v3912 = vadd.f32 %v3848, 1.0
    %v3913 = vadd.f32 %v3849, 1.0
    %v3914 = vadd.f32 %v3850, 1.0
    %v3915 = vadd.f32 %v3851, 1.0
    %v3916 = vadd.f32 %v3852, 1.0
    %v3917 = vadd.f32 %v3853, 1.0
    %v3918 = vadd.f32 %v3854, 1.0
    %v3919 = vadd.f32 %v3855, 1.0
    %v3920 = vadd.f32 %v3856, 1.0
    %v3921 = vadd.f32 %v3857, 1.0
    %v3922 = vadd.f32 %v3858, 1.0
    %v3923 = vadd.f32 %v3859, 1.0
    %v3924 = vadd.f32 %v3860, 1.0
    %v3925 = vadd.f32 %v3861, 1.0
    %v3926 = vadd.f32 %v3862, 1.0
    %v3927 = vadd.f32 %v3863, 1.0
    %v3928 = vadd.f32 %v3864, 1.0
    %v3929 = vadd.f32 %v3865, 1.0
    %v3930 = vadd.f32 %v3866, 1.0
    %v3931 = vadd.f32 %v3867, 1.0
    %v3932 = vadd.f32 %v3868, 1.0
    %v3933 = vadd.f32 %v3869, 1.0
    %v3934 = vadd.f32 %v3870, 1.0
    %v3935 = vadd.f32 %v3871, 1.0
    %v3936 = vadd.f32 %v3872, 1.0
    %v3937 = vadd.f32 %v3873, 1.0
    %v3938 = vadd.f32 %v3874, 1.0
    %v3939 = vadd.f32 %v3875, 1.0
    %v3940 = vadd.f32 %v3876, 1.0
    %v3941 = vadd.f32 %v3877, 1.0
    %v3942 = vadd.f32 %v3878, 1.0
    %v3943 = vadd.f32 %v3879, 1.0
    %v3944 = vadd.f32 %v3880, 1.0
    %v3945 = vadd.f32 %v3881, 1.0
    %v3946 = vadd.f32 %v3882, 1.0
    %v3947 = vadd.f32 %v3883, 1.0
    %v3948 = vadd.f32 %v3884, 1.0
    %v3949 = vadd.f32 %v3885, 1.0
    %v3950 = vadd.f32 %v3886, 1.0
    %v3951 = vadd.f32 %v3887, 1.0
    %v3952 = vadd.f32 %v3888, 1.0
    %v3953 = vadd.f32 %v3889, 1.0
    %v3954 = vadd.f32 %v3890, 1.0
    %v3955 = vadd.f32 %v3891, 1.0
    %v3956 = vadd.f32 %v3892, 1.0
    %v3957 = vadd.f32 %v3893, 1.0
    %v3958 = vadd.f32 %v3894, 1.0
    %v3959 = vadd.f32 %v3895, 1.0
    %v3960 = vadd.f32 %v3896, 1.0
    %v3961 = vadd.f32 %v3897, 1.0
    %v3962 = vadd.f32 %v3898, 1.0
    %v3963 = vadd.f32 %v3899, 1.0
    %v3964 = vrcp.pop %v3900
    %v3965 = vrcp.pop %v3901
    %v3966 = vrcp.pop %v3902
    %v3967 = vrcp.pop %v3903
    %v3968 = vrcp.pop %v3904
    %v3969 = vrcp.pop %v3905
    %v3970 = vrcp.pop %v3906
    %v3971 = vrcp.pop %v3907
    %v3972 = vrcp.pop %v3908
    %v3973 = vrcp.pop %v3909
    %v3974 = vrcp.pop %v3910
    %v3975 = vrcp.pop %v3911
    %v3976 = vrcp.pop %v3912
    %v3977 = vrcp.pop %v3913
    %v3978 = vrcp.pop %v3914
    %v3979 = vrcp.pop %v3915
    %v3980 = vrcp.pop %v3916
    %v3981 = vrcp.pop %v3917
    %v3982 = vrcp.pop %v3918
    %v3983 = vrcp.pop %v3919
    %v3984 = vrcp.pop %v3920
    %v3985 = vrcp.pop %v3921
    %v3986 = vrcp.pop %v3922
    %v3987 = vrcp.pop %v3923
    %v3988 = vrcp.pop %v3924
    %v3989 = vrcp.pop %v3925
    %v3990 = vrcp.pop %v3926
    %v3991 = vrcp.pop %v3927
    %v3992 = vrcp.pop %v3928
    %v3993 = vrcp.pop %v3929
    %v3994 = vrcp.pop %v3930
    %v3995 = vrcp.pop %v3931
    %v3996 = vrcp.pop %v3932
    %v3997 = vrcp.pop %v3933
    %v3998 = vrcp.pop %v3934
    %v3999 = vrcp.pop %v3935
    %v4000 = vrcp.pop %v3936
    %v4001 = vrcp.pop %v3937
    %v4002 = vrcp.pop %v3938
    %v4003 = vrcp.pop %v3939
    %v4004 = vrcp.pop %v3940
    %v4005 = vrcp.pop %v3941
    %v4006 = vrcp.pop %v3942
    %v4007 = vrcp.pop %v3943
    %v4008 = vrcp.pop %v3944
    %v4009 = vrcp.pop %v3945
    %v4010 = vrcp.pop %v3946
    %v4011 = vrcp.pop %v3947
    %v4012 = vrcp.pop %v3948
    %v4013 = vrcp.pop %v3949
    %v4014 = vrcp.pop %v3950
    %v4015 = vrcp.pop %v3951
    %v4016 = vrcp.pop %v3952
    %v4017 = vrcp.pop %v3953
    %v4018 = vrcp.pop %v3954
    %v4019 = vrcp.pop %v3955
    %v4020 = vrcp.pop %v3956
    %v4021 = vrcp.pop %v3957
    %v4022 = vrcp.pop %v3958
    %v4023 = vrcp.pop %v3959
    %v4024 = vrcp.pop %v3960
    %v4025 = vrcp.pop %v3961
    %v4026 = vrcp.pop %v3962
    %v4027 = vrcp.pop %v3963
    %v4028 = vmul.f32 %v3964, 1.0614054
    %v4029 = vmul.f32 %v3965, 1.0614054
    %v4030 = vmul.f32 %v3966, 1.0614054
    %v4031 = vmul.f32 %v3967, 1.0614054
    %v4032 = vmul.f32 %v3968, 1.0614054
    %v4033 = vmul.f32 %v3969, 1.0614054
    %v4034 = vmul.f32 %v3970, 1.0614054
    %v4035 = vmul.f32 %v3971, 1.0614054
    %v4036 = vmul.f32 %v3972, 1.0614054
    %v4037 = vmul.f32 %v3973, 1.0614054
    %v4038 = vmul.f32 %v3974, 1.0614054
    %v4039 = vmul.f32 %v3975, 1.0614054
    %v4040 = vmul.f32 %v3976, 1.0614054
    %v4041 = vmul.f32 %v3977, 1.0614054
    %v4042 = vmul.f32 %v3978, 1.0614054
    %v4043 = vmul.f32 %v3979, 1.0614054
    %v4044 = vmul.f32 %v3980, 1.0614054
    %v4045 = vmul.f32 %v3981, 1.0614054
    %v4046 = vmul.f32 %v3982, 1.0614054
    %v4047 = vmul.f32 %v3983, 1.0614054
    %v4048 = vmul.f32 %v3984, 1.0614054
    %v4049 = vmul.f32 %v3985, 1.0614054
    %v4050 = vmul.f32 %v3986, 1.0614054
    %v4051 = vmul.f32 %v3987, 1.0614054
    %v4052 = vmul.f32 %v3988, 1.0614054
    %v4053 = vmul.f32 %v3989, 1.0614054
    %v4054 = vmul.f32 %v3990, 1.0614054
    %v4055 = vmul.f32 %v3991, 1.0614054
    %v4056 = vmul.f32 %v3992, 1.0614054
    %v4057 = vmul.f32 %v3993, 1.0614054
    %v4058 = vmul.f32 %v3994, 1.0614054
    %v4059 = vmul.f32 %v3995, 1.0614054
    %v4060 = vmul.f32 %v3996, 1.0614054
    %v4061 = vmul.f32 %v3997, 1.0614054
    %v4062 = vmul.f32 %v3998, 1.0614054
    %v4063 = vmul.f32 %v3999, 1.0614054
    %v4064 = vmul.f32 %v4000, 1.0614054
    %v4065 = vmul.f32 %v4001, 1.0614054
    %v4066 = vmul.f32 %v4002, 1.0614054
    %v4067 = vmul.f32 %v4003, 1.0614054
    %v4068 = vmul.f32 %v4004, 1.0614054
    %v4069 = vmul.f32 %v4005, 1.0614054
    %v4070 = vmul.f32 %v4006, 1.0614054
    %v4071 = vmul.f32 %v4007, 1.0614054
    %v4072 = vmul.f32 %v4008, 1.0614054
    %v4073 = vmul.f32 %v4009, 1.0614054
    %v4074 = vmul.f32 %v4010, 1.0614054
    %v4075 = vmul.f32 %v4011, 1.0614054
    %v4076 = vmul.f32 %v4012, 1.0614054
    %v4077 = vmul.f32 %v4013, 1.0614054
    %v4078 = vmul.f32 %v4014, 1.0614054
    %v4079 = vmul.f32 %v4015, 1.0614054
    %v4080 = vmul.f32 %v4016, 1.0614054
    %v4081 = vmul.f32 %v4017, 1.0614054
    %v4082 = vmul.f32 %v4018, 1.0614054
    %v4083 = vmul.f32 %v4019, 1.0614054
    %v4084 = vmul.f32 %v4020, 1.0614054
    %v4085 = vmul.f32 %v4021, 1.0614054
    %v4086 = vmul.f32 %v4022, 1.0614054
    %v4087 = vmul.f32 %v4023, 1.0614054
    %v4088 = vmul.f32 %v4024, 1.0614054
    %v4089 = vmul.f32 %v4025, 1.0614054
    %v4090 = vmul.f32 %v4026, 1.0614054
    %v4091 = vmul.f32 %v4027, 1.0614054
    %v4092 = vadd.f32 %v4028, -1.4531521
    %v4093 = vadd.f32 %v4029, -1.4531521
    %v4094 = vadd.f32 %v4030, -1.4531521
    %v4095 = vadd.f32 %v4031, -1.4531521
    %v4096 = vadd.f32 %v4032, -1.4531521
    %v4097 = vadd.f32 %v4033, -1.4531521
    %v4098 = vadd.f32 %v4034, -1.4531521
    %v4099 = vadd.f32 %v4035, -1.4531521
    %v4100 = vadd.f32 %v4036, -1.4531521
    %v4101 = vadd.f32 %v4037, -1.4531521
    %v4102 = vadd.f32 %v4038, -1.4531521
    %v4103 = vadd.f32 %v4039, -1.4531521
    %v4104 = vadd.f32 %v4040, -1.4531521
    %v4105 = vadd.f32 %v4041, -1.4531521
    %v4106 = vadd.f32 %v4042, -1.4531521
    %v4107 = vadd.f32 %v4043, -1.4531521
    %v4108 = vadd.f32 %v4044, -1.4531521
    %v4109 = vadd.f32 %v4045, -1.4531521
    %v4110 = vadd.f32 %v4046, -1.4531521
    %v4111 = vadd.f32 %v4047, -1.4531521
    %v4112 = vadd.f32 %v4048, -1.4531521
    %v4113 = vadd.f32 %v4049, -1.4531521
    %v4114 = vadd.f32 %v4050, -1.4531521
    %v4115 = vadd.f32 %v4051, -1.4531521
    %v4116 = vadd.f32 %v4052, -1.4531521
    %v4117 = vadd.f32 %v4053, -1.4531521
    %v4118 = vadd.f32 %v4054, -1.4531521
    %v4119 = vadd.f32 %v4055, -1.4531521
    %v4120 = vadd.f32 %v4056, -1.4531521
    %v4121 = vadd.f32 %v4057, -1.4531521
    %v4122 = vadd.f32 %v4058, -1.4531521
    %v4123 = vadd.f32 %v4059, -1.4531521
    %v4124 = vadd.f32 %v4060, -1.4531521
    %v4125 = vadd.f32 %v4061, -1.4531521
    %v4126 = vadd.f32 %v4062, -1.4531521
    %v4127 = vadd.f32 %v4063, -1.4531521
    %v4128 = vadd.f32 %v4064, -1.4531521
    %v4129 = vadd.f32 %v4065, -1.4531521
    %v4130 = vadd.f32 %v4066, -1.4531521
    %v4131 = vadd.f32 %v4067, -1.4531521
    %v4132 = vadd.f32 %v4068, -1.4531521
    %v4133 = vadd.f32 %v4069, -1.4531521
    %v4134 = vadd.f32 %v4070, -1.4531521
    %v4135 = vadd.f32 %v4071, -1.4531521
    %v4136 = vadd.f32 %v4072, -1.4531521
    %v4137 = vadd.f32 %v4073, -1.4531521
    %v4138 = vadd.f32 %v4074, -1.4531521
    %v4139 = vadd.f32 %v4075, -1.4531521
    %v4140 = vadd.f32 %v4076, -1.4531521
    %v4141 = vadd.f32 %v4077, -1.4531521
    %v4142 = vadd.f32 %v4078, -1.4531521
    %v4143 = vadd.f32 %v4079, -1.4531521
    %v4144 = vadd.f32 %v4080, -1.4531521
    %v4145 = vadd.f32 %v4081, -1.4531521
    %v4146 = vadd.f32 %v4082, -1.4531521
    %v4147 = vadd.f32 %v4083, -1.4531521
    %v4148 = vadd.f32 %v4084, -1.4531521
    %v4149 = vadd.f32 %v4085, -1.4531521
    %v4150 = vadd.f32 %v4086, -1.4531521
    %v4151 = vadd.f32 %v4087, -1.4531521
    %v4152 = vadd.f32 %v4088, -1.4531521
    %v4153 = vadd.f32 %v4089, -1.4531521
    %v4154 = vadd.f32 %v4090, -1.4531521
    %v4155 = vadd.f32 %v4091, -1.4531521
    %v4156 = vmul.f32 %v4092, %v3964
    %v4157 = vmul.f32 %v4093, %v3965
    %v4158 = vmul.f32 %v4094, %v3966
    %v4159 = vmul.f32 %v4095, %v3967
    %v4160 = vmul.f32 %v4096, %v3968
    %v4161 = vmul.f32 %v4097, %v3969
    %v4162 = vmul.f32 %v4098, %v3970
    %v4163 = vmul.f32 %v4099, %v3971
    %v4164 = vmul.f32 %v4100, %v3972
    %v4165 = vmul.f32 %v4101, %v3973
    %v4166 = vmul.f32 %v4102, %v3974
    %v4167 = vmul.f32 %v4103, %v3975
    %v4168 = vmul.f32 %v4104, %v3976
    %v4169 = vmul.f32 %v4105, %v3977
    %v4170 = vmul.f32 %v4106, %v3978
    %v4171 = vmul.f32 %v4107, %v3979
    %v4172 = vmul.f32 %v4108, %v3980
    %v4173 = vmul.f32 %v4109, %v3981
    %v4174 = vmul.f32 %v4110, %v3982
    %v4175 = vmul.f32 %v4111, %v3983
    %v4176 = vmul.f32 %v4112, %v3984
    %v4177 = vmul.f32 %v4113, %v3985
    %v4178 = vmul.f32 %v4114, %v3986
    %v4179 = vmul.f32 %v4115, %v3987
    %v4180 = vmul.f32 %v4116, %v3988
    %v4181 = vmul.f32 %v4117, %v3989
    %v4182 = vmul.f32 %v4118, %v3990
    %v4183 = vmul.f32 %v4119, %v3991
    %v4184 = vmul.f32 %v4120, %v3992
    %v4185 = vmul.f32 %v4121, %v3993
    %v4186 = vmul.f32 %v4122, %v3994
    %v4187 = vmul.f32 %v4123, %v3995
    %v4188 = vmul.f32 %v4124, %v3996
    %v4189 = vmul.f32 %v4125, %v3997
    %v4190 = vmul.f32 %v4126, %v3998
    %v4191 = vmul.f32 %v4127, %v3999
    %v4192 = vmul.f32 %v4128, %v4000
    %v4193 = vmul.f32 %v4129, %v4001
    %v4194 = vmul.f32 %v4130, %v4002
    %v4195 = vmul.f32 %v4131, %v4003
    %v4196 = vmul.f32 %v4132, %v4004
    %v4197 = vmul.f32 %v4133, %v4005
    %v4198 = vmul.f32 %v4134, %v4006
    %v4199 = vmul.f32 %v4135, %v4007
    %v4200 = vmul.f32 %v4136, %v4008
    %v4201 = vmul.f32 %v4137, %v4009
    %v4202 = vmul.f32 %v4138, %v4010
    %v4203 = vmul.f32 %v4139, %v4011
    %v4204 = vmul.f32 %v4140, %v4012
    %v4205 = vmul.f32 %v4141, %v4013
    %v4206 = vmul.f32 %v4142, %v4014
    %v4207 = vmul.f32 %v4143, %v4015
    %v4208 = vmul.f32 %v4144, %v4016
    %v4209 = vmul.f32 %v4145, %v4017
    %v4210 = vmul.f32 %v4146, %v4018
    %v4211 = vmul.f32 %v4147, %v4019
    %v4212 = vmul.f32 %v4148, %v4020
    %v4213 = vmul.f32 %v4149, %v4021
    %v4214 = vmul.f32 %v4150, %v4022
    %v4215 = vmul.f32 %v4151, %v4023
    %v4216 = vmul.f32 %v4152, %v4024
    %v4217 = vmul.f32 %v4153, %v4025
    %v4218 = vmul.f32 %v4154, %v4026
    %v4219 = vmul.f32 %v4155, %v4027
    %v4220 = vadd.f32 %v4156, 1.4214138
    %v4221 = vadd.f32 %v4157, 1.4214138
    %v4222 = vadd.f32 %v4158, 1.4214138
    %v4223 = vadd.f32 %v4159, 1.4214138
    %v4224 = vadd.f32 %v4160, 1.4214138
    %v4225 = vadd.f32 %v4161, 1.4214138
    %v4226 = vadd.f32 %v4162, 1.4214138
    %v4227 = vadd.f32 %v4163, 1.4214138
    %v4228 = vadd.f32 %v4164, 1.4214138
    %v4229 = vadd.f32 %v4165, 1.4214138
    %v4230 = vadd.f32 %v4166, 1.4214138
    %v4231 = vadd.f32 %v4167, 1.4214138
    %v4232 = vadd.f32 %v4168, 1.4214138
    %v4233 = vadd.f32 %v4169, 1.4214138
    %v4234 = vadd.f32 %v4170, 1.4214138
    %v4235 = vadd.f32 %v4171, 1.4214138
    %v4236 = vadd.f32 %v4172, 1.4214138
    %v4237 = vadd.f32 %v4173, 1.4214138
    %v4238 = vadd.f32 %v4174, 1.4214138
    %v4239 = vadd.f32 %v4175, 1.4214138
    %v4240 = vadd.f32 %v4176, 1.4214138
    %v4241 = vadd.f32 %v4177, 1.4214138
    %v4242 = vadd.f32 %v4178, 1.4214138
    %v4243 = vadd.f32 %v4179, 1.4214138
    %v4244 = vadd.f32 %v4180, 1.4214138
    %v4245 = vadd.f32 %v4181, 1.4214138
    %v4246 = vadd.f32 %v4182, 1.4214138
    %v4247 = vadd.f32 %v4183, 1.4214138
    %v4248 = vadd.f32 %v4184, 1.4214138
    %v4249 = vadd.f32 %v4185, 1.4214138
    %v4250 = vadd.f32 %v4186, 1.4214138
    %v4251 = vadd.f32 %v4187, 1.4214138
    %v4252 = vadd.f32 %v4188, 1.4214138
    %v4253 = vadd.f32 %v4189, 1.4214138
    %v4254 = vadd.f32 %v4190, 1.4214138
    %v4255 = vadd.f32 %v4191, 1.4214138
    %v4256 = vadd.f32 %v4192, 1.4214138
    %v4257 = vadd.f32 %v4193, 1.4214138
    %v4258 = vadd.f32 %v4194, 1.4214138
    %v4259 = vadd.f32 %v4195, 1.4214138
    %v4260 = vadd.f32 %v4196, 1.4214138
    %v4261 = vadd.f32 %v4197, 1.4214138
    %v4262 = vadd.f32 %v4198, 1.4214138
    %v4263 = vadd.f32 %v4199, 1.4214138
    %v4264 = vadd.f32 %v4200, 1.4214138
    %v4265 = vadd.f32 %v4201, 1.4214138
    %v4266 = vadd.f32 %v4202, 1.4214138
    %v4267 = vadd.f32 %v4203, 1.4214138
    %v4268 = vadd.f32 %v4204, 1.4214138
    %v4269 = vadd.f32 %v4205, 1.4214138
    %v4270 = vadd.f32 %v4206, 1.4214138
    %v4271 = vadd.f32 %v4207, 1.4214138
    %v4272 = vadd.f32 %v4208, 1.4214138
    %v4273 = vadd.f32 %v4209, 1.4214138
    %v4274 = vadd.f32 %v4210, 1.4214138
    %v4275 = vadd.f32 %v4211, 1.4214138
    %v4276 = vadd.f32 %v4212, 1.4214138
    %v4277 = vadd.f32 %v4213, 1.4214138
    %v4278 = vadd.f32 %v4214, 1.4214138
    %v4279 = vadd.f32 %v4215, 1.4214138
    %v4280 = vadd.f32 %v4216, 1.4214138
    %v4281 = vadd.f32 %v4217, 1.4214138
    %v4282 = vadd.f32 %v4218, 1.4214138
    %v4283 = vadd.f32 %v4219, 1.4214138
    %v4284 = vmul.f32 %v4220, %v3964
    %v4285 = vmul.f32 %v4221, %v3965
    %v4286 = vmul.f32 %v4222, %v3966
    %v4287 = vmul.f32 %v4223, %v3967
    %v4288 = vmul.f32 %v4224, %v3968
    %v4289 = vmul.f32 %v4225, %v3969
    %v4290 = vmul.f32 %v4226, %v3970
    %v4291 = vmul.f32 %v4227, %v3971
    %v4292 = vmul.f32 %v4228, %v3972
    %v4293 = vmul.f32 %v4229, %v3973
    %v4294 = vmul.f32 %v4230, %v3974
    %v4295 = vmul.f32 %v4231, %v3975
    %v4296 = vmul.f32 %v4232, %v3976
    %v4297 = vmul.f32 %v4233, %v3977
    %v4298 = vmul.f32 %v4234, %v3978
    %v4299 = vmul.f32 %v4235, %v3979
    %v4300 = vmul.f32 %v4236, %v3980
    %v4301 = vmul.f32 %v4237, %v3981
    %v4302 = vmul.f32 %v4238, %v3982
    %v4303 = vmul.f32 %v4239, %v3983
    %v4304 = vmul.f32 %v4240, %v3984
    %v4305 = vmul.f32 %v4241, %v3985
    %v4306 = vmul.f32 %v4242, %v3986
    %v4307 = vmul.f32 %v4243, %v3987
    %v4308 = vmul.f32 %v4244, %v3988
    %v4309 = vmul.f32 %v4245, %v3989
    %v4310 = vmul.f32 %v4246, %v3990
    %v4311 = vmul.f32 %v4247, %v3991
    %v4312 = vmul.f32 %v4248, %v3992
    %v4313 = vmul.f32 %v4249, %v3993
    %v4314 = vmul.f32 %v4250, %v3994
    %v4315 = vmul.f32 %v4251, %v3995
    %v4316 = vmul.f32 %v4252, %v3996
    %v4317 = vmul.f32 %v4253, %v3997
    %v4318 = vmul.f32 %v4254, %v3998
    %v4319 = vmul.f32 %v4255, %v3999
    %v4320 = vmul.f32 %v4256, %v4000
    %v4321 = vmul.f32 %v4257, %v4001
    %v4322 = vmul.f32 %v4258, %v4002
    %v4323 = vmul.f32 %v4259, %v4003
    %v4324 = vmul.f32 %v4260, %v4004
    %v4325 = vmul.f32 %v4261, %v4005
    %v4326 = vmul.f32 %v4262, %v4006
    %v4327 = vmul.f32 %v4263, %v4007
    %v4328 = vmul.f32 %v4264, %v4008
    %v4329 = vmul.f32 %v4265, %v4009
    %v4330 = vmul.f32 %v4266, %v4010
    %v4331 = vmul.f32 %v4267, %v4011
    %v4332 = vmul.f32 %v4268, %v4012
    %v4333 = vmul.f32 %v4269, %v4013
    %v4334 = vmul.f32 %v4270, %v4014
    %v4335 = vmul.f32 %v4271, %v4015
    %v4336 = vmul.f32 %v4272, %v4016
    %v4337 = vmul.f32 %v4273, %v4017
    %v4338 = vmul.f32 %v4274, %v4018
    %v4339 = vmul.f32 %v4275, %v4019
    %v4340 = vmul.f32 %v4276, %v4020
    %v4341 = vmul.f32 %v4277, %v4021
    %v4342 = vmul.f32 %v4278, %v4022
    %v4343 = vmul.f32 %v4279, %v4023
    %v4344 = vmul.f32 %v4280, %v4024
    %v4345 = vmul.f32 %v4281, %v4025
    %v4346 = vmul.f32 %v4282, %v4026
    %v4347 = vmul.f32 %v4283, %v4027
    %v4348 = vadd.f32 %v4284, -0.28449672
    %v4349 = vadd.f32 %v4285, -0.28449672
    %v4350 = vadd.f32 %v4286, -0.28449672
    %v4351 = vadd.f32 %v4287, -0.28449672
    %v4352 = vadd.f32 %v4288, -0.28449672
    %v4353 = vadd.f32 %v4289, -0.28449672
    %v4354 = vadd.f32 %v4290, -0.28449672
    %v4355 = vadd.f32 %v4291, -0.28449672
    %v4356 = vadd.f32 %v4292, -0.28449672
    %v4357 = vadd.f32 %v4293, -0.28449672
    %v4358 = vadd.f32 %v4294, -0.28449672
    %v4359 = vadd.f32 %v4295, -0.28449672
    %v4360 = vadd.f32 %v4296, -0.28449672
    %v4361 = vadd.f32 %v4297, -0.28449672
    %v4362 = vadd.f32 %v4298, -0.28449672
    %v4363 = vadd.f32 %v4299, -0.28449672
    %v4364 = vadd.f32 %v4300, -0.28449672
    %v4365 = vadd.f32 %v4301, -0.28449672
    %v4366 = vadd.f32 %v4302, -0.28449672
    %v4367 = vadd.f32 %v4303, -0.28449672
    %v4368 = vadd.f32 %v4304, -0.28449672
    %v4369 = vadd.f32 %v4305, -0.28449672
    %v4370 = vadd.f32 %v4306, -0.28449672
    %v4371 = vadd.f32 %v4307, -0.28449672
    %v4372 = vadd.f32 %v4308, -0.28449672
    %v4373 = vadd.f32 %v4309, -0.28449672
    %v4374 = vadd.f32 %v4310, -0.28449672
    %v4375 = vadd.f32 %v4311, -0.28449672
    %v4376 = vadd.f32 %v4312, -0.28449672
    %v4377 = vadd.f32 %v4313, -0.28449672
    %v4378 = vadd.f32 %v4314, -0.28449672
    %v4379 = vadd.f32 %v4315, -0.28449672
    %v4380 = vadd.f32 %v4316, -0.28449672
    %v4381 = vadd.f32 %v4317, -0.28449672
    %v4382 = vadd.f32 %v4318, -0.28449672
    %v4383 = vadd.f32 %v4319, -0.28449672
    %v4384 = vadd.f32 %v4320, -0.28449672
    %v4385 = vadd.f32 %v4321, -0.28449672
    %v4386 = vadd.f32 %v4322, -0.28449672
    %v4387 = vadd.f32 %v4323, -0.28449672
    %v4388 = vadd.f32 %v4324, -0.28449672
    %v4389 = vadd.f32 %v4325, -0.28449672
    %v4390 = vadd.f32 %v4326, -0.28449672
    %v4391 = vadd.f32 %v4327, -0.28449672
    %v4392 = vadd.f32 %v4328, -0.28449672
    %v4393 = vadd.f32 %v4329, -0.28449672
    %v4394 = vadd.f32 %v4330, -0.28449672
    %v4395 = vadd.f32 %v4331, -0.28449672
    %v4396 = vadd.f32 %v4332, -0.28449672
    %v4397 = vadd.f32 %v4333, -0.28449672
    %v4398 = vadd.f32 %v4334, -0.28449672
    %v4399 = vadd.f32 %v4335, -0.28449672
    %v4400 = vadd.f32 %v4336, -0.28449672
    %v4401 = vadd.f32 %v4337, -0.28449672
    %v4402 = vadd.f32 %v4338, -0.28449672
    %v4403 = vadd.f32 %v4339, -0.28449672
    %v4404 = vadd.f32 %v4340, -0.28449672
    %v4405 = vadd.f32 %v4341, -0.28449672
    %v4406 = vadd.f32 %v4342, -0.28449672
    %v4407 = vadd.f32 %v4343, -0.28449672
    %v4408 = vadd.f32 %v4344, -0.28449672
    %v4409 = vadd.f32 %v4345, -0.28449672
    %v4410 = vadd.f32 %v4346, -0.28449672
    %v4411 = vadd.f32 %v4347, -0.28449672
    %v4412 = vmul.f32 %v4348, %v3964
    %v4413 = vmul.f32 %v4349, %v3965
    %v4414 = vmul.f32 %v4350, %v3966
    %v4415 = vmul.f32 %v4351, %v3967
    %v4416 = vmul.f32 %v4352, %v3968
    %v4417 = vmul.f32 %v4353, %v3969
    %v4418 = vmul.f32 %v4354, %v3970
    %v4419 = vmul.f32 %v4355, %v3971
    %v4420 = vmul.f32 %v4356, %v3972
    %v4421 = vmul.f32 %v4357, %v3973
    %v4422 = vmul.f32 %v4358, %v3974
    %v4423 = vmul.f32 %v4359, %v3975
    %v4424 = vmul.f32 %v4360, %v3976
    %v4425 = vmul.f32 %v4361, %v3977
    %v4426 = vmul.f32 %v4362, %v3978
    %v4427 = vmul.f32 %v4363, %v3979
    %v4428 = vmul.f32 %v4364, %v3980
    %v4429 = vmul.f32 %v4365, %v3981
    %v4430 = vmul.f32 %v4366, %v3982
    %v4431 = vmul.f32 %v4367, %v3983
    %v4432 = vmul.f32 %v4368, %v3984
    %v4433 = vmul.f32 %v4369, %v3985
    %v4434 = vmul.f32 %v4370, %v3986
    %v4435 = vmul.f32 %v4371, %v3987
    %v4436 = vmul.f32 %v4372, %v3988
    %v4437 = vmul.f32 %v4373, %v3989
    %v4438 = vmul.f32 %v4374, %v3990
    %v4439 = vmul.f32 %v4375, %v3991
    %v4440 = vmul.f32 %v4376, %v3992
    %v4441 = vmul.f32 %v4377, %v3993
    %v4442 = vmul.f32 %v4378, %v3994
    %v4443 = vmul.f32 %v4379, %v3995
    %v4444 = vmul.f32 %v4380, %v3996
    %v4445 = vmul.f32 %v4381, %v3997
    %v4446 = vmul.f32 %v4382, %v3998
    %v4447 = vmul.f32 %v4383, %v3999
    %v4448 = vmul.f32 %v4384, %v4000
    %v4449 = vmul.f32 %v4385, %v4001
    %v4450 = vmul.f32 %v4386, %v4002
    %v4451 = vmul.f32 %v4387, %v4003
    %v4452 = vmul.f32 %v4388, %v4004
    %v4453 = vmul.f32 %v4389, %v4005
    %v4454 = vmul.f32 %v4390, %v4006
    %v4455 = vmul.f32 %v4391, %v4007
    %v4456 = vmul.f32 %v4392, %v4008
    %v4457 = vmul.f32 %v4393, %v4009
    %v4458 = vmul.f32 %v4394, %v4010
    %v4459 = vmul.f32 %v4395, %v4011
    %v4460 = vmul.f32 %v4396, %v4012
    %v4461 = vmul.f32 %v4397, %v4013
    %v4462 = vmul.f32 %v4398, %v4014
    %v4463 = vmul.f32 %v4399, %v4015
    %v4464 = vmul.f32 %v4400, %v4016
    %v4465 = vmul.f32 %v4401, %v4017
    %v4466 = vmul.f32 %v4402, %v4018
    %v4467 = vmul.f32 %v4403, %v4019
    %v4468 = vmul.f32 %v4404, %v4020
    %v4469 = vmul.f32 %v4405, %v4021
    %v4470 = vmul.f32 %v4406, %v4022
    %v4471 = vmul.f32 %v4407, %v4023
    %v4472 = vmul.f32 %v4408, %v4024
    %v4473 = vmul.f32 %v4409, %v4025
    %v4474 = vmul.f32 %v4410, %v4026
    %v4475 = vmul.f32 %v4411, %v4027
    %v4476 = vadd.f32 %v4412, 0.2548296
    %v4477 = vadd.f32 %v4413, 0.2548296
    %v4478 = vadd.f32 %v4414, 0.2548296
    %v4479 = vadd.f32 %v4415, 0.2548296
    %v4480 = vadd.f32 %v4416, 0.2548296
    %v4481 = vadd.f32 %v4417, 0.2548296
    %v4482 = vadd.f32 %v4418, 0.2548296
    %v4483 = vadd.f32 %v4419, 0.2548296
    %v4484 = vadd.f32 %v4420, 0.2548296
    %v4485 = vadd.f32 %v4421, 0.2548296
    %v4486 = vadd.f32 %v4422, 0.2548296
    %v4487 = vadd.f32 %v4423, 0.2548296
    %v4488 = vadd.f32 %v4424, 0.2548296
    %v4489 = vadd.f32 %v4425, 0.2548296
    %v4490 = vadd.f32 %v4426, 0.2548296
    %v4491 = vadd.f32 %v4427, 0.2548296
    %v4492 = vadd.f32 %v4428, 0.2548296
    %v4493 = vadd.f32 %v4429, 0.2548296
    %v4494 = vadd.f32 %v4430, 0.2548296
    %v4495 = vadd.f32 %v4431, 0.2548296
    %v4496 = vadd.f32 %v4432, 0.2548296
    %v4497 = vadd.f32 %v4433, 0.2548296
    %v4498 = vadd.f32 %v4434, 0.2548296
    %v4499 = vadd.f32 %v4435, 0.2548296
    %v4500 = vadd.f32 %v4436, 0.2548296
    %v4501 = vadd.f32 %v4437, 0.2548296
    %v4502 = vadd.f32 %v4438, 0.2548296
    %v4503 = vadd.f32 %v4439, 0.2548296
    %v4504 = vadd.f32 %v4440, 0.2548296
    %v4505 = vadd.f32 %v4441, 0.2548296
    %v4506 = vadd.f32 %v4442, 0.2548296
    %v4507 = vadd.f32 %v4443, 0.2548296
    %v4508 = vadd.f32 %v4444, 0.2548296
    %v4509 = vadd.f32 %v4445, 0.2548296
    %v4510 = vadd.f32 %v4446, 0.2548296
    %v4511 = vadd.f32 %v4447, 0.2548296
    %v4512 = vadd.f32 %v4448, 0.2548296
    %v4513 = vadd.f32 %v4449, 0.2548296
    %v4514 = vadd.f32 %v4450, 0.2548296
    %v4515 = vadd.f32 %v4451, 0.2548296
    %v4516 = vadd.f32 %v4452, 0.2548296
    %v4517 = vadd.f32 %v4453, 0.2548296
    %v4518 = vadd.f32 %v4454, 0.2548296
    %v4519 = vadd.f32 %v4455, 0.2548296
    %v4520 = vadd.f32 %v4456, 0.2548296
    %v4521 = vadd.f32 %v4457, 0.2548296
    %v4522 = vadd.f32 %v4458, 0.2548296
    %v4523 = vadd.f32 %v4459, 0.2548296
    %v4524 = vadd.f32 %v4460, 0.2548296
    %v4525 = vadd.f32 %v4461, 0.2548296
    %v4526 = vadd.f32 %v4462, 0.2548296
    %v4527 = vadd.f32 %v4463, 0.2548296
    %v4528 = vadd.f32 %v4464, 0.2548296
    %v4529 = vadd.f32 %v4465, 0.2548296
    %v4530 = vadd.f32 %v4466, 0.2548296
    %v4531 = vadd.f32 %v4467, 0.2548296
    %v4532 = vadd.f32 %v4468, 0.2548296
    %v4533 = vadd.f32 %v4469, 0.2548296
    %v4534 = vadd.f32 %v4470, 0.2548296
    %v4535 = vadd.f32 %v4471, 0.2548296
    %v4536 = vadd.f32 %v4472, 0.2548296
    %v4537 = vadd.f32 %v4473, 0.2548296
    %v4538 = vadd.f32 %v4474, 0.2548296
    %v4539 = vadd.f32 %v4475, 0.2548296
    %v4540 = vmul.f32 %v4476, %v3964
    %v4541 = vmul.f32 %v4477, %v3965
    %v4542 = vmul.f32 %v4478, %v3966
    %v4543 = vmul.f32 %v4479, %v3967
    %v4544 = vmul.f32 %v4480, %v3968
    %v4545 = vmul.f32 %v4481, %v3969
    %v4546 = vmul.f32 %v4482, %v3970
    %v4547 = vmul.f32 %v4483, %v3971
    %v4548 = vmul.f32 %v4484, %v3972
    %v4549 = vmul.f32 %v4485, %v3973
    %v4550 = vmul.f32 %v4486, %v3974
    %v4551 = vmul.f32 %v4487, %v3975
    %v4552 = vmul.f32 %v4488, %v3976
    %v4553 = vmul.f32 %v4489, %v3977
    %v4554 = vmul.f32 %v4490, %v3978
    %v4555 = vmul.f32 %v4491, %v3979
    %v4556 = vmul.f32 %v4492, %v3980
    %v4557 = vmul.f32 %v4493, %v3981
    %v4558 = vmul.f32 %v4494, %v3982
    %v4559 = vmul.f32 %v4495, %v3983
    %v4560 = vmul.f32 %v4496, %v3984
    %v4561 = vmul.f32 %v4497, %v3985
    %v4562 = vmul.f32 %v4498, %v3986
    %v4563 = vmul.f32 %v4499, %v3987
    %v4564 = vmul.f32 %v4500, %v3988
    %v4565 = vmul.f32 %v4501, %v3989
    %v4566 = vmul.f32 %v4502, %v3990
    %v4567 = vmul.f32 %v4503, %v3991
    %v4568 = vmul.f32 %v4504, %v3992
    %v4569 = vmul.f32 %v4505, %v3993
    %v4570 = vmul.f32 %v4506, %v3994
    %v4571 = vmul.f32 %v4507, %v3995
    %v4572 = vmul.f32 %v4508, %v3996
    %v4573 = vmul.f32 %v4509, %v3997
    %v4574 = vmul.f32 %v4510, %v3998
    %v4575 = vmul.f32 %v4511, %v3999
    %v4576 = vmul.f32 %v4512, %v4000
    %v4577 = vmul.f32 %v4513, %v4001
    %v4578 = vmul.f32 %v4514, %v4002
    %v4579 = vmul.f32 %v4515, %v4003
    %v4580 = vmul.f32 %v4516, %v4004
    %v4581 = vmul.f32 %v4517, %v4005
    %v4582 = vmul.f32 %v4518, %v4006
    %v4583 = vmul.f32 %v4519, %v4007
    %v4584 = vmul.f32 %v4520, %v4008
    %v4585 = vmul.f32 %v4521, %v4009
    %v4586 = vmul.f32 %v4522, %v4010
    %v4587 = vmul.f32 %v4523, %v4011
    %v4588 = vmul.f32 %v4524, %v4012
    %v4589 = vmul.f32 %v4525, %v4013
    %v4590 = vmul.f32 %v4526, %v4014
    %v4591 = vmul.f32 %v4527, %v4015
    %v4592 = vmul.f32 %v4528, %v4016
    %v4593 = vmul.f32 %v4529, %v4017
    %v4594 = vmul.f32 %v4530, %v4018
    %v4595 = vmul.f32 %v4531, %v4019
    %v4596 = vmul.f32 %v4532, %v4020
    %v4597 = vmul.f32 %v4533, %v4021
    %v4598 = vmul.f32 %v4534, %v4022
    %v4599 = vmul.f32 %v4535, %v4023
    %v4600 = vmul.f32 %v4536, %v4024
    %v4601 = vmul.f32 %v4537, %v4025
    %v4602 = vmul.f32 %v4538, %v4026
    %v4603 = vmul.f32 %v4539, %v4027
    %v4604 = vsub.f32 0.0, %v3772
    %v4605 = vsub.f32 0.0, %v3773
    %v4606 = vsub.f32 0.0, %v3774
    %v4607 = vsub.f32 0.0, %v3775
    %v4608 = vsub.f32 0.0, %v3776
    %v4609 = vsub.f32 0.0, %v3777
    %v4610 = vsub.f32 0.0, %v3778
    %v4611 = vsub.f32 0.0, %v3779
    %v4612 = vsub.f32 0.0, %v3780
    %v4613 = vsub.f32 0.0, %v3781
    %v4614 = vsub.f32 0.0, %v3782
    %v4615 = vsub.f32 0.0, %v3783
    %v4616 = vsub.f32 0.0, %v3784
    %v4617 = vsub.f32 0.0, %v3785
    %v4618 = vsub.f32 0.0, %v3786
    %v4619 = vsub.f32 0.0, %v3787
    %v4620 = vsub.f32 0.0, %v3788
    %v4621 = vsub.f32 0.0, %v3789
    %v4622 = vsub.f32 0.0, %v3790
    %v4623 = vsub.f32 0.0, %v3791
    %v4624 = vsub.f32 0.0, %v3792
    %v4625 = vsub.f32 0.0, %v3793
    %v4626 = vsub.f32 0.0, %v3794
    %v4627 = vsub.f32 0.0, %v3795
    %v4628 = vsub.f32 0.0, %v3796
    %v4629 = vsub.f32 0.0, %v3797
    %v4630 = vsub.f32 0.0, %v3798
    %v4631 = vsub.f32 0.0, %v3799
    %v4632 = vsub.f32 0.0, %v3800
    %v4633 = vsub.f32 0.0, %v3801
    %v4634 = vsub.f32 0.0, %v3802
    %v4635 = vsub.f32 0.0, %v3803
    %v4636 = vsub.f32 0.0, %v3804
    %v4637 = vsub.f32 0.0, %v3805
    %v4638 = vsub.f32 0.0, %v3806
    %v4639 = vsub.f32 0.0, %v3807
    %v4640 = vsub.f32 0.0, %v3808
    %v4641 = vsub.f32 0.0, %v3809
    %v4642 = vsub.f32 0.0, %v3810
    %v4643 = vsub.f32 0.0, %v3811
    %v4644 = vsub.f32 0.0, %v3812
    %v4645 = vsub.f32 0.0, %v3813
    %v4646 = vsub.f32 0.0, %v3814
    %v4647 = vsub.f32 0.0, %v3815
    %v4648 = vsub.f32 0.0, %v3816
    %v4649 = vsub.f32 0.0, %v3817
    %v4650 = vsub.f32 0.0, %v3818
    %v4651 = vsub.f32 0.0, %v3819
    %v4652 = vsub.f32 0.0, %v3820
    %v4653 = vsub.f32 0.0, %v3821
    %v4654 = vsub.f32 0.0, %v3822
    %v4655 = vsub.f32 0.0, %v3823
    %v4656 = vsub.f32 0.0, %v3824
    %v4657 = vsub.f32 0.0, %v3825
    %v4658 = vsub.f32 0.0, %v3826
    %v4659 = vsub.f32 0.0, %v3827
    %v4660 = vsub.f32 0.0, %v3828
    %v4661 = vsub.f32 0.0, %v3829
    %v4662 = vsub.f32 0.0, %v3830
    %v4663 = vsub.f32 0.0, %v3831
    %v4664 = vsub.f32 0.0, %v3832
    %v4665 = vsub.f32 0.0, %v3833
    %v4666 = vsub.f32 0.0, %v3834
    %v4667 = vsub.f32 0.0, %v3835
    %v4668 = vmul.f32 %v4604, %v3772
    %v4669 = vmul.f32 %v4605, %v3773
    %v4670 = vmul.f32 %v4606, %v3774
    %v4671 = vmul.f32 %v4607, %v3775
    %v4672 = vmul.f32 %v4608, %v3776
    %v4673 = vmul.f32 %v4609, %v3777
    %v4674 = vmul.f32 %v4610, %v3778
    %v4675 = vmul.f32 %v4611, %v3779
    %v4676 = vmul.f32 %v4612, %v3780
    %v4677 = vmul.f32 %v4613, %v3781
    %v4678 = vmul.f32 %v4614, %v3782
    %v4679 = vmul.f32 %v4615, %v3783
    %v4680 = vmul.f32 %v4616, %v3784
    %v4681 = vmul.f32 %v4617, %v3785
    %v4682 = vmul.f32 %v4618, %v3786
    %v4683 = vmul.f32 %v4619, %v3787
    %v4684 = vmul.f32 %v4620, %v3788
    %v4685 = vmul.f32 %v4621, %v3789
    %v4686 = vmul.f32 %v4622, %v3790
    %v4687 = vmul.f32 %v4623, %v3791
    %v4688 = vmul.f32 %v4624, %v3792
    %v4689 = vmul.f32 %v4625, %v3793
    %v4690 = vmul.f32 %v4626, %v3794
    %v4691 = vmul.f32 %v4627, %v3795
    %v4692 = vmul.f32 %v4628, %v3796
    %v4693 = vmul.f32 %v4629, %v3797
    %v4694 = vmul.f32 %v4630, %v3798
    %v4695 = vmul.f32 %v4631, %v3799
    %v4696 = vmul.f32 %v4632, %v3800
    %v4697 = vmul.f32 %v4633, %v3801
    %v4698 = vmul.f32 %v4634, %v3802
    %v4699 = vmul.f32 %v4635, %v3803
    %v4700 = vmul.f32 %v4636, %v3804
    %v4701 = vmul.f32 %v4637, %v3805
    %v4702 = vmul.f32 %v4638, %v3806
    %v4703 = vmul.f32 %v4639, %v3807
    %v4704 = vmul.f32 %v4640, %v3808
    %v4705 = vmul.f32 %v4641, %v3809
    %v4706 = vmul.f32 %v4642, %v3810
    %v4707 = vmul.f32 %v4643, %v3811
    %v4708 = vmul.f32 %v4644, %v3812
    %v4709 = vmul.f32 %v4645, %v3813
    %v4710 = vmul.f32 %v4646, %v3814
    %v4711 = vmul.f32 %v4647, %v3815
    %v4712 = vmul.f32 %v4648, %v3816
    %v4713 = vmul.f32 %v4649, %v3817
    %v4714 = vmul.f32 %v4650, %v3818
    %v4715 = vmul.f32 %v4651, %v3819
    %v4716 = vmul.f32 %v4652, %v3820
    %v4717 = vmul.f32 %v4653, %v3821
    %v4718 = vmul.f32 %v4654, %v3822
    %v4719 = vmul.f32 %v4655, %v3823
    %v4720 = vmul.f32 %v4656, %v3824
    %v4721 = vmul.f32 %v4657, %v3825
    %v4722 = vmul.f32 %v4658, %v3826
    %v4723 = vmul.f32 %v4659, %v3827
    %v4724 = vmul.f32 %v4660, %v3828
    %v4725 = vmul.f32 %v4661, %v3829
    %v4726 = vmul.f32 %v4662, %v3830
    %v4727 = vmul.f32 %v4663, %v3831
    %v4728 = vmul.f32 %v4664, %v3832
    %v4729 = vmul.f32 %v4665, %v3833
    %v4730 = vmul.f32 %v4666, %v3834
    %v4731 = vmul.f32 %v4667, %v3835
    %v4732 = vmul.f32 %v4668, 1.442695
    %v4733 = vpow.pop %v4732
    %v4734 = vmul.f32 %v4669, 1.442695
    %v4735 = vpow.pop %v4734
    %v4736 = vmul.f32 %v4670, 1.442695
    %v4737 = vpow.pop %v4736
    %v4738 = vmul.f32 %v4671, 1.442695
    %v4739 = vpow.pop %v4738
    %v4740 = vmul.f32 %v4672, 1.442695
    %v4741 = vpow.pop %v4740
    %v4742 = vmul.f32 %v4673, 1.442695
    %v4743 = vpow.pop %v4742
    %v4744 = vmul.f32 %v4674, 1.442695
    %v4745 = vpow.pop %v4744
    %v4746 = vmul.f32 %v4675, 1.442695
    %v4747 = vpow.pop %v4746
    %v4748 = vmul.f32 %v4676, 1.442695
    %v4749 = vpow.pop %v4748
    %v4750 = vmul.f32 %v4677, 1.442695
    %v4751 = vpow.pop %v4750
    %v4752 = vmul.f32 %v4678, 1.442695
    %v4753 = vpow.pop %v4752
    %v4754 = vmul.f32 %v4679, 1.442695
    %v4755 = vpow.pop %v4754
    %v4756 = vmul.f32 %v4680, 1.442695
    %v4757 = vpow.pop %v4756
    %v4758 = vmul.f32 %v4681, 1.442695
    %v4759 = vpow.pop %v4758
    %v4760 = vmul.f32 %v4682, 1.442695
    %v4761 = vpow.pop %v4760
    %v4762 = vmul.f32 %v4683, 1.442695
    %v4763 = vpow.pop %v4762
    %v4764 = vmul.f32 %v4684, 1.442695
    %v4765 = vpow.pop %v4764
    %v4766 = vmul.f32 %v4685, 1.442695
    %v4767 = vpow.pop %v4766
    %v4768 = vmul.f32 %v4686, 1.442695
    %v4769 = vpow.pop %v4768
    %v4770 = vmul.f32 %v4687, 1.442695
    %v4771 = vpow.pop %v4770
    %v4772 = vmul.f32 %v4688, 1.442695
    %v4773 = vpow.pop %v4772
    %v4774 = vmul.f32 %v4689, 1.442695
    %v4775 = vpow.pop %v4774
    %v4776 = vmul.f32 %v4690, 1.442695
    %v4777 = vpow.pop %v4776
    %v4778 = vmul.f32 %v4691, 1.442695
    %v4779 = vpow.pop %v4778
    %v4780 = vmul.f32 %v4692, 1.442695
    %v4781 = vpow.pop %v4780
    %v4782 = vmul.f32 %v4693, 1.442695
    %v4783 = vpow.pop %v4782
    %v4784 = vmul.f32 %v4694, 1.442695
    %v4785 = vpow.pop %v4784
    %v4786 = vmul.f32 %v4695, 1.442695
    %v4787 = vpow.pop %v4786
    %v4788 = vmul.f32 %v4696, 1.442695
    %v4789 = vpow.pop %v4788
    %v4790 = vmul.f32 %v4697, 1.442695
    %v4791 = vpow.pop %v4790
    %v4792 = vmul.f32 %v4698, 1.442695
    %v4793 = vpow.pop %v4792
    %v4794 = vmul.f32 %v4699, 1.442695
    %v4795 = vpow.pop %v4794
    %v4796 = vmul.f32 %v4700, 1.442695
    %v4797 = vpow.pop %v4796
    %v4798 = vmul.f32 %v4701, 1.442695
    %v4799 = vpow.pop %v4798
    %v4800 = vmul.f32 %v4702, 1.442695
    %v4801 = vpow.pop %v4800
    %v4802 = vmul.f32 %v4703, 1.442695
    %v4803 = vpow.pop %v4802
    %v4804 = vmul.f32 %v4704, 1.442695
    %v4805 = vpow.pop %v4804
    %v4806 = vmul.f32 %v4705, 1.442695
    %v4807 = vpow.pop %v4806
    %v4808 = vmul.f32 %v4706, 1.442695
    %v4809 = vpow.pop %v4808
    %v4810 = vmul.f32 %v4707, 1.442695
    %v4811 = vpow.pop %v4810
    %v4812 = vmul.f32 %v4708, 1.442695
    %v4813 = vpow.pop %v4812
    %v4814 = vmul.f32 %v4709, 1.442695
    %v4815 = vpow.pop %v4814
    %v4816 = vmul.f32 %v4710, 1.442695
    %v4817 = vpow.pop %v4816
    %v4818 = vmul.f32 %v4711, 1.442695
    %v4819 = vpow.pop %v4818
    %v4820 = vmul.f32 %v4712, 1.442695
    %v4821 = vpow.pop %v4820
    %v4822 = vmul.f32 %v4713, 1.442695
    %v4823 = vpow.pop %v4822
    %v4824 = vmul.f32 %v4714, 1.442695
    %v4825 = vpow.pop %v4824
    %v4826 = vmul.f32 %v4715, 1.442695
    %v4827 = vpow.pop %v4826
    %v4828 = vmul.f32 %v4716, 1.442695
    %v4829 = vpow.pop %v4828
    %v4830 = vmul.f32 %v4717, 1.442695
    %v4831 = vpow.pop %v4830
    %v4832 = vmul.f32 %v4718, 1.442695
    %v4833 = vpow.pop %v4832
    %v4834 = vmul.f32 %v4719, 1.442695
    %v4835 = vpow.pop %v4834
    %v4836 = vmul.f32 %v4720, 1.442695
    %v4837 = vpow.pop %v4836
    %v4838 = vmul.f32 %v4721, 1.442695
    %v4839 = vpow.pop %v4838
    %v4840 = vmul.f32 %v4722, 1.442695
    %v4841 = vpow.pop %v4840
    %v4842 = vmul.f32 %v4723, 1.442695
    %v4843 = vpow.pop %v4842
    %v4844 = vmul.f32 %v4724, 1.442695
    %v4845 = vpow.pop %v4844
    %v4846 = vmul.f32 %v4725, 1.442695
    %v4847 = vpow.pop %v4846
    %v4848 = vmul.f32 %v4726, 1.442695
    %v4849 = vpow.pop %v4848
    %v4850 = vmul.f32 %v4727, 1.442695
    %v4851 = vpow.pop %v4850
    %v4852 = vmul.f32 %v4728, 1.442695
    %v4853 = vpow.pop %v4852
    %v4854 = vmul.f32 %v4729, 1.442695
    %v4855 = vpow.pop %v4854
    %v4856 = vmul.f32 %v4730, 1.442695
    %v4857 = vpow.pop %v4856
    %v4858 = vmul.f32 %v4731, 1.442695
    %v4859 = vpow.pop %v4858
    %v4860 = vmul.f32 %v4540, %v4733
    %v4861 = vmul.f32 %v4541, %v4735
    %v4862 = vmul.f32 %v4542, %v4737
    %v4863 = vmul.f32 %v4543, %v4739
    %v4864 = vmul.f32 %v4544, %v4741
    %v4865 = vmul.f32 %v4545, %v4743
    %v4866 = vmul.f32 %v4546, %v4745
    %v4867 = vmul.f32 %v4547, %v4747
    %v4868 = vmul.f32 %v4548, %v4749
    %v4869 = vmul.f32 %v4549, %v4751
    %v4870 = vmul.f32 %v4550, %v4753
    %v4871 = vmul.f32 %v4551, %v4755
    %v4872 = vmul.f32 %v4552, %v4757
    %v4873 = vmul.f32 %v4553, %v4759
    %v4874 = vmul.f32 %v4554, %v4761
    %v4875 = vmul.f32 %v4555, %v4763
    %v4876 = vmul.f32 %v4556, %v4765
    %v4877 = vmul.f32 %v4557, %v4767
    %v4878 = vmul.f32 %v4558, %v4769
    %v4879 = vmul.f32 %v4559, %v4771
    %v4880 = vmul.f32 %v4560, %v4773
    %v4881 = vmul.f32 %v4561, %v4775
    %v4882 = vmul.f32 %v4562, %v4777
    %v4883 = vmul.f32 %v4563, %v4779
    %v4884 = vmul.f32 %v4564, %v4781
    %v4885 = vmul.f32 %v4565, %v4783
    %v4886 = vmul.f32 %v4566, %v4785
    %v4887 = vmul.f32 %v4567, %v4787
    %v4888 = vmul.f32 %v4568, %v4789
    %v4889 = vmul.f32 %v4569, %v4791
    %v4890 = vmul.f32 %v4570, %v4793
    %v4891 = vmul.f32 %v4571, %v4795
    %v4892 = vmul.f32 %v4572, %v4797
    %v4893 = vmul.f32 %v4573, %v4799
    %v4894 = vmul.f32 %v4574, %v4801
    %v4895 = vmul.f32 %v4575, %v4803
    %v4896 = vmul.f32 %v4576, %v4805
    %v4897 = vmul.f32 %v4577, %v4807
    %v4898 = vmul.f32 %v4578, %v4809
    %v4899 = vmul.f32 %v4579, %v4811
    %v4900 = vmul.f32 %v4580, %v4813
    %v4901 = vmul.f32 %v4581, %v4815
    %v4902 = vmul.f32 %v4582, %v4817
    %v4903 = vmul.f32 %v4583, %v4819
    %v4904 = vmul.f32 %v4584, %v4821
    %v4905 = vmul.f32 %v4585, %v4823
    %v4906 = vmul.f32 %v4586, %v4825
    %v4907 = vmul.f32 %v4587, %v4827
    %v4908 = vmul.f32 %v4588, %v4829
    %v4909 = vmul.f32 %v4589, %v4831
    %v4910 = vmul.f32 %v4590, %v4833
    %v4911 = vmul.f32 %v4591, %v4835
    %v4912 = vmul.f32 %v4592, %v4837
    %v4913 = vmul.f32 %v4593, %v4839
    %v4914 = vmul.f32 %v4594, %v4841
    %v4915 = vmul.f32 %v4595, %v4843
    %v4916 = vmul.f32 %v4596, %v4845
    %v4917 = vmul.f32 %v4597, %v4847
    %v4918 = vmul.f32 %v4598, %v4849
    %v4919 = vmul.f32 %v4599, %v4851
    %v4920 = vmul.f32 %v4600, %v4853
    %v4921 = vmul.f32 %v4601, %v4855
    %v4922 = vmul.f32 %v4602, %v4857
    %v4923 = vmul.f32 %v4603, %v4859
    %v4924 = vsub.f32 1.0, %v4860
    %v4925 = vsub.f32 1.0, %v4861
    %v4926 = vsub.f32 1.0, %v4862
    %v4927 = vsub.f32 1.0, %v4863
    %v4928 = vsub.f32 1.0, %v4864
    %v4929 = vsub.f32 1.0, %v4865
    %v4930 = vsub.f32 1.0, %v4866
    %v4931 = vsub.f32 1.0, %v4867
    %v4932 = vsub.f32 1.0, %v4868
    %v4933 = vsub.f32 1.0, %v4869
    %v4934 = vsub.f32 1.0, %v4870
    %v4935 = vsub.f32 1.0, %v4871
    %v4936 = vsub.f32 1.0, %v4872
    %v4937 = vsub.f32 1.0, %v4873
    %v4938 = vsub.f32 1.0, %v4874
    %v4939 = vsub.f32 1.0, %v4875
    %v4940 = vsub.f32 1.0, %v4876
    %v4941 = vsub.f32 1.0, %v4877
    %v4942 = vsub.f32 1.0, %v4878
    %v4943 = vsub.f32 1.0, %v4879
    %v4944 = vsub.f32 1.0, %v4880
    %v4945 = vsub.f32 1.0, %v4881
    %v4946 = vsub.f32 1.0, %v4882
    %v4947 = vsub.f32 1.0, %v4883
    %v4948 = vsub.f32 1.0, %v4884
    %v4949 = vsub.f32 1.0, %v4885
    %v4950 = vsub.f32 1.0, %v4886
    %v4951 = vsub.f32 1.0, %v4887
    %v4952 = vsub.f32 1.0, %v4888
    %v4953 = vsub.f32 1.0, %v4889
    %v4954 = vsub.f32 1.0, %v4890
    %v4955 = vsub.f32 1.0, %v4891
    %v4956 = vsub.f32 1.0, %v4892
    %v4957 = vsub.f32 1.0, %v4893
    %v4958 = vsub.f32 1.0, %v4894
    %v4959 = vsub.f32 1.0, %v4895
    %v4960 = vsub.f32 1.0, %v4896
    %v4961 = vsub.f32 1.0, %v4897
    %v4962 = vsub.f32 1.0, %v4898
    %v4963 = vsub.f32 1.0, %v4899
    %v4964 = vsub.f32 1.0, %v4900
    %v4965 = vsub.f32 1.0, %v4901
    %v4966 = vsub.f32 1.0, %v4902
    %v4967 = vsub.f32 1.0, %v4903
    %v4968 = vsub.f32 1.0, %v4904
    %v4969 = vsub.f32 1.0, %v4905
    %v4970 = vsub.f32 1.0, %v4906
    %v4971 = vsub.f32 1.0, %v4907
    %v4972 = vsub.f32 1.0, %v4908
    %v4973 = vsub.f32 1.0, %v4909
    %v4974 = vsub.f32 1.0, %v4910
    %v4975 = vsub.f32 1.0, %v4911
    %v4976 = vsub.f32 1.0, %v4912
    %v4977 = vsub.f32 1.0, %v4913
    %v4978 = vsub.f32 1.0, %v4914
    %v4979 = vsub.f32 1.0, %v4915
    %v4980 = vsub.f32 1.0, %v4916
    %v4981 = vsub.f32 1.0, %v4917
    %v4982 = vsub.f32 1.0, %v4918
    %v4983 = vsub.f32 1.0, %v4919
    %v4984 = vsub.f32 1.0, %v4920
    %v4985 = vsub.f32 1.0, %v4921
    %v4986 = vsub.f32 1.0, %v4922
    %v4987 = vsub.f32 1.0, %v4923
    %v4988 = vmul.f32 %v3708, %v4924
    %v4989 = vmul.f32 %v3709, %v4925
    %v4990 = vmul.f32 %v3710, %v4926
    %v4991 = vmul.f32 %v3711, %v4927
    %v4992 = vmul.f32 %v3712, %v4928
    %v4993 = vmul.f32 %v3713, %v4929
    %v4994 = vmul.f32 %v3714, %v4930
    %v4995 = vmul.f32 %v3715, %v4931
    %v4996 = vmul.f32 %v3716, %v4932
    %v4997 = vmul.f32 %v3717, %v4933
    %v4998 = vmul.f32 %v3718, %v4934
    %v4999 = vmul.f32 %v3719, %v4935
    %v5000 = vmul.f32 %v3720, %v4936
    %v5001 = vmul.f32 %v3721, %v4937
    %v5002 = vmul.f32 %v3722, %v4938
    %v5003 = vmul.f32 %v3723, %v4939
    %v5004 = vmul.f32 %v3724, %v4940
    %v5005 = vmul.f32 %v3725, %v4941
    %v5006 = vmul.f32 %v3726, %v4942
    %v5007 = vmul.f32 %v3727, %v4943
    %v5008 = vmul.f32 %v3728, %v4944
    %v5009 = vmul.f32 %v3729, %v4945
    %v5010 = vmul.f32 %v3730, %v4946
    %v5011 = vmul.f32 %v3731, %v4947
    %v5012 = vmul.f32 %v3732, %v4948
    %v5013 = vmul.f32 %v3733, %v4949
    %v5014 = vmul.f32 %v3734, %v4950
    %v5015 = vmul.f32 %v3735, %v4951
    %v5016 = vmul.f32 %v3736, %v4952
    %v5017 = vmul.f32 %v3737, %v4953
    %v5018 = vmul.f32 %v3738, %v4954
    %v5019 = vmul.f32 %v3739, %v4955
    %v5020 = vmul.f32 %v3740, %v4956
    %v5021 = vmul.f32 %v3741, %v4957
    %v5022 = vmul.f32 %v3742, %v4958
    %v5023 = vmul.f32 %v3743, %v4959
    %v5024 = vmul.f32 %v3744, %v4960
    %v5025 = vmul.f32 %v3745, %v4961
    %v5026 = vmul.f32 %v3746, %v4962
    %v5027 = vmul.f32 %v3747, %v4963
    %v5028 = vmul.f32 %v3748, %v4964
    %v5029 = vmul.f32 %v3749, %v4965
    %v5030 = vmul.f32 %v3750, %v4966
    %v5031 = vmul.f32 %v3751, %v4967
    %v5032 = vmul.f32 %v3752, %v4968
    %v5033 = vmul.f32 %v3753, %v4969
    %v5034 = vmul.f32 %v3754, %v4970
    %v5035 = vmul.f32 %v3755, %v4971
    %v5036 = vmul.f32 %v3756, %v4972
    %v5037 = vmul.f32 %v3757, %v4973
    %v5038 = vmul.f32 %v3758, %v4974
    %v5039 = vmul.f32 %v3759, %v4975
    %v5040 = vmul.f32 %v3760, %v4976
    %v5041 = vmul.f32 %v3761, %v4977
    %v5042 = vmul.f32 %v3762, %v4978
    %v5043 = vmul.f32 %v3763, %v4979
    %v5044 = vmul.f32 %v3764, %v4980
    %v5045 = vmul.f32 %v3765, %v4981
    %v5046 = vmul.f32 %v3766, %v4982
    %v5047 = vmul.f32 %v3767, %v4983
    %v5048 = vmul.f32 %v3768, %v4984
    %v5049 = vmul.f32 %v3769, %v4985
    %v5050 = vmul.f32 %v3770, %v4986
    %v5051 = vmul.f32 %v3771, %v4987
    %v5052 = vadd.f32 %v4988, 1.0
    %v5053 = vadd.f32 %v4989, 1.0
    %v5054 = vadd.f32 %v4990, 1.0
    %v5055 = vadd.f32 %v4991, 1.0
    %v5056 = vadd.f32 %v4992, 1.0
    %v5057 = vadd.f32 %v4993, 1.0
    %v5058 = vadd.f32 %v4994, 1.0
    %v5059 = vadd.f32 %v4995, 1.0
    %v5060 = vadd.f32 %v4996, 1.0
    %v5061 = vadd.f32 %v4997, 1.0
    %v5062 = vadd.f32 %v4998, 1.0
    %v5063 = vadd.f32 %v4999, 1.0
    %v5064 = vadd.f32 %v5000, 1.0
    %v5065 = vadd.f32 %v5001, 1.0
    %v5066 = vadd.f32 %v5002, 1.0
    %v5067 = vadd.f32 %v5003, 1.0
    %v5068 = vadd.f32 %v5004, 1.0
    %v5069 = vadd.f32 %v5005, 1.0
    %v5070 = vadd.f32 %v5006, 1.0
    %v5071 = vadd.f32 %v5007, 1.0
    %v5072 = vadd.f32 %v5008, 1.0
    %v5073 = vadd.f32 %v5009, 1.0
    %v5074 = vadd.f32 %v5010, 1.0
    %v5075 = vadd.f32 %v5011, 1.0
    %v5076 = vadd.f32 %v5012, 1.0
    %v5077 = vadd.f32 %v5013, 1.0
    %v5078 = vadd.f32 %v5014, 1.0
    %v5079 = vadd.f32 %v5015, 1.0
    %v5080 = vadd.f32 %v5016, 1.0
    %v5081 = vadd.f32 %v5017, 1.0
    %v5082 = vadd.f32 %v5018, 1.0
    %v5083 = vadd.f32 %v5019, 1.0
    %v5084 = vadd.f32 %v5020, 1.0
    %v5085 = vadd.f32 %v5021, 1.0
    %v5086 = vadd.f32 %v5022, 1.0
    %v5087 = vadd.f32 %v5023, 1.0
    %v5088 = vadd.f32 %v5024, 1.0
    %v5089 = vadd.f32 %v5025, 1.0
    %v5090 = vadd.f32 %v5026, 1.0
    %v5091 = vadd.f32 %v5027, 1.0
    %v5092 = vadd.f32 %v5028, 1.0
    %v5093 = vadd.f32 %v5029, 1.0
    %v5094 = vadd.f32 %v5030, 1.0
    %v5095 = vadd.f32 %v5031, 1.0
    %v5096 = vadd.f32 %v5032, 1.0
    %v5097 = vadd.f32 %v5033, 1.0
    %v5098 = vadd.f32 %v5034, 1.0
    %v5099 = vadd.f32 %v5035, 1.0
    %v5100 = vadd.f32 %v5036, 1.0
    %v5101 = vadd.f32 %v5037, 1.0
    %v5102 = vadd.f32 %v5038, 1.0
    %v5103 = vadd.f32 %v5039, 1.0
    %v5104 = vadd.f32 %v5040, 1.0
    %v5105 = vadd.f32 %v5041, 1.0
    %v5106 = vadd.f32 %v5042, 1.0
    %v5107 = vadd.f32 %v5043, 1.0
    %v5108 = vadd.f32 %v5044, 1.0
    %v5109 = vadd.f32 %v5045, 1.0
    %v5110 = vadd.f32 %v5046, 1.0
    %v5111 = vadd.f32 %v5047, 1.0
    %v5112 = vadd.f32 %v5048, 1.0
    %v5113 = vadd.f32 %v5049, 1.0
    %v5114 = vadd.f32 %v5050, 1.0
    %v5115 = vadd.f32 %v5051, 1.0
    %v5116 = vmul.f32 %v3516, %v5052
    %v5117 = vmul.f32 %v3517, %v5053
    %v5118 = vmul.f32 %v3518, %v5054
    %v5119 = vmul.f32 %v3519, %v5055
    %v5120 = vmul.f32 %v3520, %v5056
    %v5121 = vmul.f32 %v3521, %v5057
    %v5122 = vmul.f32 %v3522, %v5058
    %v5123 = vmul.f32 %v3523, %v5059
    %v5124 = vmul.f32 %v3524, %v5060
    %v5125 = vmul.f32 %v3525, %v5061
    %v5126 = vmul.f32 %v3526, %v5062
    %v5127 = vmul.f32 %v3527, %v5063
    %v5128 = vmul.f32 %v3528, %v5064
    %v5129 = vmul.f32 %v3529, %v5065
    %v5130 = vmul.f32 %v3530, %v5066
    %v5131 = vmul.f32 %v3531, %v5067
    %v5132 = vmul.f32 %v3532, %v5068
    %v5133 = vmul.f32 %v3533, %v5069
    %v5134 = vmul.f32 %v3534, %v5070
    %v5135 = vmul.f32 %v3535, %v5071
    %v5136 = vmul.f32 %v3536, %v5072
    %v5137 = vmul.f32 %v3537, %v5073
    %v5138 = vmul.f32 %v3538, %v5074
    %v5139 = vmul.f32 %v3539, %v5075
    %v5140 = vmul.f32 %v3540, %v5076
    %v5141 = vmul.f32 %v3541, %v5077
    %v5142 = vmul.f32 %v3542, %v5078
    %v5143 = vmul.f32 %v3543, %v5079
    %v5144 = vmul.f32 %v3544, %v5080
    %v5145 = vmul.f32 %v3545, %v5081
    %v5146 = vmul.f32 %v3546, %v5082
    %v5147 = vmul.f32 %v3547, %v5083
    %v5148 = vmul.f32 %v3548, %v5084
    %v5149 = vmul.f32 %v3549, %v5085
    %v5150 = vmul.f32 %v3550, %v5086
    %v5151 = vmul.f32 %v3551, %v5087
    %v5152 = vmul.f32 %v3552, %v5088
    %v5153 = vmul.f32 %v3553, %v5089
    %v5154 = vmul.f32 %v3554, %v5090
    %v5155 = vmul.f32 %v3555, %v5091
    %v5156 = vmul.f32 %v3556, %v5092
    %v5157 = vmul.f32 %v3557, %v5093
    %v5158 = vmul.f32 %v3558, %v5094
    %v5159 = vmul.f32 %v3559, %v5095
    %v5160 = vmul.f32 %v3560, %v5096
    %v5161 = vmul.f32 %v3561, %v5097
    %v5162 = vmul.f32 %v3562, %v5098
    %v5163 = vmul.f32 %v3563, %v5099
    %v5164 = vmul.f32 %v3564, %v5100
    %v5165 = vmul.f32 %v3565, %v5101
    %v5166 = vmul.f32 %v3566, %v5102
    %v5167 = vmul.f32 %v3567, %v5103
    %v5168 = vmul.f32 %v3568, %v5104
    %v5169 = vmul.f32 %v3569, %v5105
    %v5170 = vmul.f32 %v3570, %v5106
    %v5171 = vmul.f32 %v3571, %v5107
    %v5172 = vmul.f32 %v3572, %v5108
    %v5173 = vmul.f32 %v3573, %v5109
    %v5174 = vmul.f32 %v3574, %v5110
    %v5175 = vmul.f32 %v3575, %v5111
    %v5176 = vmul.f32 %v3576, %v5112
    %v5177 = vmul.f32 %v3577, %v5113
    %v5178 = vmul.f32 %v3578, %v5114
    %v5179 = vmul.f32 %v3579, %v5115
    %v5180 = vpack.c.bf16 %v5117, %v5116
    %v5181 = vpack.c.bf16 %v5119, %v5118
    %v5182 = vpack.c.bf16 %v5121, %v5120
    %v5183 = vpack.c.bf16 %v5123, %v5122
    %v5184 = vpack.c.bf16 %v5125, %v5124
    %v5185 = vpack.c.bf16 %v5127, %v5126
    %v5186 = vpack.c.bf16 %v5129, %v5128
    %v5187 = vpack.c.bf16 %v5131, %v5130
    %v5188 = vpack.c.bf16 %v5133, %v5132
    %v5189 = vpack.c.bf16 %v5135, %v5134
    %v5190 = vpack.c.bf16 %v5137, %v5136
    %v5191 = vpack.c.bf16 %v5139, %v5138
    %v5192 = vpack.c.bf16 %v5141, %v5140
    %v5193 = vpack.c.bf16 %v5143, %v5142
    %v5194 = vpack.c.bf16 %v5145, %v5144
    %v5195 = vpack.c.bf16 %v5147, %v5146
    %v5196 = vpack.c.bf16 %v5149, %v5148
    %v5197 = vpack.c.bf16 %v5151, %v5150
    %v5198 = vpack.c.bf16 %v5153, %v5152
    %v5199 = vpack.c.bf16 %v5155, %v5154
    %v5200 = vpack.c.bf16 %v5157, %v5156
    %v5201 = vpack.c.bf16 %v5159, %v5158
    %v5202 = vpack.c.bf16 %v5161, %v5160
    %v5203 = vpack.c.bf16 %v5163, %v5162
    %v5204 = vpack.c.bf16 %v5165, %v5164
    %v5205 = vpack.c.bf16 %v5167, %v5166
    %v5206 = vpack.c.bf16 %v5169, %v5168
    %v5207 = vpack.c.bf16 %v5171, %v5170
    %v5208 = vpack.c.bf16 %v5173, %v5172
    %v5209 = vpack.c.bf16 %v5175, %v5174
    %v5210 = vpack.c.bf16 %v5177, %v5176
    %v5211 = vpack.c.bf16 %v5179, %v5178
    %v5212 = vld [vmem:[%s6] sm:$0xf]
    %v5213 = vld [vmem:[%s6 + $0x4] sm:$0xf]
    %v5214 = vld [vmem:[%s6 + $0x8] sm:$0xf]
    %v5215 = vld [vmem:[%s6 + $0xc] sm:$0xf]
    %v5216 = vld [vmem:[%s6 + $0x10] sm:$0xf]
    %v5217 = vld [vmem:[%s6 + $0x14] sm:$0xf]
    %v5218 = vld [vmem:[%s6 + $0x18] sm:$0xf]
    %v5219 = vld [vmem:[%s6 + $0x1c] sm:$0xf]
    %v5220 = vld [vmem:[%s7] sm:$0x1]
    %v5222 = vlaneseq
    %v5223 = vshrl.u32 %v5222, 7
    %v5224 = vsub.s32 0, %v5223
    %v5225 = vrot.slane %v5220, %v5224
    %v5235 = vunpack.c.l.b16 %v5212
    %v5236 = vunpack.c.l.b16 %v5213
    %v5237 = vunpack.c.l.b16 %v5214
    %v5238 = vunpack.c.l.b16 %v5215
    %v5239 = vunpack.c.l.b16 %v5216
    %v5240 = vunpack.c.l.b16 %v5217
    %v5241 = vunpack.c.l.b16 %v5218
    %v5242 = vunpack.c.l.b16 %v5219
    %v5243 = vpack.c.b16 %v5236, %v5235
    %v5244 = vpack.c.b16 %v5238, %v5237
    %v5245 = vpack.c.b16 %v5240, %v5239
    %v5246 = vpack.c.b16 %v5242, %v5241
    %vm5251 = vcmask 523264
    %v5253 = vsel %vm5251, %v5180, 0
    %v5256 = vsel %vm5251, %v5181, 0
    %v5259 = vsel %vm5251, %v5182, 0
    %v5262 = vsel %vm5251, %v5183, 0
    %v5265 = vsel %vm5251, %v5184, 0
    %v5268 = vsel %vm5251, %v5185, 0
    %v5271 = vsel %vm5251, %v5186, 0
    %v5274 = vsel %vm5251, %v5187, 0
    %v5277 = vsel %vm5251, %v5188, 0
    %v5280 = vsel %vm5251, %v5189, 0
    %v5283 = vsel %vm5251, %v5190, 0
    %v5286 = vsel %vm5251, %v5191, 0
    %v5289 = vsel %vm5251, %v5192, 0
    %v5292 = vsel %vm5251, %v5193, 0
    %v5295 = vsel %vm5251, %v5194, 0
    %v5298 = vsel %vm5251, %v5195, 0
    %v5301 = vsel %vm5251, %v5196, 0
    %v5304 = vsel %vm5251, %v5197, 0
    %v5307 = vsel %vm5251, %v5198, 0
    %v5310 = vsel %vm5251, %v5199, 0
    %v5313 = vsel %vm5251, %v5200, 0
    %v5316 = vsel %vm5251, %v5201, 0
    %v5319 = vsel %vm5251, %v5202, 0
    %v5322 = vsel %vm5251, %v5203, 0
    %v5325 = vsel %vm5251, %v5204, 0
    %v5328 = vsel %vm5251, %v5205, 0
    %v5331 = vsel %vm5251, %v5206, 0
    %v5334 = vsel %vm5251, %v5207, 0
    %v5337 = vsel %vm5251, %v5208, 0
    %v5340 = vsel %vm5251, %v5209, 0
    %v5343 = vsel %vm5251, %v5210, 0
    %v5346 = vsel %vm5251, %v5211, 0
    %5348 = vmatprep.subr.bf16.mxu0 0
    %5349 = vmatpush1.bf16.msra.mxu0 %v5243
    %5350 = vmatprep.subr.bf16.mxu0 0
    %5351 = vmatpush1.bf16.msra.mxu0 %v5244
    %5352 = vmatprep.subr.bf16.mxu0 0
    %5353 = vmatpush1.bf16.msra.mxu0 %v5245
    %5354 = vmatprep.subr.bf16.mxu0 0
    %5355 = vmatpush1.bf16.msra.mxu0 %v5246
    %5356 = vmatprep.subr.bf16.mxu0 0
    %5357 = vmatpush1.bf16.msra.mxu0 0
    %5358 = vmatprep.subr.bf16.mxu0 0
    %5359 = vmatpush1.bf16.msra.mxu0 0
    %5360 = vmatprep.subr.bf16.mxu0 0
    %5361 = vmatpush1.bf16.msra.mxu0 0
    %5362 = vmatprep.subr.bf16.mxu0 0
    %5363 = vmatpush1.bf16.msra.mxu0 0
    %5364 = vmatprep.subr.bf16.mxu0 0
    %5365 = vmatpush1.bf16.msra.mxu0 0
    %5366 = vmatprep.subr.bf16.mxu0 0
    %5367 = vmatpush1.bf16.msra.mxu0 0
    %5368 = vmatprep.subr.bf16.mxu0 0
    %5369 = vmatpush1.bf16.msra.mxu0 0
    %5370 = vmatprep.subr.bf16.mxu0 0
    %5371 = vmatpush1.bf16.msra.mxu0 0
    %5372 = vmatprep.subr.bf16.mxu0 0
    %5373 = vmatpush1.bf16.msra.mxu0 0
    %5374 = vmatprep.subr.bf16.mxu0 0
    %5375 = vmatpush1.bf16.msra.mxu0 0
    %5376 = vmatprep.subr.bf16.mxu0 0
    %5377 = vmatpush1.bf16.msra.mxu0 0
    %5378 = vmatprep.subr.bf16.mxu0 0
    %5379 = vmatpush1.bf16.msra.mxu0 0
    %5380 = vmatprep.mubr.bf16.mxu0 0
    %5381 = vmatmul.mubr.bf16.gmra.mrb[0].mxu0 %v5253
    %v5382 = vpop.f32.mrb[0].mxu0
    %v5383 = vadd.f32 %v5225, %v5382
    %v5384 = vpop.f32.mrb[0].mxu0
    %v5385 = vpop.f32.mrb[0].mxu0
    %v5386 = vadd.f32 %v5225, %v5385
    %v5387 = vpop.f32.mrb[0].mxu0
    %5388 = vmatprep.mubr.bf16.mxu0 0
    %5389 = vmatmul.mubr.bf16.gmra.mrb[0].mxu0 %v5256
    %v5390 = vpop.f32.mrb[0].mxu0
    %v5391 = vadd.f32 %v5225, %v5390
    %v5392 = vpop.f32.mrb[0].mxu0
    %v5393 = vpop.f32.mrb[0].mxu0
    %v5394 = vadd.f32 %v5225, %v5393
    %v5395 = vpop.f32.mrb[0].mxu0
    %5396 = vmatprep.mubr.bf16.mxu0 0
    %5397 = vmatmul.mubr.bf16.gmra.mrb[0].mxu0 %v5259
    %v5398 = vpop.f32.mrb[0].mxu0
    %v5399 = vadd.f32 %v5225, %v5398
    %v5400 = vpop.f32.mrb[0].mxu0
    %v5401 = vpop.f32.mrb[0].mxu0
    %v5402 = vadd.f32 %v5225, %v5401
    %v5403 = vpop.f32.mrb[0].mxu0
    %5404 = vmatprep.mubr.bf16.mxu0 0
    %5405 = vmatmul.mubr.bf16.gmra.mrb[0].mxu0 %v5262
    %v5406 = vpop.f32.mrb[0].mxu0
    %v5407 = vadd.f32 %v5225, %v5406
    %v5408 = vpop.f32.mrb[0].mxu0
    %v5409 = vpop.f32.mrb[0].mxu0
    %v5410 = vadd.f32 %v5225, %v5409
    %v5411 = vpop.f32.mrb[0].mxu0
    %5412 = vmatprep.mubr.bf16.mxu0 0
    %5413 = vmatmul.mubr.bf16.gmra.mrb[0].mxu0 %v5265
    %v5414 = vpop.f32.mrb[0].mxu0
    %v5415 = vadd.f32 %v5225, %v5414
    %v5416 = vpop.f32.mrb[0].mxu0
    %v5417 = vpop.f32.mrb[0].mxu0
    %v5418 = vadd.f32 %v5225, %v5417
    %v5419 = vpop.f32.mrb[0].mxu0
    %5420 = vmatprep.mubr.bf16.mxu0 0
    %5421 = vmatmul.mubr.bf16.gmra.mrb[0].mxu0 %v5268
    %v5422 = vpop.f32.mrb[0].mxu0
    %v5423 = vadd.f32 %v5225, %v5422
    %v5424 = vpop.f32.mrb[0].mxu0
    %v5425 = vpop.f32.mrb[0].mxu0
    %v5426 = vadd.f32 %v5225, %v5425
    %v5427 = vpop.f32.mrb[0].mxu0
    %5428 = vmatprep.mubr.bf16.mxu0 0
    %5429 = vmatmul.mubr.bf16.gmra.mrb[0].mxu0 %v5271
    %v5430 = vpop.f32.mrb[0].mxu0
    %v5431 = vadd.f32 %v5225, %v5430
    %v5432 = vpop.f32.mrb[0].mxu0
    %v5433 = vpop.f32.mrb[0].mxu0
    %v5434 = vadd.f32 %v5225, %v5433
    %v5435 = vpop.f32.mrb[0].mxu0
    %5436 = vmatprep.mubr.bf16.mxu0 0
    %5437 = vmatmul.mubr.bf16.gmra.mrb[0].mxu0 %v5274
    %v5438 = vpop.f32.mrb[0].mxu0
    %v5439 = vadd.f32 %v5225, %v5438
    %v5440 = vpop.f32.mrb[0].mxu0
    %v5441 = vpop.f32.mrb[0].mxu0
    %v5442 = vadd.f32 %v5225, %v5441
    %v5443 = vpop.f32.mrb[0].mxu0
    %5444 = vmatprep.mubr.bf16.mxu0 0
    %5445 = vmatmul.mubr.bf16.gmra.mrb[0].mxu0 %v5277
    %v5446 = vpop.f32.mrb[0].mxu0
    %v5447 = vadd.f32 %v5225, %v5446
    %v5448 = vpop.f32.mrb[0].mxu0
    %v5449 = vpop.f32.mrb[0].mxu0
    %v5450 = vadd.f32 %v5225, %v5449
    %v5451 = vpop.f32.mrb[0].mxu0
    %5452 = vmatprep.mubr.bf16.mxu0 0
    %5453 = vmatmul.mubr.bf16.gmra.mrb[0].mxu0 %v5280
    %v5454 = vpop.f32.mrb[0].mxu0
    %v5455 = vadd.f32 %v5225, %v5454
    %v5456 = vpop.f32.mrb[0].mxu0
    %v5457 = vpop.f32.mrb[0].mxu0
    %v5458 = vadd.f32 %v5225, %v5457
    %v5459 = vpop.f32.mrb[0].mxu0
    %5460 = vmatprep.mubr.bf16.mxu0 0
    %5461 = vmatmul.mubr.bf16.gmra.mrb[0].mxu0 %v5283
    %v5462 = vpop.f32.mrb[0].mxu0
    %v5463 = vadd.f32 %v5225, %v5462
    %v5464 = vpop.f32.mrb[0].mxu0
    %v5465 = vpop.f32.mrb[0].mxu0
    %v5466 = vadd.f32 %v5225, %v5465
    %v5467 = vpop.f32.mrb[0].mxu0
    %5468 = vmatprep.mubr.bf16.mxu0 0
    %5469 = vmatmul.mubr.bf16.gmra.mrb[0].mxu0 %v5286
    %v5470 = vpop.f32.mrb[0].mxu0
    %v5471 = vadd.f32 %v5225, %v5470
    %v5472 = vpop.f32.mrb[0].mxu0
    %v5473 = vpop.f32.mrb[0].mxu0
    %v5474 = vadd.f32 %v5225, %v5473
    %v5475 = vpop.f32.mrb[0].mxu0
    %5476 = vmatprep.mubr.bf16.mxu0 0
    %5477 = vmatmul.mubr.bf16.gmra.mrb[0].mxu0 %v5289
    %v5478 = vpop.f32.mrb[0].mxu0
    %v5479 = vadd.f32 %v5225, %v5478
    %v5480 = vpop.f32.mrb[0].mxu0
    %v5481 = vpop.f32.mrb[0].mxu0
    %v5482 = vadd.f32 %v5225, %v5481
    %v5483 = vpop.f32.mrb[0].mxu0
    %5484 = vmatprep.mubr.bf16.mxu0 0
    %5485 = vmatmul.mubr.bf16.gmra.mrb[0].mxu0 %v5292
    %v5486 = vpop.f32.mrb[0].mxu0
    %v5487 = vadd.f32 %v5225, %v5486
    %v5488 = vpop.f32.mrb[0].mxu0
    %v5489 = vpop.f32.mrb[0].mxu0
    %v5490 = vadd.f32 %v5225, %v5489
    %v5491 = vpop.f32.mrb[0].mxu0
    %5492 = vmatprep.mubr.bf16.mxu0 0
    %5493 = vmatmul.mubr.bf16.gmra.mrb[0].mxu0 %v5295
    %v5494 = vpop.f32.mrb[0].mxu0
    %v5495 = vadd.f32 %v5225, %v5494
    %v5496 = vpop.f32.mrb[0].mxu0
    %v5497 = vpop.f32.mrb[0].mxu0
    %v5498 = vadd.f32 %v5225, %v5497
    %v5499 = vpop.f32.mrb[0].mxu0
    %5500 = vmatprep.mubr.bf16.mxu0 0
    %5501 = vmatmul.mubr.bf16.gmra.mrb[0].mxu0 %v5298
    %v5502 = vpop.f32.mrb[0].mxu0
    %v5503 = vadd.f32 %v5225, %v5502
    %v5504 = vpop.f32.mrb[0].mxu0
    %v5505 = vpop.f32.mrb[0].mxu0
    %v5506 = vadd.f32 %v5225, %v5505
    %v5507 = vpop.f32.mrb[0].mxu0
    %5508 = vmatprep.mubr.bf16.mxu0 0
    %5509 = vmatmul.mubr.bf16.gmra.mrb[0].mxu0 %v5301
    %v5510 = vpop.f32.mrb[0].mxu0
    %v5511 = vadd.f32 %v5225, %v5510
    %v5512 = vpop.f32.mrb[0].mxu0
    %v5513 = vpop.f32.mrb[0].mxu0
    %v5514 = vadd.f32 %v5225, %v5513
    %v5515 = vpop.f32.mrb[0].mxu0
    %5516 = vmatprep.mubr.bf16.mxu0 0
    %5517 = vmatmul.mubr.bf16.gmra.mrb[0].mxu0 %v5304
    %v5518 = vpop.f32.mrb[0].mxu0
    %v5519 = vadd.f32 %v5225, %v5518
    %v5520 = vpop.f32.mrb[0].mxu0
    %v5521 = vpop.f32.mrb[0].mxu0
    %v5522 = vadd.f32 %v5225, %v5521
    %v5523 = vpop.f32.mrb[0].mxu0
    %5524 = vmatprep.mubr.bf16.mxu0 0
    %5525 = vmatmul.mubr.bf16.gmra.mrb[0].mxu0 %v5307
    %v5526 = vpop.f32.mrb[0].mxu0
    %v5527 = vadd.f32 %v5225, %v5526
    %v5528 = vpop.f32.mrb[0].mxu0
    %v5529 = vpop.f32.mrb[0].mxu0
    %v5530 = vadd.f32 %v5225, %v5529
    %v5531 = vpop.f32.mrb[0].mxu0
    %5532 = vmatprep.mubr.bf16.mxu0 0
    %5533 = vmatmul.mubr.bf16.gmra.mrb[0].mxu0 %v5310
    %v5534 = vpop.f32.mrb[0].mxu0
    %v5535 = vadd.f32 %v5225, %v5534
    %v5536 = vpop.f32.mrb[0].mxu0
    %v5537 = vpop.f32.mrb[0].mxu0
    %v5538 = vadd.f32 %v5225, %v5537
    %v5539 = vpop.f32.mrb[0].mxu0
    %5540 = vmatprep.mubr.bf16.mxu0 0
    %5541 = vmatmul.mubr.bf16.gmra.mrb[0].mxu0 %v5313
    %v5542 = vpop.f32.mrb[0].mxu0
    %v5543 = vadd.f32 %v5225, %v5542
    %v5544 = vpop.f32.mrb[0].mxu0
    %v5545 = vpop.f32.mrb[0].mxu0
    %v5546 = vadd.f32 %v5225, %v5545
    %v5547 = vpop.f32.mrb[0].mxu0
    %5548 = vmatprep.mubr.bf16.mxu0 0
    %5549 = vmatmul.mubr.bf16.gmra.mrb[0].mxu0 %v5316
    %v5550 = vpop.f32.mrb[0].mxu0
    %v5551 = vadd.f32 %v5225, %v5550
    %v5552 = vpop.f32.mrb[0].mxu0
    %v5553 = vpop.f32.mrb[0].mxu0
    %v5554 = vadd.f32 %v5225, %v5553
    %v5555 = vpop.f32.mrb[0].mxu0
    %5556 = vmatprep.mubr.bf16.mxu0 0
    %5557 = vmatmul.mubr.bf16.gmra.mrb[0].mxu0 %v5319
    %v5558 = vpop.f32.mrb[0].mxu0
    %v5559 = vadd.f32 %v5225, %v5558
    %v5560 = vpop.f32.mrb[0].mxu0
    %v5561 = vpop.f32.mrb[0].mxu0
    %v5562 = vadd.f32 %v5225, %v5561
    %v5563 = vpop.f32.mrb[0].mxu0
    %5564 = vmatprep.mubr.bf16.mxu0 0
    %5565 = vmatmul.mubr.bf16.gmra.mrb[0].mxu0 %v5322
    %v5566 = vpop.f32.mrb[0].mxu0
    %v5567 = vadd.f32 %v5225, %v5566
    %v5568 = vpop.f32.mrb[0].mxu0
    %v5569 = vpop.f32.mrb[0].mxu0
    %v5570 = vadd.f32 %v5225, %v5569
    %v5571 = vpop.f32.mrb[0].mxu0
    %5572 = vmatprep.mubr.bf16.mxu0 0
    %5573 = vmatmul.mubr.bf16.gmra.mrb[0].mxu0 %v5325
    %v5574 = vpop.f32.mrb[0].mxu0
    %v5575 = vadd.f32 %v5225, %v5574
    %v5576 = vpop.f32.mrb[0].mxu0
    %v5577 = vpop.f32.mrb[0].mxu0
    %v5578 = vadd.f32 %v5225, %v5577
    %v5579 = vpop.f32.mrb[0].mxu0
    %5580 = vmatprep.mubr.bf16.mxu0 0
    %5581 = vmatmul.mubr.bf16.gmra.mrb[0].mxu0 %v5328
    %v5582 = vpop.f32.mrb[0].mxu0
    %v5583 = vadd.f32 %v5225, %v5582
    %v5584 = vpop.f32.mrb[0].mxu0
    %v5585 = vpop.f32.mrb[0].mxu0
    %v5586 = vadd.f32 %v5225, %v5585
    %v5587 = vpop.f32.mrb[0].mxu0
    %5588 = vmatprep.mubr.bf16.mxu0 0
    %5589 = vmatmul.mubr.bf16.gmra.mrb[0].mxu0 %v5331
    %v5590 = vpop.f32.mrb[0].mxu0
    %v5591 = vadd.f32 %v5225, %v5590
    %v5592 = vpop.f32.mrb[0].mxu0
    %v5593 = vpop.f32.mrb[0].mxu0
    %v5594 = vadd.f32 %v5225, %v5593
    %v5595 = vpop.f32.mrb[0].mxu0
    %5596 = vmatprep.mubr.bf16.mxu0 0
    %5597 = vmatmul.mubr.bf16.gmra.mrb[0].mxu0 %v5334
    %v5598 = vpop.f32.mrb[0].mxu0
    %v5599 = vadd.f32 %v5225, %v5598
    %v5600 = vpop.f32.mrb[0].mxu0
    %v5601 = vpop.f32.mrb[0].mxu0
    %v5602 = vadd.f32 %v5225, %v5601
    %v5603 = vpop.f32.mrb[0].mxu0
    %5604 = vmatprep.mubr.bf16.mxu0 0
    %5605 = vmatmul.mubr.bf16.gmra.mrb[0].mxu0 %v5337
    %v5606 = vpop.f32.mrb[0].mxu0
    %v5607 = vadd.f32 %v5225, %v5606
    %v5608 = vpop.f32.mrb[0].mxu0
    %v5609 = vpop.f32.mrb[0].mxu0
    %v5610 = vadd.f32 %v5225, %v5609
    %v5611 = vpop.f32.mrb[0].mxu0
    %5612 = vmatprep.mubr.bf16.mxu0 0
    %5613 = vmatmul.mubr.bf16.gmra.mrb[0].mxu0 %v5340
    %v5614 = vpop.f32.mrb[0].mxu0
    %v5615 = vadd.f32 %v5225, %v5614
    %v5616 = vpop.f32.mrb[0].mxu0
    %v5617 = vpop.f32.mrb[0].mxu0
    %v5618 = vadd.f32 %v5225, %v5617
    %v5619 = vpop.f32.mrb[0].mxu0
    %5620 = vmatprep.mubr.bf16.mxu0 0
    %5621 = vmatmul.mubr.bf16.gmra.mrb[0].mxu0 %v5343
    %v5622 = vpop.f32.mrb[0].mxu0
    %v5623 = vadd.f32 %v5225, %v5622
    %v5624 = vpop.f32.mrb[0].mxu0
    %v5625 = vpop.f32.mrb[0].mxu0
    %v5626 = vadd.f32 %v5225, %v5625
    %v5627 = vpop.f32.mrb[0].mxu0
    %5628 = vmatprep.mubr.bf16.mxu0 0
    %5629 = vmatmul.mubr.bf16.gmra.mrb[0].mxu0 %v5346
    %v5630 = vpop.f32.mrb[0].mxu0
    %v5631 = vadd.f32 %v5225, %v5630
    %v5632 = vpop.f32.mrb[0].mxu0
    %v5633 = vpop.f32.mrb[0].mxu0
    %v5634 = vadd.f32 %v5225, %v5633
    %v5635 = vpop.f32.mrb[0].mxu0
    %5636 = vdwg.mxu0
    %v5637 = vadd.f32 %v45, %v5383
    %v5638 = vadd.f32 %v46, %v5386
    %v5639 = vadd.f32 %v47, %v5391
    %v5640 = vadd.f32 %v48, %v5394
    %v5641 = vadd.f32 %v49, %v5399
    %v5642 = vadd.f32 %v50, %v5402
    %v5643 = vadd.f32 %v51, %v5407
    %v5644 = vadd.f32 %v52, %v5410
    %v5645 = vadd.f32 %v53, %v5415
    %v5646 = vadd.f32 %v54, %v5418
    %v5647 = vadd.f32 %v55, %v5423
    %v5648 = vadd.f32 %v56, %v5426
    %v5649 = vadd.f32 %v57, %v5431
    %v5650 = vadd.f32 %v58, %v5434
    %v5651 = vadd.f32 %v59, %v5439
    %v5652 = vadd.f32 %v60, %v5442
    %v5653 = vadd.f32 %v61, %v5447
    %v5654 = vadd.f32 %v62, %v5450
    %v5655 = vadd.f32 %v63, %v5455
    %v5656 = vadd.f32 %v64, %v5458
    %v5657 = vadd.f32 %v65, %v5463
    %v5658 = vadd.f32 %v66, %v5466
    %v5659 = vadd.f32 %v67, %v5471
    %v5660 = vadd.f32 %v68, %v5474
    %v5661 = vadd.f32 %v69, %v5479
    %v5662 = vadd.f32 %v70, %v5482
    %v5663 = vadd.f32 %v71, %v5487
    %v5664 = vadd.f32 %v72, %v5490
    %v5665 = vadd.f32 %v73, %v5495
    %v5666 = vadd.f32 %v74, %v5498
    %v5667 = vadd.f32 %v75, %v5503
    %v5668 = vadd.f32 %v76, %v5506
    %v5669 = vadd.f32 %v77, %v5511
    %v5670 = vadd.f32 %v78, %v5514
    %v5671 = vadd.f32 %v79, %v5519
    %v5672 = vadd.f32 %v80, %v5522
    %v5673 = vadd.f32 %v81, %v5527
    %v5674 = vadd.f32 %v82, %v5530
    %v5675 = vadd.f32 %v83, %v5535
    %v5676 = vadd.f32 %v84, %v5538
    %v5677 = vadd.f32 %v85, %v5543
    %v5678 = vadd.f32 %v86, %v5546
    %v5679 = vadd.f32 %v87, %v5551
    %v5680 = vadd.f32 %v88, %v5554
    %v5681 = vadd.f32 %v89, %v5559
    %v5682 = vadd.f32 %v90, %v5562
    %v5683 = vadd.f32 %v91, %v5567
    %v5684 = vadd.f32 %v92, %v5570
    %v5685 = vadd.f32 %v93, %v5575
    %v5686 = vadd.f32 %v94, %v5578
    %v5687 = vadd.f32 %v95, %v5583
    %v5688 = vadd.f32 %v96, %v5586
    %v5689 = vadd.f32 %v97, %v5591
    %v5690 = vadd.f32 %v98, %v5594
    %v5691 = vadd.f32 %v99, %v5599
    %v5692 = vadd.f32 %v100, %v5602
    %v5693 = vadd.f32 %v101, %v5607
    %v5694 = vadd.f32 %v102, %v5610
    %v5695 = vadd.f32 %v103, %v5615
    %v5696 = vadd.f32 %v104, %v5618
    %v5697 = vadd.f32 %v105, %v5623
    %v5698 = vadd.f32 %v106, %v5626
    %v5699 = vadd.f32 %v107, %v5631
    %v5700 = vadd.f32 %v108, %v5634
    %5701 = vst.msk [vmem:[#allocation5] sm:$0xff] %vm109, %v5637
    %5702 = vst.msk [vmem:[#allocation5 + $0x8] sm:$0xff] %vm109, %v5638
    %5703 = vst.msk [vmem:[#allocation5 + $0x10] sm:$0xff] %vm109, %v5639
    %5704 = vst.msk [vmem:[#allocation5 + $0x18] sm:$0xff] %vm109, %v5640
    %5705 = vst.msk [vmem:[#allocation5 + $0x20] sm:$0xff] %vm109, %v5641
    %5706 = vst.msk [vmem:[#allocation5 + $0x28] sm:$0xff] %vm109, %v5642
    %5707 = vst.msk [vmem:[#allocation5 + $0x30] sm:$0xff] %vm109, %v5643
    %5708 = vst.msk [vmem:[#allocation5 + $0x38] sm:$0xff] %vm109, %v5644
    %5709 = vst.msk [vmem:[#allocation5 + $0x40] sm:$0xff] %vm109, %v5645
    %5710 = vst.msk [vmem:[#allocation5 + $0x48] sm:$0xff] %vm109, %v5646
    %5711 = vst.msk [vmem:[#allocation5 + $0x50] sm:$0xff] %vm109, %v5647
    %5712 = vst.msk [vmem:[#allocation5 + $0x58] sm:$0xff] %vm109, %v5648
    %5713 = vst.msk [vmem:[#allocation5 + $0x60] sm:$0xff] %vm109, %v5649
    %5714 = vst.msk [vmem:[#allocation5 + $0x68] sm:$0xff] %vm109, %v5650
    %5715 = vst.msk [vmem:[#allocation5 + $0x70] sm:$0xff] %vm109, %v5651
    %5716 = vst.msk [vmem:[#allocation5 + $0x78] sm:$0xff] %vm109, %v5652
    %5717 = vst.msk [vmem:[#allocation5 + $0x80] sm:$0xff] %vm109, %v5653
    %5718 = vst.msk [vmem:[#allocation5 + $0x88] sm:$0xff] %vm109, %v5654
    %5719 = vst.msk [vmem:[#allocation5 + $0x90] sm:$0xff] %vm109, %v5655
    %5720 = vst.msk [vmem:[#allocation5 + $0x98] sm:$0xff] %vm109, %v5656
    %5721 = vst.msk [vmem:[#allocation5 + $0xa0] sm:$0xff] %vm109, %v5657
    %5722 = vst.msk [vmem:[#allocation5 + $0xa8] sm:$0xff] %vm109, %v5658
    %5723 = vst.msk [vmem:[#allocation5 + $0xb0] sm:$0xff] %vm109, %v5659
    %5724 = vst.msk [vmem:[#allocation5 + $0xb8] sm:$0xff] %vm109, %v5660
    %5725 = vst.msk [vmem:[#allocation5 + $0xc0] sm:$0xff] %vm109, %v5661
    %5726 = vst.msk [vmem:[#allocation5 + $0xc8] sm:$0xff] %vm109, %v5662
    %5727 = vst.msk [vmem:[#allocation5 + $0xd0] sm:$0xff] %vm109, %v5663
    %5728 = vst.msk [vmem:[#allocation5 + $0xd8] sm:$0xff] %vm109, %v5664
    %5729 = vst.msk [vmem:[#allocation5 + $0xe0] sm:$0xff] %vm109, %v5665
    %5730 = vst.msk [vmem:[#allocation5 + $0xe8] sm:$0xff] %vm109, %v5666
    %5731 = vst.msk [vmem:[#allocation5 + $0xf0] sm:$0xff] %vm109, %v5667
    %5732 = vst.msk [vmem:[#allocation5 + $0xf8] sm:$0xff] %vm109, %v5668
    %5733 = vst.msk [vmem:[#allocation5 + $0x100] sm:$0xff] %vm109, %v5669
    %5734 = vst.msk [vmem:[#allocation5 + $0x108] sm:$0xff] %vm109, %v5670
    %5735 = vst.msk [vmem:[#allocation5 + $0x110] sm:$0xff] %vm109, %v5671
    %5736 = vst.msk [vmem:[#allocation5 + $0x118] sm:$0xff] %vm109, %v5672
    %5737 = vst.msk [vmem:[#allocation5 + $0x120] sm:$0xff] %vm109, %v5673
    %5738 = vst.msk [vmem:[#allocation5 + $0x128] sm:$0xff] %vm109, %v5674
    %5739 = vst.msk [vmem:[#allocation5 + $0x130] sm:$0xff] %vm109, %v5675
    %5740 = vst.msk [vmem:[#allocation5 + $0x138] sm:$0xff] %vm109, %v5676
    %5741 = vst.msk [vmem:[#allocation5 + $0x140] sm:$0xff] %vm109, %v5677
    %5742 = vst.msk [vmem:[#allocation5 + $0x148] sm:$0xff] %vm109, %v5678
    %5743 = vst.msk [vmem:[#allocation5 + $0x150] sm:$0xff] %vm109, %v5679
    %5744 = vst.msk [vmem:[#allocation5 + $0x158] sm:$0xff] %vm109, %v5680
    %5745 = vst.msk [vmem:[#allocation5 + $0x160] sm:$0xff] %vm109, %v5681
    %5746 = vst.msk [vmem:[#allocation5 + $0x168] sm:$0xff] %vm109, %v5682
    %5747 = vst.msk [vmem:[#allocation5 + $0x170] sm:$0xff] %vm109, %v5683
    %5748 = vst.msk [vmem:[#allocation5 + $0x178] sm:$0xff] %vm109, %v5684
    %5749 = vst.msk [vmem:[#allocation5 + $0x180] sm:$0xff] %vm109, %v5685
    %5750 = vst.msk [vmem:[#allocation5 + $0x188] sm:$0xff] %vm109, %v5686
    %5751 = vst.msk [vmem:[#allocation5 + $0x190] sm:$0xff] %vm109, %v5687
    %5752 = vst.msk [vmem:[#allocation5 + $0x198] sm:$0xff] %vm109, %v5688
    %5753 = vst.msk [vmem:[#allocation5 + $0x1a0] sm:$0xff] %vm109, %v5689
    %5754 = vst.msk [vmem:[#allocation5 + $0x1a8] sm:$0xff] %vm109, %v5690
    %5755 = vst.msk [vmem:[#allocation5 + $0x1b0] sm:$0xff] %vm109, %v5691
    %5756 = vst.msk [vmem:[#allocation5 + $0x1b8] sm:$0xff] %vm109, %v5692
    %5757 = vst.msk [vmem:[#allocation5 + $0x1c0] sm:$0xff] %vm109, %v5693
    %5758 = vst.msk [vmem:[#allocation5 + $0x1c8] sm:$0xff] %vm109, %v5694
    %5759 = vst.msk [vmem:[#allocation5 + $0x1d0] sm:$0xff] %vm109, %v5695
    %5760 = vst.msk [vmem:[#allocation5 + $0x1d8] sm:$0xff] %vm109, %v5696
    %5761 = vst.msk [vmem:[#allocation5 + $0x1e0] sm:$0xff] %vm109, %v5697
    %5762 = vst.msk [vmem:[#allocation5 + $0x1e8] sm:$0xff] %vm109, %v5698
    %5763 = vst.msk [vmem:[#allocation5 + $0x1f0] sm:$0xff] %vm109, %v5699
    %5764 = vst.msk [vmem:[#allocation5 + $0x1f8] sm:$0xff] %vm109, %v5700
    // Predicated region
    $region38: #{tpu_custom_call.1} parent=1 // pred_check
      _
    $region39: #{tpu_custom_call.1} parent=1 // pred_check_branch
      %5766 = sbr.rel (0) target = $region41
    $region40: #{tpu_custom_call.1} parent=1 // pred_region
      %s5768 = ssub.s32 8192, 8192
      %5769 = vsyncadd [#allocation4], %s5768
      %s5770 = sshll.u32 [#allocation5], 4
      %s5771 = int_to_ptr.vmem [resolvable:$true] %s5770
      %5776 = dma.vmem_to_hbm [thread:$0]  %s5771, 8192, %s8, [#allocation4], 128, 128, 8
    $region41: #{tpu_custom_call.1} parent=1 // pred_fallthru
      _
    // Predicated region
    $region42: #{tpu_custom_call.1} parent=1 // pred_check
      _
    $region43: #{tpu_custom_call.1} parent=1 // pred_check_branch
      %5778 = sbr.rel (0) target = $region45
    $region44: #{tpu_custom_call.1} parent=1 // pred_region
      %5779 = dma.done [#allocation4], 8192
    $region45: #{tpu_custom_call.1} parent=1 // pred_fallthru
      _
    %5780 = vsyncpa [#allocation3], 1
    %5781 = vsyncpa [#allocation4], 1

</llo_original>
